<compile_context>
chip_gen: v5e
topology: v5e:2x2
jax: 0.10.0
libtpu: 0.0.40
codegen_flags: <defaults>
</compile_context>

<pallas_src>
import math
import jax
import jax.numpy as jnp
import numpy as np
from jax.experimental import pallas as pl
from jax.experimental.pallas import tpu as pltpu

# ----- small, module-consistent config -----
B = 2            # batch
S = 16           # sequence length
H = 32           # hidden_size
NUM_HEADS = 4    # num_attention_heads
DH = H // NUM_HEADS
I = 64           # intermediate_size
NUM_LAYERS = 2   # num_hidden_layers
LN_EPS = 1e-5
_SCALE = 1.0 / math.sqrt(DH)
_GELU_C = math.sqrt(2.0 / math.pi)

# fused projection column layout: [ Q (H) | K (H) | Wvo head0 (H) | ... ]
PROJ = 2 * H + NUM_HEADS * H
_QOFF = 0
_KOFF = H
_VOOFF = 2 * H


# ---------------------------------------------------------------------------
# Pallas kernel: the whole encoder for a block of `batch_block` batch rows.
# ---------------------------------------------------------------------------
def _layer_norm(x, gamma, beta):
    mu = jnp.mean(x, axis=-1, keepdims=True)
    var = jnp.mean(jnp.square(x - mu), axis=-1, keepdims=True)
    return (x - mu) * jax.lax.rsqrt(var + LN_EPS) * gamma + beta


def _make_encoder_kernel(batch_block):
    def kernel(x_ref,
               ln1g, ln1b, wproj, bproj, battn,
               ln2g, ln2b, w1, b1, w2, b2,
               o_ref):
        x = x_ref[...].astype(jnp.float32)               # (batch_block*S, H)

        for l in range(NUM_LAYERS):                      # static unroll
            # --- LayerNorm 1 + single fused projection (Q | K | Wv@Wo) ---
            xn = _layer_norm(x, ln1g[l], ln1b[l])
            proj = jnp.dot(xn, wproj[l],
                           preferred_element_type=jnp.float32) + bproj[l]

            # --- attention: per (batch row-block, head) softmax; value path
            #     already folded through the output projection (Wvo) ---
            attn_blocks = []
            for b in range(batch_block):                 # static unroll
                r0 = b * S
                acc = jnp.zeros((S, H), jnp.float32)
                for h in range(NUM_HEADS):               # static unroll
                    q = proj[r0:r0 + S, _QOFF + h * DH:_QOFF + (h + 1) * DH]
                    k = proj[r0:r0 + S, _KOFF + h * DH:_KOFF + (h + 1) * DH]
                    vo = proj[r0:r0 + S, _VOOFF + h * H:_VOOFF + (h + 1) * H]
                    # 1/sqrt(DH) already folded into Wq/bq; contract head dims
                    s = jax.lax.dot_general(
                        q, k, (((1,), (1,)), ((), ())),
                        preferred_element_type=jnp.float32)
                    s = s - jnp.max(s, axis=-1, keepdims=True)
                    p = jnp.exp(s)
                    p = p * pl.reciprocal(
                        jnp.sum(p, axis=-1, keepdims=True), approx=False)
                    # attn_dropout: identity at inference
                    acc = acc + jnp.dot(p, vo,
                                        preferred_element_type=jnp.float32)
                attn_blocks.append(acc)
            attn = (attn_blocks[0] if batch_block == 1
                    else jnp.concatenate(attn_blocks, axis=0))
            # output_dropout: identity at inference; battn = bo + bv @ Wo
            x = x + attn + battn[l]

            # --- LayerNorm 2 + MLP with NewGELU (tanh approximation) ---
            xn2 = _layer_norm(x, ln2g[l], ln2b[l])
            h1 = jnp.dot(xn2, w1[l], preferred_element_type=jnp.float32) + b1[l]
            g = 0.5 * h1 * (1.0 + jnp.tanh(
                _GELU_C * (h1 + 0.044715 * h1 * h1 * h1)))
            # mlp dropout: identity at inference
            x = x + jnp.dot(g, w2[l], preferred_element_type=jnp.float32) + b2[l]

        # TODO(synk): output lane width is H=32 (<128) so the final store is a
        # masked vst; a lane-dense repack is not worth the XLU work here.
        o_ref[...] = x.astype(o_ref.dtype)

    return kernel


def _batch_block_for_device():
    """Fold batch into the block on single-TensorCore chips (v5e/v6e); keep
    one batch element per grid step on 2-TC v7x so the parallel grid axis
    shards across cores."""
    try:
        kind = jax.devices()[0].device_kind.lower()
    except Exception:
        kind = ""
    if "v7" in kind or "7x" in kind:
        return 1
    return B


def encoder_forward(x, stacked_params, batch_block=None):
    if batch_block is None:
        batch_block = _batch_block_for_device()
    assert B % batch_block == 0
    rows = batch_block * S
    x2 = x.reshape(B * S, H)

    def _full_spec(p):
        n = p.ndim
        return pl.BlockSpec(p.shape, lambda i, _n=n: (0,) * _n)

    in_specs = [pl.BlockSpec((rows, H), lambda i: (i, 0))] + \
               [_full_spec(p) for p in stacked_params]
    out_spec = pl.BlockSpec((rows, H), lambda i: (i, 0))

    out = pl.pallas_call(
        _make_encoder_kernel(batch_block),
        out_shape=jax.ShapeDtypeStruct((B * S, H), x.dtype),
        grid_spec=pltpu.PrefetchScalarGridSpec(
            num_scalar_prefetch=0,
            grid=(B // batch_block,),
            in_specs=in_specs,
            out_specs=out_spec,
        ),
        compiler_params=pltpu.CompilerParams(
            dimension_semantics=("parallel",)),
    )(x2, *stacked_params)
    return out.reshape(B, S, H)


# ---------------------------------------------------------------------------
# Wrapper-side weight preparation: stack layers, fuse projections, fold the
# score scale and the value/output biases.
# ---------------------------------------------------------------------------
def prep_params(all_params):
    per_tensor = None
    for (ln1_g, ln1_b, wqkv, bqkv, wo, bo, ln2_g, ln2_b,
         w1, b1, w2, b2) in all_params:
        wq, wk, wv = jnp.split(wqkv, 3, axis=-1)          # each (H, H)
        bq, bk, bv = jnp.split(bqkv[0], 3, axis=-1)       # each (H,)

        # fold 1/sqrt(DH) into the Q projection
        wq_s = wq * _SCALE
        bq_s = bq * _SCALE

        # per-head value projection folded through the output projection:
        #   Wvo_h = Wv[:, h] @ Wo[h, :]   (H, H) each
        wvo = jnp.concatenate(
            [wv[:, h * DH:(h + 1) * DH] @ wo[h * DH:(h + 1) * DH, :]
             for h in range(NUM_HEADS)], axis=-1)          # (H, NH*H)

        # fused projection: [ Q | K | Wvo_head0 | ... | Wvo_head{NH-1} ]
        wproj = jnp.concatenate([wq_s, wk, wvo], axis=-1)  # (H, PROJ)
        bproj = jnp.concatenate(
            [bq_s, bk, jnp.zeros((NUM_HEADS * H,), jnp.float32)])[None, :]

        # value-bias path: softmax rows sum to 1, so the bv contribution
        # collapses to bv @ Wo; fold it with the output-projection bias.
        battn = bo + (bv @ wo)[None, :]                    # (1, H)

        layer = (ln1_g, ln1_b, wproj, bproj, battn,
                 ln2_g, ln2_b, w1, b1, w2, b2)
        if per_tensor is None:
            per_tensor = [[] for _ in layer]
        for acc, t in zip(per_tensor, layer):
            acc.append(t)
    return tuple(jnp.stack(ts, axis=0) for ts in per_tensor)


# ---------------------------------------------------------------------------
# Pure-JAX reference (PyTorch-equivalent math, for correctness check only)
# ---------------------------------------------------------------------------
def _block_ref(x, params):
    (ln1_g, ln1_b, wqkv, bqkv, wo, bo, ln2_g, ln2_b, w1, b1, w2, b2) = params

    def ln(z, g, b):
        mu = jnp.mean(z, axis=-1, keepdims=True)
        var = jnp.mean(jnp.square(z - mu), axis=-1, keepdims=True)
        return (z - mu) * jax.lax.rsqrt(var + LN_EPS) * g + b

    xn = ln(x, ln1_g, ln1_b)
    qkv = xn @ wqkv + bqkv
    q, k, v = jnp.split(qkv, 3, axis=-1)

    def split_heads(t):
        return t.reshape(B, S, NUM_HEADS, DH).transpose(0, 2, 1, 3)

    q, k, v = split_heads(q), split_heads(k), split_heads(v)
    scores = jnp.einsum("bhqd,bhkd->bhqk", q, k) / math.sqrt(DH)
    p = jax.nn.softmax(scores, axis=-1)
    a = jnp.einsum("bhqk,bhkd->bhqd", p, v).transpose(0, 2, 1, 3).reshape(B, S, H)
    x = x + (a @ wo + bo)
    xn2 = ln(x, ln2_g, ln2_b)
    h1 = xn2 @ w1 + b1
    g = 0.5 * h1 * (1.0 + jnp.tanh(_GELU_C * (h1 + 0.044715 * h1 ** 3)))
    return x + (g @ w2 + b2)


def _encoder_ref(x, all_params):
    for params in all_params:
        x = _block_ref(x, params)
    return x


# ---------------------------------------------------------------------------
# Deterministic parameter init (synthetic weights, PyTorch-like shapes)
# ---------------------------------------------------------------------------
def init_params(key):
    all_params = []
    for _ in range(NUM_LAYERS):
        keys = jax.random.split(key, 9)
        key = keys[0]
        params = (
            jnp.ones((1, H), jnp.float32),                                  # ln1 gamma
            jnp.zeros((1, H), jnp.float32),                                 # ln1 beta
            jax.random.normal(keys[1], (H, 3 * H), jnp.float32) * 0.02,     # qkv weight
            jax.random.normal(keys[2], (1, 3 * H), jnp.float32) * 0.02,     # qkv bias
            jax.random.normal(keys[3], (H, H), jnp.float32) * 0.02,         # out proj weight
            jax.random.normal(keys[4], (1, H), jnp.float32) * 0.02,         # out proj bias
            jnp.ones((1, H), jnp.float32),                                  # ln2 gamma
            jnp.zeros((1, H), jnp.float32),                                 # ln2 beta
            jax.random.normal(keys[5], (H, I), jnp.float32) * 0.02,         # mlp dense_1 weight
            jax.random.normal(keys[6], (1, I), jnp.float32) * 0.02,         # mlp dense_1 bias
            jax.random.normal(keys[7], (I, H), jnp.float32) * 0.02,         # mlp dense_2 weight
            jax.random.normal(keys[8], (1, H), jnp.float32) * 0.02,         # mlp dense_2 bias
        )
        all_params.append(params)
    return all_params


if __name__ == "__main__":
    key = jax.random.PRNGKey(0)
    k_x, k_p = jax.random.split(key)
    x = jax.random.normal(k_x, (B, S, H), jnp.float32)
    all_params = init_params(k_p)
    stacked = prep_params(all_params)

    out = encoder_forward(x, stacked)
    out = jax.block_until_ready(out)

    ref = jax.block_until_ready(_encoder_ref(x, all_params))
    np.testing.assert_allclose(np.asarray(out), np.asarray(ref),
                               rtol=1e-4, atol=1e-5)

    # TODO(synk): output_attentions=True path (returning per-head attention
    # probability tensors) is not exported from the kernel; only the hidden
    # state output is produced, matching the default forward() return.
    print("KERNEL_OK")
</pallas_src>

<mosaic_0001>
module attributes {stable_mosaic.version = 11 : i64} {
  func.func @kernel(%arg0: i32, %arg1: memref<32x32xf32, #tpu.memory_space<vmem>>, %arg2: memref<2x1x32xf32, #tpu.memory_space<vmem>>, %arg3: memref<2x1x32xf32, #tpu.memory_space<vmem>>, %arg4: memref<2x32x192xf32, #tpu.memory_space<vmem>>, %arg5: memref<2x1x192xf32, #tpu.memory_space<vmem>>, %arg6: memref<2x1x32xf32, #tpu.memory_space<vmem>>, %arg7: memref<2x1x32xf32, #tpu.memory_space<vmem>>, %arg8: memref<2x1x32xf32, #tpu.memory_space<vmem>>, %arg9: memref<2x32x64xf32, #tpu.memory_space<vmem>>, %arg10: memref<2x1x64xf32, #tpu.memory_space<vmem>>, %arg11: memref<2x64x32xf32, #tpu.memory_space<vmem>>, %arg12: memref<2x1x32xf32, #tpu.memory_space<vmem>>, %arg13: memref<32x32xf32, #tpu.memory_space<vmem>>) attributes {dimension_semantics = [#tpu.dimension_semantics<parallel>], iteration_bounds = array<i64: 1>, scalar_prefetch = 0 : i64, scratch_operands = 0 : i64, tpu.core_type = #tpu.core_type<tc>, window_params = [{transform_indices = @transform_0, window_bounds = array<i64: 32, 32>}, {pipeline_mode = #tpu.pipeline_mode<synchronous>, transform_indices = @transform_1, window_bounds = array<i64: 2, 1, 32>}, {pipeline_mode = #tpu.pipeline_mode<synchronous>, transform_indices = @transform_2, window_bounds = array<i64: 2, 1, 32>}, {pipeline_mode = #tpu.pipeline_mode<synchronous>, transform_indices = @transform_3, window_bounds = array<i64: 2, 32, 192>}, {pipeline_mode = #tpu.pipeline_mode<synchronous>, transform_indices = @transform_4, window_bounds = array<i64: 2, 1, 192>}, {pipeline_mode = #tpu.pipeline_mode<synchronous>, transform_indices = @transform_5, window_bounds = array<i64: 2, 1, 32>}, {pipeline_mode = #tpu.pipeline_mode<synchronous>, transform_indices = @transform_6, window_bounds = array<i64: 2, 1, 32>}, {pipeline_mode = #tpu.pipeline_mode<synchronous>, transform_indices = @transform_7, window_bounds = array<i64: 2, 1, 32>}, {pipeline_mode = #tpu.pipeline_mode<synchronous>, transform_indices = @transform_8, window_bounds = array<i64: 2, 32, 64>}, {pipeline_mode = #tpu.pipeline_mode<synchronous>, transform_indices = @transform_9, window_bounds = array<i64: 2, 1, 64>}, {pipeline_mode = #tpu.pipeline_mode<synchronous>, transform_indices = @transform_10, window_bounds = array<i64: 2, 64, 32>}, {pipeline_mode = #tpu.pipeline_mode<synchronous>, transform_indices = @transform_11, window_bounds = array<i64: 2, 1, 32>}, {transform_indices = @transform_12, window_bounds = array<i64: 32, 32>}]} {
    %c0 = arith.constant 0 : index
    %c0_0 = arith.constant 0 : index
    %0 = vector.load %arg1[%c0, %c0_0] : memref<32x32xf32, #tpu.memory_space<vmem>>, vector<32x32xf32>
    %c0_1 = arith.constant 0 : index
    %c0_2 = arith.constant 0 : index
    %c0_3 = arith.constant 0 : index
    %1 = vector.load %arg2[%c0_1, %c0_2, %c0_3] : memref<2x1x32xf32, #tpu.memory_space<vmem>>, vector<1x1x32xf32>
    %2 = vector.shape_cast %1 : vector<1x1x32xf32> to vector<1x32xf32>
    %c0_4 = arith.constant 0 : index
    %c0_5 = arith.constant 0 : index
    %c0_6 = arith.constant 0 : index
    %3 = vector.load %arg3[%c0_4, %c0_5, %c0_6] : memref<2x1x32xf32, #tpu.memory_space<vmem>>, vector<1x1x32xf32>
    %4 = vector.shape_cast %3 : vector<1x1x32xf32> to vector<1x32xf32>
    %cst = arith.constant dense<0.000000e+00> : vector<32xf32>
    %5 = vector.multi_reduction <add>, %0, %cst [1] : vector<32x32xf32> to vector<32xf32>
    %6 = vector.shape_cast %5 : vector<32xf32> to vector<32x1xf32>
    %cst_7 = arith.constant 3.200000e+01 : f32
    %7 = vector.broadcast %cst_7 : f32 to vector<32x1xf32>
    %8 = arith.divf %6, %7 : vector<32x1xf32>
    %9 = vector.broadcast %8 : vector<32x1xf32> to vector<32x32xf32>
    %10 = arith.subf %0, %9 : vector<32x32xf32>
    %11 = arith.mulf %10, %10 : vector<32x32xf32>
    %cst_8 = arith.constant dense<0.000000e+00> : vector<32xf32>
    %12 = vector.multi_reduction <add>, %11, %cst_8 [1] : vector<32x32xf32> to vector<32xf32>
    %13 = vector.shape_cast %12 : vector<32xf32> to vector<32x1xf32>
    %cst_9 = arith.constant 3.200000e+01 : f32
    %14 = vector.broadcast %cst_9 : f32 to vector<32x1xf32>
    %15 = arith.divf %13, %14 : vector<32x1xf32>
    %16 = vector.broadcast %8 : vector<32x1xf32> to vector<32x32xf32>
    %17 = arith.subf %0, %16 : vector<32x32xf32>
    %cst_10 = arith.constant 9.99999974E-6 : f32
    %18 = vector.broadcast %cst_10 : f32 to vector<32x1xf32>
    %19 = arith.addf %15, %18 : vector<32x1xf32>
    %20 = math.rsqrt %19 : vector<32x1xf32>
    %21 = vector.broadcast %20 : vector<32x1xf32> to vector<32x32xf32>
    %22 = arith.mulf %17, %21 : vector<32x32xf32>
    %23 = vector.broadcast %2 : vector<1x32xf32> to vector<32x32xf32>
    %24 = arith.mulf %22, %23 : vector<32x32xf32>
    %25 = vector.broadcast %4 : vector<1x32xf32> to vector<32x32xf32>
    %26 = arith.addf %24, %25 : vector<32x32xf32>
    %c0_11 = arith.constant 0 : index
    %c0_12 = arith.constant 0 : index
    %c0_13 = arith.constant 0 : index
    %27 = vector.load %arg4[%c0_11, %c0_12, %c0_13] : memref<2x32x192xf32, #tpu.memory_space<vmem>>, vector<1x32x192xf32>
    %28 = vector.shape_cast %27 : vector<1x32x192xf32> to vector<32x192xf32>
    %cst_14 = arith.constant dense<0.000000e+00> : vector<32x192xf32>
    %29 = tpu.matmul %26, %28, %cst_14 {dimension_numbers = #tpu.dot_dimension_numbers<[1], [0], [0], [1], [0, 0, 1, 1], [], []>} : vector<32x32xf32>, vector<32x192xf32>, vector<32x192xf32> -> vector<32x192xf32>
    %c0_15 = arith.constant 0 : index
    %c0_16 = arith.constant 0 : index
    %c0_17 = arith.constant 0 : index
    %30 = vector.load %arg5[%c0_15, %c0_16, %c0_17] : memref<2x1x192xf32, #tpu.memory_space<vmem>>, vector<1x1x192xf32>
    %31 = vector.shape_cast %30 : vector<1x1x192xf32> to vector<1x192xf32>
    %32 = vector.broadcast %31 : vector<1x192xf32> to vector<32x192xf32>
    %33 = arith.addf %29, %32 : vector<32x192xf32>
    %cst_18 = arith.constant 0.000000e+00 : f32
    %34 = vector.broadcast %cst_18 : f32 to vector<16x32xf32>
    %35 = vector.extract_strided_slice %33 {offsets = [0, 0], sizes = [16, 8], strides = [1, 1]} : vector<32x192xf32> to vector<16x8xf32>
    %36 = vector.extract_strided_slice %33 {offsets = [0, 32], sizes = [16, 8], strides = [1, 1]} : vector<32x192xf32> to vector<16x8xf32>
    %37 = vector.extract_strided_slice %33 {offsets = [0, 64], sizes = [16, 32], strides = [1, 1]} : vector<32x192xf32> to vector<16x32xf32>
    %cst_19 = arith.constant dense<0.000000e+00> : vector<16x16xf32>
    %38 = tpu.matmul %35, %36, %cst_19 {dimension_numbers = #tpu.dot_dimension_numbers<[1], [1], [0], [0], [0, 0, 1, 0], [], []>} : vector<16x8xf32>, vector<16x8xf32>, vector<16x16xf32> -> vector<16x16xf32>
    %cst_20 = arith.constant dense<0xFF800000> : vector<16xf32>
    %39 = vector.multi_reduction <maximumf>, %38, %cst_20 [1] : vector<16x16xf32> to vector<16xf32>
    %40 = vector.shape_cast %39 : vector<16xf32> to vector<16x1xf32>
    %41 = vector.broadcast %40 : vector<16x1xf32> to vector<16x16xf32>
    %42 = arith.subf %38, %41 : vector<16x16xf32>
    %43 = math.exp %42 : vector<16x16xf32>
    %cst_21 = arith.constant dense<0.000000e+00> : vector<16xf32>
    %44 = vector.multi_reduction <add>, %43, %cst_21 [1] : vector<16x16xf32> to vector<16xf32>
    %45 = vector.shape_cast %44 : vector<16xf32> to vector<16x1xf32>
    %46 = tpu.reciprocal %45 : vector<16x1xf32> -> vector<16x1xf32>
    %47 = vector.broadcast %46 : vector<16x1xf32> to vector<16x16xf32>
    %48 = arith.mulf %43, %47 : vector<16x16xf32>
    %cst_22 = arith.constant dense<0.000000e+00> : vector<16x32xf32>
    %49 = tpu.matmul %48, %37, %cst_22 {dimension_numbers = #tpu.dot_dimension_numbers<[1], [0], [0], [1], [0, 0, 1, 1], [], []>} : vector<16x16xf32>, vector<16x32xf32>, vector<16x32xf32> -> vector<16x32xf32>
    %50 = arith.addf %34, %49 : vector<16x32xf32>
    %51 = vector.extract_strided_slice %33 {offsets = [0, 8], sizes = [16, 8], strides = [1, 1]} : vector<32x192xf32> to vector<16x8xf32>
    %52 = vector.extract_strided_slice %33 {offsets = [0, 40], sizes = [16, 8], strides = [1, 1]} : vector<32x192xf32> to vector<16x8xf32>
    %53 = vector.extract_strided_slice %33 {offsets = [0, 96], sizes = [16, 32], strides = [1, 1]} : vector<32x192xf32> to vector<16x32xf32>
    %cst_23 = arith.constant dense<0.000000e+00> : vector<16x16xf32>
    %54 = tpu.matmul %51, %52, %cst_23 {dimension_numbers = #tpu.dot_dimension_numbers<[1], [1], [0], [0], [0, 0, 1, 0], [], []>} : vector<16x8xf32>, vector<16x8xf32>, vector<16x16xf32> -> vector<16x16xf32>
    %cst_24 = arith.constant dense<0xFF800000> : vector<16xf32>
    %55 = vector.multi_reduction <maximumf>, %54, %cst_24 [1] : vector<16x16xf32> to vector<16xf32>
    %56 = vector.shape_cast %55 : vector<16xf32> to vector<16x1xf32>
    %57 = vector.broadcast %56 : vector<16x1xf32> to vector<16x16xf32>
    %58 = arith.subf %54, %57 : vector<16x16xf32>
    %59 = math.exp %58 : vector<16x16xf32>
    %cst_25 = arith.constant dense<0.000000e+00> : vector<16xf32>
    %60 = vector.multi_reduction <add>, %59, %cst_25 [1] : vector<16x16xf32> to vector<16xf32>
    %61 = vector.shape_cast %60 : vector<16xf32> to vector<16x1xf32>
    %62 = tpu.reciprocal %61 : vector<16x1xf32> -> vector<16x1xf32>
    %63 = vector.broadcast %62 : vector<16x1xf32> to vector<16x16xf32>
    %64 = arith.mulf %59, %63 : vector<16x16xf32>
    %cst_26 = arith.constant dense<0.000000e+00> : vector<16x32xf32>
    %65 = tpu.matmul %64, %53, %cst_26 {dimension_numbers = #tpu.dot_dimension_numbers<[1], [0], [0], [1], [0, 0, 1, 1], [], []>} : vector<16x16xf32>, vector<16x32xf32>, vector<16x32xf32> -> vector<16x32xf32>
    %66 = arith.addf %50, %65 : vector<16x32xf32>
    %67 = vector.extract_strided_slice %33 {offsets = [0, 16], sizes = [16, 8], strides = [1, 1]} : vector<32x192xf32> to vector<16x8xf32>
    %68 = vector.extract_strided_slice %33 {offsets = [0, 48], sizes = [16, 8], strides = [1, 1]} : vector<32x192xf32> to vector<16x8xf32>
    %69 = vector.extract_strided_slice %33 {offsets = [0, 128], sizes = [16, 32], strides = [1, 1]} : vector<32x192xf32> to vector<16x32xf32>
    %cst_27 = arith.constant dense<0.000000e+00> : vector<16x16xf32>
    %70 = tpu.matmul %67, %68, %cst_27 {dimension_numbers = #tpu.dot_dimension_numbers<[1], [1], [0], [0], [0, 0, 1, 0], [], []>} : vector<16x8xf32>, vector<16x8xf32>, vector<16x16xf32> -> vector<16x16xf32>
    %cst_28 = arith.constant dense<0xFF800000> : vector<16xf32>
    %71 = vector.multi_reduction <maximumf>, %70, %cst_28 [1] : vector<16x16xf32> to vector<16xf32>
    %72 = vector.shape_cast %71 : vector<16xf32> to vector<16x1xf32>
    %73 = vector.broadcast %72 : vector<16x1xf32> to vector<16x16xf32>
    %74 = arith.subf %70, %73 : vector<16x16xf32>
    %75 = math.exp %74 : vector<16x16xf32>
    %cst_29 = arith.constant dense<0.000000e+00> : vector<16xf32>
    %76 = vector.multi_reduction <add>, %75, %cst_29 [1] : vector<16x16xf32> to vector<16xf32>
    %77 = vector.shape_cast %76 : vector<16xf32> to vector<16x1xf32>
    %78 = tpu.reciprocal %77 : vector<16x1xf32> -> vector<16x1xf32>
    %79 = vector.broadcast %78 : vector<16x1xf32> to vector<16x16xf32>
    %80 = arith.mulf %75, %79 : vector<16x16xf32>
    %cst_30 = arith.constant dense<0.000000e+00> : vector<16x32xf32>
    %81 = tpu.matmul %80, %69, %cst_30 {dimension_numbers = #tpu.dot_dimension_numbers<[1], [0], [0], [1], [0, 0, 1, 1], [], []>} : vector<16x16xf32>, vector<16x32xf32>, vector<16x32xf32> -> vector<16x32xf32>
    %82 = arith.addf %66, %81 : vector<16x32xf32>
    %83 = vector.extract_strided_slice %33 {offsets = [0, 24], sizes = [16, 8], strides = [1, 1]} : vector<32x192xf32> to vector<16x8xf32>
    %84 = vector.extract_strided_slice %33 {offsets = [0, 56], sizes = [16, 8], strides = [1, 1]} : vector<32x192xf32> to vector<16x8xf32>
    %85 = vector.extract_strided_slice %33 {offsets = [0, 160], sizes = [16, 32], strides = [1, 1]} : vector<32x192xf32> to vector<16x32xf32>
    %cst_31 = arith.constant dense<0.000000e+00> : vector<16x16xf32>
    %86 = tpu.matmul %83, %84, %cst_31 {dimension_numbers = #tpu.dot_dimension_numbers<[1], [1], [0], [0], [0, 0, 1, 0], [], []>} : vector<16x8xf32>, vector<16x8xf32>, vector<16x16xf32> -> vector<16x16xf32>
    %cst_32 = arith.constant dense<0xFF800000> : vector<16xf32>
    %87 = vector.multi_reduction <maximumf>, %86, %cst_32 [1] : vector<16x16xf32> to vector<16xf32>
    %88 = vector.shape_cast %87 : vector<16xf32> to vector<16x1xf32>
    %89 = vector.broadcast %88 : vector<16x1xf32> to vector<16x16xf32>
    %90 = arith.subf %86, %89 : vector<16x16xf32>
    %91 = math.exp %90 : vector<16x16xf32>
    %cst_33 = arith.constant dense<0.000000e+00> : vector<16xf32>
    %92 = vector.multi_reduction <add>, %91, %cst_33 [1] : vector<16x16xf32> to vector<16xf32>
    %93 = vector.shape_cast %92 : vector<16xf32> to vector<16x1xf32>
    %94 = tpu.reciprocal %93 : vector<16x1xf32> -> vector<16x1xf32>
    %95 = vector.broadcast %94 : vector<16x1xf32> to vector<16x16xf32>
    %96 = arith.mulf %91, %95 : vector<16x16xf32>
    %cst_34 = arith.constant dense<0.000000e+00> : vector<16x32xf32>
    %97 = tpu.matmul %96, %85, %cst_34 {dimension_numbers = #tpu.dot_dimension_numbers<[1], [0], [0], [1], [0, 0, 1, 1], [], []>} : vector<16x16xf32>, vector<16x32xf32>, vector<16x32xf32> -> vector<16x32xf32>
    %98 = arith.addf %82, %97 : vector<16x32xf32>
    %cst_35 = arith.constant 0.000000e+00 : f32
    %99 = vector.broadcast %cst_35 : f32 to vector<16x32xf32>
    %100 = vector.extract_strided_slice %33 {offsets = [16, 0], sizes = [16, 8], strides = [1, 1]} : vector<32x192xf32> to vector<16x8xf32>
    %101 = vector.extract_strided_slice %33 {offsets = [16, 32], sizes = [16, 8], strides = [1, 1]} : vector<32x192xf32> to vector<16x8xf32>
    %102 = vector.extract_strided_slice %33 {offsets = [16, 64], sizes = [16, 32], strides = [1, 1]} : vector<32x192xf32> to vector<16x32xf32>
    %cst_36 = arith.constant dense<0.000000e+00> : vector<16x16xf32>
    %103 = tpu.matmul %100, %101, %cst_36 {dimension_numbers = #tpu.dot_dimension_numbers<[1], [1], [0], [0], [0, 0, 1, 0], [], []>} : vector<16x8xf32>, vector<16x8xf32>, vector<16x16xf32> -> vector<16x16xf32>
    %cst_37 = arith.constant dense<0xFF800000> : vector<16xf32>
    %104 = vector.multi_reduction <maximumf>, %103, %cst_37 [1] : vector<16x16xf32> to vector<16xf32>
    %105 = vector.shape_cast %104 : vector<16xf32> to vector<16x1xf32>
    %106 = vector.broadcast %105 : vector<16x1xf32> to vector<16x16xf32>
    %107 = arith.subf %103, %106 : vector<16x16xf32>
    %108 = math.exp %107 : vector<16x16xf32>
    %cst_38 = arith.constant dense<0.000000e+00> : vector<16xf32>
    %109 = vector.multi_reduction <add>, %108, %cst_38 [1] : vector<16x16xf32> to vector<16xf32>
    %110 = vector.shape_cast %109 : vector<16xf32> to vector<16x1xf32>
    %111 = tpu.reciprocal %110 : vector<16x1xf32> -> vector<16x1xf32>
    %112 = vector.broadcast %111 : vector<16x1xf32> to vector<16x16xf32>
    %113 = arith.mulf %108, %112 : vector<16x16xf32>
    %cst_39 = arith.constant dense<0.000000e+00> : vector<16x32xf32>
    %114 = tpu.matmul %113, %102, %cst_39 {dimension_numbers = #tpu.dot_dimension_numbers<[1], [0], [0], [1], [0, 0, 1, 1], [], []>} : vector<16x16xf32>, vector<16x32xf32>, vector<16x32xf32> -> vector<16x32xf32>
    %115 = arith.addf %99, %114 : vector<16x32xf32>
    %116 = vector.extract_strided_slice %33 {offsets = [16, 8], sizes = [16, 8], strides = [1, 1]} : vector<32x192xf32> to vector<16x8xf32>
    %117 = vector.extract_strided_slice %33 {offsets = [16, 40], sizes = [16, 8], strides = [1, 1]} : vector<32x192xf32> to vector<16x8xf32>
    %118 = vector.extract_strided_slice %33 {offsets = [16, 96], sizes = [16, 32], strides = [1, 1]} : vector<32x192xf32> to vector<16x32xf32>
    %cst_40 = arith.constant dense<0.000000e+00> : vector<16x16xf32>
    %119 = tpu.matmul %116, %117, %cst_40 {dimension_numbers = #tpu.dot_dimension_numbers<[1], [1], [0], [0], [0, 0, 1, 0], [], []>} : vector<16x8xf32>, vector<16x8xf32>, vector<16x16xf32> -> vector<16x16xf32>
    %cst_41 = arith.constant dense<0xFF800000> : vector<16xf32>
    %120 = vector.multi_reduction <maximumf>, %119, %cst_41 [1] : vector<16x16xf32> to vector<16xf32>
    %121 = vector.shape_cast %120 : vector<16xf32> to vector<16x1xf32>
    %122 = vector.broadcast %121 : vector<16x1xf32> to vector<16x16xf32>
    %123 = arith.subf %119, %122 : vector<16x16xf32>
    %124 = math.exp %123 : vector<16x16xf32>
    %cst_42 = arith.constant dense<0.000000e+00> : vector<16xf32>
    %125 = vector.multi_reduction <add>, %124, %cst_42 [1] : vector<16x16xf32> to vector<16xf32>
    %126 = vector.shape_cast %125 : vector<16xf32> to vector<16x1xf32>
    %127 = tpu.reciprocal %126 : vector<16x1xf32> -> vector<16x1xf32>
    %128 = vector.broadcast %127 : vector<16x1xf32> to vector<16x16xf32>
    %129 = arith.mulf %124, %128 : vector<16x16xf32>
    %cst_43 = arith.constant dense<0.000000e+00> : vector<16x32xf32>
    %130 = tpu.matmul %129, %118, %cst_43 {dimension_numbers = #tpu.dot_dimension_numbers<[1], [0], [0], [1], [0, 0, 1, 1], [], []>} : vector<16x16xf32>, vector<16x32xf32>, vector<16x32xf32> -> vector<16x32xf32>
    %131 = arith.addf %115, %130 : vector<16x32xf32>
    %132 = vector.extract_strided_slice %33 {offsets = [16, 16], sizes = [16, 8], strides = [1, 1]} : vector<32x192xf32> to vector<16x8xf32>
    %133 = vector.extract_strided_slice %33 {offsets = [16, 48], sizes = [16, 8], strides = [1, 1]} : vector<32x192xf32> to vector<16x8xf32>
    %134 = vector.extract_strided_slice %33 {offsets = [16, 128], sizes = [16, 32], strides = [1, 1]} : vector<32x192xf32> to vector<16x32xf32>
    %cst_44 = arith.constant dense<0.000000e+00> : vector<16x16xf32>
    %135 = tpu.matmul %132, %133, %cst_44 {dimension_numbers = #tpu.dot_dimension_numbers<[1], [1], [0], [0], [0, 0, 1, 0], [], []>} : vector<16x8xf32>, vector<16x8xf32>, vector<16x16xf32> -> vector<16x16xf32>
    %cst_45 = arith.constant dense<0xFF800000> : vector<16xf32>
    %136 = vector.multi_reduction <maximumf>, %135, %cst_45 [1] : vector<16x16xf32> to vector<16xf32>
    %137 = vector.shape_cast %136 : vector<16xf32> to vector<16x1xf32>
    %138 = vector.broadcast %137 : vector<16x1xf32> to vector<16x16xf32>
    %139 = arith.subf %135, %138 : vector<16x16xf32>
    %140 = math.exp %139 : vector<16x16xf32>
    %cst_46 = arith.constant dense<0.000000e+00> : vector<16xf32>
    %141 = vector.multi_reduction <add>, %140, %cst_46 [1] : vector<16x16xf32> to vector<16xf32>
    %142 = vector.shape_cast %141 : vector<16xf32> to vector<16x1xf32>
    %143 = tpu.reciprocal %142 : vector<16x1xf32> -> vector<16x1xf32>
    %144 = vector.broadcast %143 : vector<16x1xf32> to vector<16x16xf32>
    %145 = arith.mulf %140, %144 : vector<16x16xf32>
    %cst_47 = arith.constant dense<0.000000e+00> : vector<16x32xf32>
    %146 = tpu.matmul %145, %134, %cst_47 {dimension_numbers = #tpu.dot_dimension_numbers<[1], [0], [0], [1], [0, 0, 1, 1], [], []>} : vector<16x16xf32>, vector<16x32xf32>, vector<16x32xf32> -> vector<16x32xf32>
    %147 = arith.addf %131, %146 : vector<16x32xf32>
    %148 = vector.extract_strided_slice %33 {offsets = [16, 24], sizes = [16, 8], strides = [1, 1]} : vector<32x192xf32> to vector<16x8xf32>
    %149 = vector.extract_strided_slice %33 {offsets = [16, 56], sizes = [16, 8], strides = [1, 1]} : vector<32x192xf32> to vector<16x8xf32>
    %150 = vector.extract_strided_slice %33 {offsets = [16, 160], sizes = [16, 32], strides = [1, 1]} : vector<32x192xf32> to vector<16x32xf32>
    %cst_48 = arith.constant dense<0.000000e+00> : vector<16x16xf32>
    %151 = tpu.matmul %148, %149, %cst_48 {dimension_numbers = #tpu.dot_dimension_numbers<[1], [1], [0], [0], [0, 0, 1, 0], [], []>} : vector<16x8xf32>, vector<16x8xf32>, vector<16x16xf32> -> vector<16x16xf32>
    %cst_49 = arith.constant dense<0xFF800000> : vector<16xf32>
    %152 = vector.multi_reduction <maximumf>, %151, %cst_49 [1] : vector<16x16xf32> to vector<16xf32>
    %153 = vector.shape_cast %152 : vector<16xf32> to vector<16x1xf32>
    %154 = vector.broadcast %153 : vector<16x1xf32> to vector<16x16xf32>
    %155 = arith.subf %151, %154 : vector<16x16xf32>
    %156 = math.exp %155 : vector<16x16xf32>
    %cst_50 = arith.constant dense<0.000000e+00> : vector<16xf32>
    %157 = vector.multi_reduction <add>, %156, %cst_50 [1] : vector<16x16xf32> to vector<16xf32>
    %158 = vector.shape_cast %157 : vector<16xf32> to vector<16x1xf32>
    %159 = tpu.reciprocal %158 : vector<16x1xf32> -> vector<16x1xf32>
    %160 = vector.broadcast %159 : vector<16x1xf32> to vector<16x16xf32>
    %161 = arith.mulf %156, %160 : vector<16x16xf32>
    %cst_51 = arith.constant dense<0.000000e+00> : vector<16x32xf32>
    %162 = tpu.matmul %161, %150, %cst_51 {dimension_numbers = #tpu.dot_dimension_numbers<[1], [0], [0], [1], [0, 0, 1, 1], [], []>} : vector<16x16xf32>, vector<16x32xf32>, vector<16x32xf32> -> vector<16x32xf32>
    %163 = arith.addf %147, %162 : vector<16x32xf32>
    %164 = tpu.concatenate %98, %163 in 0 : vector<16x32xf32>, vector<16x32xf32> -> vector<32x32xf32>
    %165 = arith.addf %0, %164 : vector<32x32xf32>
    %c0_52 = arith.constant 0 : index
    %c0_53 = arith.constant 0 : index
    %c0_54 = arith.constant 0 : index
    %166 = vector.load %arg6[%c0_52, %c0_53, %c0_54] : memref<2x1x32xf32, #tpu.memory_space<vmem>>, vector<1x1x32xf32>
    %167 = vector.shape_cast %166 : vector<1x1x32xf32> to vector<1x32xf32>
    %168 = vector.broadcast %167 : vector<1x32xf32> to vector<32x32xf32>
    %169 = arith.addf %165, %168 : vector<32x32xf32>
    %c0_55 = arith.constant 0 : index
    %c0_56 = arith.constant 0 : index
    %c0_57 = arith.constant 0 : index
    %170 = vector.load %arg7[%c0_55, %c0_56, %c0_57] : memref<2x1x32xf32, #tpu.memory_space<vmem>>, vector<1x1x32xf32>
    %171 = vector.shape_cast %170 : vector<1x1x32xf32> to vector<1x32xf32>
    %c0_58 = arith.constant 0 : index
    %c0_59 = arith.constant 0 : index
    %c0_60 = arith.constant 0 : index
    %172 = vector.load %arg8[%c0_58, %c0_59, %c0_60] : memref<2x1x32xf32, #tpu.memory_space<vmem>>, vector<1x1x32xf32>
    %173 = vector.shape_cast %172 : vector<1x1x32xf32> to vector<1x32xf32>
    %cst_61 = arith.constant dense<0.000000e+00> : vector<32xf32>
    %174 = vector.multi_reduction <add>, %169, %cst_61 [1] : vector<32x32xf32> to vector<32xf32>
    %175 = vector.shape_cast %174 : vector<32xf32> to vector<32x1xf32>
    %cst_62 = arith.constant 3.200000e+01 : f32
    %176 = vector.broadcast %cst_62 : f32 to vector<32x1xf32>
    %177 = arith.divf %175, %176 : vector<32x1xf32>
    %178 = vector.broadcast %177 : vector<32x1xf32> to vector<32x32xf32>
    %179 = arith.subf %169, %178 : vector<32x32xf32>
    %180 = arith.mulf %179, %179 : vector<32x32xf32>
    %cst_63 = arith.constant dense<0.000000e+00> : vector<32xf32>
    %181 = vector.multi_reduction <add>, %180, %cst_63 [1] : vector<32x32xf32> to vector<32xf32>
    %182 = vector.shape_cast %181 : vector<32xf32> to vector<32x1xf32>
    %cst_64 = arith.constant 3.200000e+01 : f32
    %183 = vector.broadcast %cst_64 : f32 to vector<32x1xf32>
    %184 = arith.divf %182, %183 : vector<32x1xf32>
    %185 = vector.broadcast %177 : vector<32x1xf32> to vector<32x32xf32>
    %186 = arith.subf %169, %185 : vector<32x32xf32>
    %cst_65 = arith.constant 9.99999974E-6 : f32
    %187 = vector.broadcast %cst_65 : f32 to vector<32x1xf32>
    %188 = arith.addf %184, %187 : vector<32x1xf32>
    %189 = math.rsqrt %188 : vector<32x1xf32>
    %190 = vector.broadcast %189 : vector<32x1xf32> to vector<32x32xf32>
    %191 = arith.mulf %186, %190 : vector<32x32xf32>
    %192 = vector.broadcast %171 : vector<1x32xf32> to vector<32x32xf32>
    %193 = arith.mulf %191, %192 : vector<32x32xf32>
    %194 = vector.broadcast %173 : vector<1x32xf32> to vector<32x32xf32>
    %195 = arith.addf %193, %194 : vector<32x32xf32>
    %c0_66 = arith.constant 0 : index
    %c0_67 = arith.constant 0 : index
    %c0_68 = arith.constant 0 : index
    %196 = vector.load %arg9[%c0_66, %c0_67, %c0_68] : memref<2x32x64xf32, #tpu.memory_space<vmem>>, vector<1x32x64xf32>
    %197 = vector.shape_cast %196 : vector<1x32x64xf32> to vector<32x64xf32>
    %cst_69 = arith.constant dense<0.000000e+00> : vector<32x64xf32>
    %198 = tpu.matmul %195, %197, %cst_69 {dimension_numbers = #tpu.dot_dimension_numbers<[1], [0], [0], [1], [0, 0, 1, 1], [], []>} : vector<32x32xf32>, vector<32x64xf32>, vector<32x64xf32> -> vector<32x64xf32>
    %c0_70 = arith.constant 0 : index
    %c0_71 = arith.constant 0 : index
    %c0_72 = arith.constant 0 : index
    %199 = vector.load %arg10[%c0_70, %c0_71, %c0_72] : memref<2x1x64xf32, #tpu.memory_space<vmem>>, vector<1x1x64xf32>
    %200 = vector.shape_cast %199 : vector<1x1x64xf32> to vector<1x64xf32>
    %201 = vector.broadcast %200 : vector<1x64xf32> to vector<32x64xf32>
    %202 = arith.addf %198, %201 : vector<32x64xf32>
    %cst_73 = arith.constant 5.000000e-01 : f32
    %203 = vector.broadcast %cst_73 : f32 to vector<32x64xf32>
    %204 = arith.mulf %203, %202 : vector<32x64xf32>
    %cst_74 = arith.constant 4.471500e-02 : f32
    %205 = vector.broadcast %cst_74 : f32 to vector<32x64xf32>
    %206 = arith.mulf %205, %202 : vector<32x64xf32>
    %207 = arith.mulf %206, %202 : vector<32x64xf32>
    %208 = arith.mulf %207, %202 : vector<32x64xf32>
    %209 = arith.addf %202, %208 : vector<32x64xf32>
    %cst_75 = arith.constant 0.797884583 : f32
    %210 = vector.broadcast %cst_75 : f32 to vector<32x64xf32>
    %211 = arith.mulf %210, %209 : vector<32x64xf32>
    %212 = math.tanh %211 : vector<32x64xf32>
    %cst_76 = arith.constant 1.000000e+00 : f32
    %213 = vector.broadcast %cst_76 : f32 to vector<32x64xf32>
    %214 = arith.addf %213, %212 : vector<32x64xf32>
    %215 = arith.mulf %204, %214 : vector<32x64xf32>
    %c0_77 = arith.constant 0 : index
    %c0_78 = arith.constant 0 : index
    %c0_79 = arith.constant 0 : index
    %216 = vector.load %arg11[%c0_77, %c0_78, %c0_79] : memref<2x64x32xf32, #tpu.memory_space<vmem>>, vector<1x64x32xf32>
    %217 = vector.shape_cast %216 : vector<1x64x32xf32> to vector<64x32xf32>
    %cst_80 = arith.constant dense<0.000000e+00> : vector<32x32xf32>
    %218 = tpu.matmul %215, %217, %cst_80 {dimension_numbers = #tpu.dot_dimension_numbers<[1], [0], [0], [1], [0, 0, 1, 1], [], []>} : vector<32x64xf32>, vector<64x32xf32>, vector<32x32xf32> -> vector<32x32xf32>
    %219 = arith.addf %169, %218 : vector<32x32xf32>
    %c0_81 = arith.constant 0 : index
    %c0_82 = arith.constant 0 : index
    %c0_83 = arith.constant 0 : index
    %220 = vector.load %arg12[%c0_81, %c0_82, %c0_83] : memref<2x1x32xf32, #tpu.memory_space<vmem>>, vector<1x1x32xf32>
    %221 = vector.shape_cast %220 : vector<1x1x32xf32> to vector<1x32xf32>
    %222 = vector.broadcast %221 : vector<1x32xf32> to vector<32x32xf32>
    %223 = arith.addf %219, %222 : vector<32x32xf32>
    %c1 = arith.constant 1 : index
    %c0_84 = arith.constant 0 : index
    %c0_85 = arith.constant 0 : index
    %224 = vector.load %arg2[%c1, %c0_84, %c0_85] : memref<2x1x32xf32, #tpu.memory_space<vmem>>, vector<1x1x32xf32>
    %225 = vector.shape_cast %224 : vector<1x1x32xf32> to vector<1x32xf32>
    %c1_86 = arith.constant 1 : index
    %c0_87 = arith.constant 0 : index
    %c0_88 = arith.constant 0 : index
    %226 = vector.load %arg3[%c1_86, %c0_87, %c0_88] : memref<2x1x32xf32, #tpu.memory_space<vmem>>, vector<1x1x32xf32>
    %227 = vector.shape_cast %226 : vector<1x1x32xf32> to vector<1x32xf32>
    %cst_89 = arith.constant dense<0.000000e+00> : vector<32xf32>
    %228 = vector.multi_reduction <add>, %223, %cst_89 [1] : vector<32x32xf32> to vector<32xf32>
    %229 = vector.shape_cast %228 : vector<32xf32> to vector<32x1xf32>
    %cst_90 = arith.constant 3.200000e+01 : f32
    %230 = vector.broadcast %cst_90 : f32 to vector<32x1xf32>
    %231 = arith.divf %229, %230 : vector<32x1xf32>
    %232 = vector.broadcast %231 : vector<32x1xf32> to vector<32x32xf32>
    %233 = arith.subf %223, %232 : vector<32x32xf32>
    %234 = arith.mulf %233, %233 : vector<32x32xf32>
    %cst_91 = arith.constant dense<0.000000e+00> : vector<32xf32>
    %235 = vector.multi_reduction <add>, %234, %cst_91 [1] : vector<32x32xf32> to vector<32xf32>
    %236 = vector.shape_cast %235 : vector<32xf32> to vector<32x1xf32>
    %cst_92 = arith.constant 3.200000e+01 : f32
    %237 = vector.broadcast %cst_92 : f32 to vector<32x1xf32>
    %238 = arith.divf %236, %237 : vector<32x1xf32>
    %239 = vector.broadcast %231 : vector<32x1xf32> to vector<32x32xf32>
    %240 = arith.subf %223, %239 : vector<32x32xf32>
    %cst_93 = arith.constant 9.99999974E-6 : f32
    %241 = vector.broadcast %cst_93 : f32 to vector<32x1xf32>
    %242 = arith.addf %238, %241 : vector<32x1xf32>
    %243 = math.rsqrt %242 : vector<32x1xf32>
    %244 = vector.broadcast %243 : vector<32x1xf32> to vector<32x32xf32>
    %245 = arith.mulf %240, %244 : vector<32x32xf32>
    %246 = vector.broadcast %225 : vector<1x32xf32> to vector<32x32xf32>
    %247 = arith.mulf %245, %246 : vector<32x32xf32>
    %248 = vector.broadcast %227 : vector<1x32xf32> to vector<32x32xf32>
    %249 = arith.addf %247, %248 : vector<32x32xf32>
    %c1_94 = arith.constant 1 : index
    %c0_95 = arith.constant 0 : index
    %c0_96 = arith.constant 0 : index
    %250 = vector.load %arg4[%c1_94, %c0_95, %c0_96] : memref<2x32x192xf32, #tpu.memory_space<vmem>>, vector<1x32x192xf32>
    %251 = vector.shape_cast %250 : vector<1x32x192xf32> to vector<32x192xf32>
    %cst_97 = arith.constant dense<0.000000e+00> : vector<32x192xf32>
    %252 = tpu.matmul %249, %251, %cst_97 {dimension_numbers = #tpu.dot_dimension_numbers<[1], [0], [0], [1], [0, 0, 1, 1], [], []>} : vector<32x32xf32>, vector<32x192xf32>, vector<32x192xf32> -> vector<32x192xf32>
    %c1_98 = arith.constant 1 : index
    %c0_99 = arith.constant 0 : index
    %c0_100 = arith.constant 0 : index
    %253 = vector.load %arg5[%c1_98, %c0_99, %c0_100] : memref<2x1x192xf32, #tpu.memory_space<vmem>>, vector<1x1x192xf32>
    %254 = vector.shape_cast %253 : vector<1x1x192xf32> to vector<1x192xf32>
    %255 = vector.broadcast %254 : vector<1x192xf32> to vector<32x192xf32>
    %256 = arith.addf %252, %255 : vector<32x192xf32>
    %cst_101 = arith.constant 0.000000e+00 : f32
    %257 = vector.broadcast %cst_101 : f32 to vector<16x32xf32>
    %258 = vector.extract_strided_slice %256 {offsets = [0, 0], sizes = [16, 8], strides = [1, 1]} : vector<32x192xf32> to vector<16x8xf32>
    %259 = vector.extract_strided_slice %256 {offsets = [0, 32], sizes = [16, 8], strides = [1, 1]} : vector<32x192xf32> to vector<16x8xf32>
    %260 = vector.extract_strided_slice %256 {offsets = [0, 64], sizes = [16, 32], strides = [1, 1]} : vector<32x192xf32> to vector<16x32xf32>
    %cst_102 = arith.constant dense<0.000000e+00> : vector<16x16xf32>
    %261 = tpu.matmul %258, %259, %cst_102 {dimension_numbers = #tpu.dot_dimension_numbers<[1], [1], [0], [0], [0, 0, 1, 0], [], []>} : vector<16x8xf32>, vector<16x8xf32>, vector<16x16xf32> -> vector<16x16xf32>
    %cst_103 = arith.constant dense<0xFF800000> : vector<16xf32>
    %262 = vector.multi_reduction <maximumf>, %261, %cst_103 [1] : vector<16x16xf32> to vector<16xf32>
    %263 = vector.shape_cast %262 : vector<16xf32> to vector<16x1xf32>
    %264 = vector.broadcast %263 : vector<16x1xf32> to vector<16x16xf32>
    %265 = arith.subf %261, %264 : vector<16x16xf32>
    %266 = math.exp %265 : vector<16x16xf32>
    %cst_104 = arith.constant dense<0.000000e+00> : vector<16xf32>
    %267 = vector.multi_reduction <add>, %266, %cst_104 [1] : vector<16x16xf32> to vector<16xf32>
    %268 = vector.shape_cast %267 : vector<16xf32> to vector<16x1xf32>
    %269 = tpu.reciprocal %268 : vector<16x1xf32> -> vector<16x1xf32>
    %270 = vector.broadcast %269 : vector<16x1xf32> to vector<16x16xf32>
    %271 = arith.mulf %266, %270 : vector<16x16xf32>
    %cst_105 = arith.constant dense<0.000000e+00> : vector<16x32xf32>
    %272 = tpu.matmul %271, %260, %cst_105 {dimension_numbers = #tpu.dot_dimension_numbers<[1], [0], [0], [1], [0, 0, 1, 1], [], []>} : vector<16x16xf32>, vector<16x32xf32>, vector<16x32xf32> -> vector<16x32xf32>
    %273 = arith.addf %257, %272 : vector<16x32xf32>
    %274 = vector.extract_strided_slice %256 {offsets = [0, 8], sizes = [16, 8], strides = [1, 1]} : vector<32x192xf32> to vector<16x8xf32>
    %275 = vector.extract_strided_slice %256 {offsets = [0, 40], sizes = [16, 8], strides = [1, 1]} : vector<32x192xf32> to vector<16x8xf32>
    %276 = vector.extract_strided_slice %256 {offsets = [0, 96], sizes = [16, 32], strides = [1, 1]} : vector<32x192xf32> to vector<16x32xf32>
    %cst_106 = arith.constant dense<0.000000e+00> : vector<16x16xf32>
    %277 = tpu.matmul %274, %275, %cst_106 {dimension_numbers = #tpu.dot_dimension_numbers<[1], [1], [0], [0], [0, 0, 1, 0], [], []>} : vector<16x8xf32>, vector<16x8xf32>, vector<16x16xf32> -> vector<16x16xf32>
    %cst_107 = arith.constant dense<0xFF800000> : vector<16xf32>
    %278 = vector.multi_reduction <maximumf>, %277, %cst_107 [1] : vector<16x16xf32> to vector<16xf32>
    %279 = vector.shape_cast %278 : vector<16xf32> to vector<16x1xf32>
    %280 = vector.broadcast %279 : vector<16x1xf32> to vector<16x16xf32>
    %281 = arith.subf %277, %280 : vector<16x16xf32>
    %282 = math.exp %281 : vector<16x16xf32>
    %cst_108 = arith.constant dense<0.000000e+00> : vector<16xf32>
    %283 = vector.multi_reduction <add>, %282, %cst_108 [1] : vector<16x16xf32> to vector<16xf32>
    %284 = vector.shape_cast %283 : vector<16xf32> to vector<16x1xf32>
    %285 = tpu.reciprocal %284 : vector<16x1xf32> -> vector<16x1xf32>
    %286 = vector.broadcast %285 : vector<16x1xf32> to vector<16x16xf32>
    %287 = arith.mulf %282, %286 : vector<16x16xf32>
    %cst_109 = arith.constant dense<0.000000e+00> : vector<16x32xf32>
    %288 = tpu.matmul %287, %276, %cst_109 {dimension_numbers = #tpu.dot_dimension_numbers<[1], [0], [0], [1], [0, 0, 1, 1], [], []>} : vector<16x16xf32>, vector<16x32xf32>, vector<16x32xf32> -> vector<16x32xf32>
    %289 = arith.addf %273, %288 : vector<16x32xf32>
    %290 = vector.extract_strided_slice %256 {offsets = [0, 16], sizes = [16, 8], strides = [1, 1]} : vector<32x192xf32> to vector<16x8xf32>
    %291 = vector.extract_strided_slice %256 {offsets = [0, 48], sizes = [16, 8], strides = [1, 1]} : vector<32x192xf32> to vector<16x8xf32>
    %292 = vector.extract_strided_slice %256 {offsets = [0, 128], sizes = [16, 32], strides = [1, 1]} : vector<32x192xf32> to vector<16x32xf32>
    %cst_110 = arith.constant dense<0.000000e+00> : vector<16x16xf32>
    %293 = tpu.matmul %290, %291, %cst_110 {dimension_numbers = #tpu.dot_dimension_numbers<[1], [1], [0], [0], [0, 0, 1, 0], [], []>} : vector<16x8xf32>, vector<16x8xf32>, vector<16x16xf32> -> vector<16x16xf32>
    %cst_111 = arith.constant dense<0xFF800000> : vector<16xf32>
    %294 = vector.multi_reduction <maximumf>, %293, %cst_111 [1] : vector<16x16xf32> to vector<16xf32>
    %295 = vector.shape_cast %294 : vector<16xf32> to vector<16x1xf32>
    %296 = vector.broadcast %295 : vector<16x1xf32> to vector<16x16xf32>
    %297 = arith.subf %293, %296 : vector<16x16xf32>
    %298 = math.exp %297 : vector<16x16xf32>
    %cst_112 = arith.constant dense<0.000000e+00> : vector<16xf32>
    %299 = vector.multi_reduction <add>, %298, %cst_112 [1] : vector<16x16xf32> to vector<16xf32>
    %300 = vector.shape_cast %299 : vector<16xf32> to vector<16x1xf32>
    %301 = tpu.reciprocal %300 : vector<16x1xf32> -> vector<16x1xf32>
    %302 = vector.broadcast %301 : vector<16x1xf32> to vector<16x16xf32>
    %303 = arith.mulf %298, %302 : vector<16x16xf32>
    %cst_113 = arith.constant dense<0.000000e+00> : vector<16x32xf32>
    %304 = tpu.matmul %303, %292, %cst_113 {dimension_numbers = #tpu.dot_dimension_numbers<[1], [0], [0], [1], [0, 0, 1, 1], [], []>} : vector<16x16xf32>, vector<16x32xf32>, vector<16x32xf32> -> vector<16x32xf32>
    %305 = arith.addf %289, %304 : vector<16x32xf32>
    %306 = vector.extract_strided_slice %256 {offsets = [0, 24], sizes = [16, 8], strides = [1, 1]} : vector<32x192xf32> to vector<16x8xf32>
    %307 = vector.extract_strided_slice %256 {offsets = [0, 56], sizes = [16, 8], strides = [1, 1]} : vector<32x192xf32> to vector<16x8xf32>
    %308 = vector.extract_strided_slice %256 {offsets = [0, 160], sizes = [16, 32], strides = [1, 1]} : vector<32x192xf32> to vector<16x32xf32>
    %cst_114 = arith.constant dense<0.000000e+00> : vector<16x16xf32>
    %309 = tpu.matmul %306, %307, %cst_114 {dimension_numbers = #tpu.dot_dimension_numbers<[1], [1], [0], [0], [0, 0, 1, 0], [], []>} : vector<16x8xf32>, vector<16x8xf32>, vector<16x16xf32> -> vector<16x16xf32>
    %cst_115 = arith.constant dense<0xFF800000> : vector<16xf32>
    %310 = vector.multi_reduction <maximumf>, %309, %cst_115 [1] : vector<16x16xf32> to vector<16xf32>
    %311 = vector.shape_cast %310 : vector<16xf32> to vector<16x1xf32>
    %312 = vector.broadcast %311 : vector<16x1xf32> to vector<16x16xf32>
    %313 = arith.subf %309, %312 : vector<16x16xf32>
    %314 = math.exp %313 : vector<16x16xf32>
    %cst_116 = arith.constant dense<0.000000e+00> : vector<16xf32>
    %315 = vector.multi_reduction <add>, %314, %cst_116 [1] : vector<16x16xf32> to vector<16xf32>
    %316 = vector.shape_cast %315 : vector<16xf32> to vector<16x1xf32>
    %317 = tpu.reciprocal %316 : vector<16x1xf32> -> vector<16x1xf32>
    %318 = vector.broadcast %317 : vector<16x1xf32> to vector<16x16xf32>
    %319 = arith.mulf %314, %318 : vector<16x16xf32>
    %cst_117 = arith.constant dense<0.000000e+00> : vector<16x32xf32>
    %320 = tpu.matmul %319, %308, %cst_117 {dimension_numbers = #tpu.dot_dimension_numbers<[1], [0], [0], [1], [0, 0, 1, 1], [], []>} : vector<16x16xf32>, vector<16x32xf32>, vector<16x32xf32> -> vector<16x32xf32>
    %321 = arith.addf %305, %320 : vector<16x32xf32>
    %cst_118 = arith.constant 0.000000e+00 : f32
    %322 = vector.broadcast %cst_118 : f32 to vector<16x32xf32>
    %323 = vector.extract_strided_slice %256 {offsets = [16, 0], sizes = [16, 8], strides = [1, 1]} : vector<32x192xf32> to vector<16x8xf32>
    %324 = vector.extract_strided_slice %256 {offsets = [16, 32], sizes = [16, 8], strides = [1, 1]} : vector<32x192xf32> to vector<16x8xf32>
    %325 = vector.extract_strided_slice %256 {offsets = [16, 64], sizes = [16, 32], strides = [1, 1]} : vector<32x192xf32> to vector<16x32xf32>
    %cst_119 = arith.constant dense<0.000000e+00> : vector<16x16xf32>
    %326 = tpu.matmul %323, %324, %cst_119 {dimension_numbers = #tpu.dot_dimension_numbers<[1], [1], [0], [0], [0, 0, 1, 0], [], []>} : vector<16x8xf32>, vector<16x8xf32>, vector<16x16xf32> -> vector<16x16xf32>
    %cst_120 = arith.constant dense<0xFF800000> : vector<16xf32>
    %327 = vector.multi_reduction <maximumf>, %326, %cst_120 [1] : vector<16x16xf32> to vector<16xf32>
    %328 = vector.shape_cast %327 : vector<16xf32> to vector<16x1xf32>
    %329 = vector.broadcast %328 : vector<16x1xf32> to vector<16x16xf32>
    %330 = arith.subf %326, %329 : vector<16x16xf32>
    %331 = math.exp %330 : vector<16x16xf32>
    %cst_121 = arith.constant dense<0.000000e+00> : vector<16xf32>
    %332 = vector.multi_reduction <add>, %331, %cst_121 [1] : vector<16x16xf32> to vector<16xf32>
    %333 = vector.shape_cast %332 : vector<16xf32> to vector<16x1xf32>
    %334 = tpu.reciprocal %333 : vector<16x1xf32> -> vector<16x1xf32>
    %335 = vector.broadcast %334 : vector<16x1xf32> to vector<16x16xf32>
    %336 = arith.mulf %331, %335 : vector<16x16xf32>
    %cst_122 = arith.constant dense<0.000000e+00> : vector<16x32xf32>
    %337 = tpu.matmul %336, %325, %cst_122 {dimension_numbers = #tpu.dot_dimension_numbers<[1], [0], [0], [1], [0, 0, 1, 1], [], []>} : vector<16x16xf32>, vector<16x32xf32>, vector<16x32xf32> -> vector<16x32xf32>
    %338 = arith.addf %322, %337 : vector<16x32xf32>
    %339 = vector.extract_strided_slice %256 {offsets = [16, 8], sizes = [16, 8], strides = [1, 1]} : vector<32x192xf32> to vector<16x8xf32>
    %340 = vector.extract_strided_slice %256 {offsets = [16, 40], sizes = [16, 8], strides = [1, 1]} : vector<32x192xf32> to vector<16x8xf32>
    %341 = vector.extract_strided_slice %256 {offsets = [16, 96], sizes = [16, 32], strides = [1, 1]} : vector<32x192xf32> to vector<16x32xf32>
    %cst_123 = arith.constant dense<0.000000e+00> : vector<16x16xf32>
    %342 = tpu.matmul %339, %340, %cst_123 {dimension_numbers = #tpu.dot_dimension_numbers<[1], [1], [0], [0], [0, 0, 1, 0], [], []>} : vector<16x8xf32>, vector<16x8xf32>, vector<16x16xf32> -> vector<16x16xf32>
    %cst_124 = arith.constant dense<0xFF800000> : vector<16xf32>
    %343 = vector.multi_reduction <maximumf>, %342, %cst_124 [1] : vector<16x16xf32> to vector<16xf32>
    %344 = vector.shape_cast %343 : vector<16xf32> to vector<16x1xf32>
    %345 = vector.broadcast %344 : vector<16x1xf32> to vector<16x16xf32>
    %346 = arith.subf %342, %345 : vector<16x16xf32>
    %347 = math.exp %346 : vector<16x16xf32>
    %cst_125 = arith.constant dense<0.000000e+00> : vector<16xf32>
    %348 = vector.multi_reduction <add>, %347, %cst_125 [1] : vector<16x16xf32> to vector<16xf32>
    %349 = vector.shape_cast %348 : vector<16xf32> to vector<16x1xf32>
    %350 = tpu.reciprocal %349 : vector<16x1xf32> -> vector<16x1xf32>
    %351 = vector.broadcast %350 : vector<16x1xf32> to vector<16x16xf32>
    %352 = arith.mulf %347, %351 : vector<16x16xf32>
    %cst_126 = arith.constant dense<0.000000e+00> : vector<16x32xf32>
    %353 = tpu.matmul %352, %341, %cst_126 {dimension_numbers = #tpu.dot_dimension_numbers<[1], [0], [0], [1], [0, 0, 1, 1], [], []>} : vector<16x16xf32>, vector<16x32xf32>, vector<16x32xf32> -> vector<16x32xf32>
    %354 = arith.addf %338, %353 : vector<16x32xf32>
    %355 = vector.extract_strided_slice %256 {offsets = [16, 16], sizes = [16, 8], strides = [1, 1]} : vector<32x192xf32> to vector<16x8xf32>
    %356 = vector.extract_strided_slice %256 {offsets = [16, 48], sizes = [16, 8], strides = [1, 1]} : vector<32x192xf32> to vector<16x8xf32>
    %357 = vector.extract_strided_slice %256 {offsets = [16, 128], sizes = [16, 32], strides = [1, 1]} : vector<32x192xf32> to vector<16x32xf32>
    %cst_127 = arith.constant dense<0.000000e+00> : vector<16x16xf32>
    %358 = tpu.matmul %355, %356, %cst_127 {dimension_numbers = #tpu.dot_dimension_numbers<[1], [1], [0], [0], [0, 0, 1, 0], [], []>} : vector<16x8xf32>, vector<16x8xf32>, vector<16x16xf32> -> vector<16x16xf32>
    %cst_128 = arith.constant dense<0xFF800000> : vector<16xf32>
    %359 = vector.multi_reduction <maximumf>, %358, %cst_128 [1] : vector<16x16xf32> to vector<16xf32>
    %360 = vector.shape_cast %359 : vector<16xf32> to vector<16x1xf32>
    %361 = vector.broadcast %360 : vector<16x1xf32> to vector<16x16xf32>
    %362 = arith.subf %358, %361 : vector<16x16xf32>
    %363 = math.exp %362 : vector<16x16xf32>
    %cst_129 = arith.constant dense<0.000000e+00> : vector<16xf32>
    %364 = vector.multi_reduction <add>, %363, %cst_129 [1] : vector<16x16xf32> to vector<16xf32>
    %365 = vector.shape_cast %364 : vector<16xf32> to vector<16x1xf32>
    %366 = tpu.reciprocal %365 : vector<16x1xf32> -> vector<16x1xf32>
    %367 = vector.broadcast %366 : vector<16x1xf32> to vector<16x16xf32>
    %368 = arith.mulf %363, %367 : vector<16x16xf32>
    %cst_130 = arith.constant dense<0.000000e+00> : vector<16x32xf32>
    %369 = tpu.matmul %368, %357, %cst_130 {dimension_numbers = #tpu.dot_dimension_numbers<[1], [0], [0], [1], [0, 0, 1, 1], [], []>} : vector<16x16xf32>, vector<16x32xf32>, vector<16x32xf32> -> vector<16x32xf32>
    %370 = arith.addf %354, %369 : vector<16x32xf32>
    %371 = vector.extract_strided_slice %256 {offsets = [16, 24], sizes = [16, 8], strides = [1, 1]} : vector<32x192xf32> to vector<16x8xf32>
    %372 = vector.extract_strided_slice %256 {offsets = [16, 56], sizes = [16, 8], strides = [1, 1]} : vector<32x192xf32> to vector<16x8xf32>
    %373 = vector.extract_strided_slice %256 {offsets = [16, 160], sizes = [16, 32], strides = [1, 1]} : vector<32x192xf32> to vector<16x32xf32>
    %cst_131 = arith.constant dense<0.000000e+00> : vector<16x16xf32>
    %374 = tpu.matmul %371, %372, %cst_131 {dimension_numbers = #tpu.dot_dimension_numbers<[1], [1], [0], [0], [0, 0, 1, 0], [], []>} : vector<16x8xf32>, vector<16x8xf32>, vector<16x16xf32> -> vector<16x16xf32>
    %cst_132 = arith.constant dense<0xFF800000> : vector<16xf32>
    %375 = vector.multi_reduction <maximumf>, %374, %cst_132 [1] : vector<16x16xf32> to vector<16xf32>
    %376 = vector.shape_cast %375 : vector<16xf32> to vector<16x1xf32>
    %377 = vector.broadcast %376 : vector<16x1xf32> to vector<16x16xf32>
    %378 = arith.subf %374, %377 : vector<16x16xf32>
    %379 = math.exp %378 : vector<16x16xf32>
    %cst_133 = arith.constant dense<0.000000e+00> : vector<16xf32>
    %380 = vector.multi_reduction <add>, %379, %cst_133 [1] : vector<16x16xf32> to vector<16xf32>
    %381 = vector.shape_cast %380 : vector<16xf32> to vector<16x1xf32>
    %382 = tpu.reciprocal %381 : vector<16x1xf32> -> vector<16x1xf32>
    %383 = vector.broadcast %382 : vector<16x1xf32> to vector<16x16xf32>
    %384 = arith.mulf %379, %383 : vector<16x16xf32>
    %cst_134 = arith.constant dense<0.000000e+00> : vector<16x32xf32>
    %385 = tpu.matmul %384, %373, %cst_134 {dimension_numbers = #tpu.dot_dimension_numbers<[1], [0], [0], [1], [0, 0, 1, 1], [], []>} : vector<16x16xf32>, vector<16x32xf32>, vector<16x32xf32> -> vector<16x32xf32>
    %386 = arith.addf %370, %385 : vector<16x32xf32>
    %387 = tpu.concatenate %321, %386 in 0 : vector<16x32xf32>, vector<16x32xf32> -> vector<32x32xf32>
    %388 = arith.addf %223, %387 : vector<32x32xf32>
    %c1_135 = arith.constant 1 : index
    %c0_136 = arith.constant 0 : index
    %c0_137 = arith.constant 0 : index
    %389 = vector.load %arg6[%c1_135, %c0_136, %c0_137] : memref<2x1x32xf32, #tpu.memory_space<vmem>>, vector<1x1x32xf32>
    %390 = vector.shape_cast %389 : vector<1x1x32xf32> to vector<1x32xf32>
    %391 = vector.broadcast %390 : vector<1x32xf32> to vector<32x32xf32>
    %392 = arith.addf %388, %391 : vector<32x32xf32>
    %c1_138 = arith.constant 1 : index
    %c0_139 = arith.constant 0 : index
    %c0_140 = arith.constant 0 : index
    %393 = vector.load %arg7[%c1_138, %c0_139, %c0_140] : memref<2x1x32xf32, #tpu.memory_space<vmem>>, vector<1x1x32xf32>
    %394 = vector.shape_cast %393 : vector<1x1x32xf32> to vector<1x32xf32>
    %c1_141 = arith.constant 1 : index
    %c0_142 = arith.constant 0 : index
    %c0_143 = arith.constant 0 : index
    %395 = vector.load %arg8[%c1_141, %c0_142, %c0_143] : memref<2x1x32xf32, #tpu.memory_space<vmem>>, vector<1x1x32xf32>
    %396 = vector.shape_cast %395 : vector<1x1x32xf32> to vector<1x32xf32>
    %cst_144 = arith.constant dense<0.000000e+00> : vector<32xf32>
    %397 = vector.multi_reduction <add>, %392, %cst_144 [1] : vector<32x32xf32> to vector<32xf32>
    %398 = vector.shape_cast %397 : vector<32xf32> to vector<32x1xf32>
    %cst_145 = arith.constant 3.200000e+01 : f32
    %399 = vector.broadcast %cst_145 : f32 to vector<32x1xf32>
    %400 = arith.divf %398, %399 : vector<32x1xf32>
    %401 = vector.broadcast %400 : vector<32x1xf32> to vector<32x32xf32>
    %402 = arith.subf %392, %401 : vector<32x32xf32>
    %403 = arith.mulf %402, %402 : vector<32x32xf32>
    %cst_146 = arith.constant dense<0.000000e+00> : vector<32xf32>
    %404 = vector.multi_reduction <add>, %403, %cst_146 [1] : vector<32x32xf32> to vector<32xf32>
    %405 = vector.shape_cast %404 : vector<32xf32> to vector<32x1xf32>
    %cst_147 = arith.constant 3.200000e+01 : f32
    %406 = vector.broadcast %cst_147 : f32 to vector<32x1xf32>
    %407 = arith.divf %405, %406 : vector<32x1xf32>
    %408 = vector.broadcast %400 : vector<32x1xf32> to vector<32x32xf32>
    %409 = arith.subf %392, %408 : vector<32x32xf32>
    %cst_148 = arith.constant 9.99999974E-6 : f32
    %410 = vector.broadcast %cst_148 : f32 to vector<32x1xf32>
    %411 = arith.addf %407, %410 : vector<32x1xf32>
    %412 = math.rsqrt %411 : vector<32x1xf32>
    %413 = vector.broadcast %412 : vector<32x1xf32> to vector<32x32xf32>
    %414 = arith.mulf %409, %413 : vector<32x32xf32>
    %415 = vector.broadcast %394 : vector<1x32xf32> to vector<32x32xf32>
    %416 = arith.mulf %414, %415 : vector<32x32xf32>
    %417 = vector.broadcast %396 : vector<1x32xf32> to vector<32x32xf32>
    %418 = arith.addf %416, %417 : vector<32x32xf32>
    %c1_149 = arith.constant 1 : index
    %c0_150 = arith.constant 0 : index
    %c0_151 = arith.constant 0 : index
    %419 = vector.load %arg9[%c1_149, %c0_150, %c0_151] : memref<2x32x64xf32, #tpu.memory_space<vmem>>, vector<1x32x64xf32>
    %420 = vector.shape_cast %419 : vector<1x32x64xf32> to vector<32x64xf32>
    %cst_152 = arith.constant dense<0.000000e+00> : vector<32x64xf32>
    %421 = tpu.matmul %418, %420, %cst_152 {dimension_numbers = #tpu.dot_dimension_numbers<[1], [0], [0], [1], [0, 0, 1, 1], [], []>} : vector<32x32xf32>, vector<32x64xf32>, vector<32x64xf32> -> vector<32x64xf32>
    %c1_153 = arith.constant 1 : index
    %c0_154 = arith.constant 0 : index
    %c0_155 = arith.constant 0 : index
    %422 = vector.load %arg10[%c1_153, %c0_154, %c0_155] : memref<2x1x64xf32, #tpu.memory_space<vmem>>, vector<1x1x64xf32>
    %423 = vector.shape_cast %422 : vector<1x1x64xf32> to vector<1x64xf32>
    %424 = vector.broadcast %423 : vector<1x64xf32> to vector<32x64xf32>
    %425 = arith.addf %421, %424 : vector<32x64xf32>
    %cst_156 = arith.constant 5.000000e-01 : f32
    %426 = vector.broadcast %cst_156 : f32 to vector<32x64xf32>
    %427 = arith.mulf %426, %425 : vector<32x64xf32>
    %cst_157 = arith.constant 4.471500e-02 : f32
    %428 = vector.broadcast %cst_157 : f32 to vector<32x64xf32>
    %429 = arith.mulf %428, %425 : vector<32x64xf32>
    %430 = arith.mulf %429, %425 : vector<32x64xf32>
    %431 = arith.mulf %430, %425 : vector<32x64xf32>
    %432 = arith.addf %425, %431 : vector<32x64xf32>
    %cst_158 = arith.constant 0.797884583 : f32
    %433 = vector.broadcast %cst_158 : f32 to vector<32x64xf32>
    %434 = arith.mulf %433, %432 : vector<32x64xf32>
    %435 = math.tanh %434 : vector<32x64xf32>
    %cst_159 = arith.constant 1.000000e+00 : f32
    %436 = vector.broadcast %cst_159 : f32 to vector<32x64xf32>
    %437 = arith.addf %436, %435 : vector<32x64xf32>
    %438 = arith.mulf %427, %437 : vector<32x64xf32>
    %c1_160 = arith.constant 1 : index
    %c0_161 = arith.constant 0 : index
    %c0_162 = arith.constant 0 : index
    %439 = vector.load %arg11[%c1_160, %c0_161, %c0_162] : memref<2x64x32xf32, #tpu.memory_space<vmem>>, vector<1x64x32xf32>
    %440 = vector.shape_cast %439 : vector<1x64x32xf32> to vector<64x32xf32>
    %cst_163 = arith.constant dense<0.000000e+00> : vector<32x32xf32>
    %441 = tpu.matmul %438, %440, %cst_163 {dimension_numbers = #tpu.dot_dimension_numbers<[1], [0], [0], [1], [0, 0, 1, 1], [], []>} : vector<32x64xf32>, vector<64x32xf32>, vector<32x32xf32> -> vector<32x32xf32>
    %442 = arith.addf %392, %441 : vector<32x32xf32>
    %c1_164 = arith.constant 1 : index
    %c0_165 = arith.constant 0 : index
    %c0_166 = arith.constant 0 : index
    %443 = vector.load %arg12[%c1_164, %c0_165, %c0_166] : memref<2x1x32xf32, #tpu.memory_space<vmem>>, vector<1x1x32xf32>
    %444 = vector.shape_cast %443 : vector<1x1x32xf32> to vector<1x32xf32>
    %445 = vector.broadcast %444 : vector<1x32xf32> to vector<32x32xf32>
    %446 = arith.addf %442, %445 : vector<32x32xf32>
    %c0_167 = arith.constant 0 : index
    %c0_168 = arith.constant 0 : index
    %447 = vector.load %arg13[%c0_167, %c0_168] : memref<32x32xf32, #tpu.memory_space<vmem>>, vector<32x32xf32>
    tpu.vector_store %arg13[%c0_167, %c0_168], %446 {strides = array<i32>} : memref<32x32xf32, #tpu.memory_space<vmem>>, vector<32x32xf32>,
    return
  }
  func.func @transform_0(%arg0: i32) -> (i32, i32) {
    %c0_i32 = arith.constant 0 : i32
    %c0_i32_0 = arith.constant 0 : i32
    return %arg0, %c0_i32 : i32, i32
  }
  func.func @transform_1(%arg0: i32) -> (i32, i32, i32) {
    %c0_i32 = arith.constant 0 : i32
    %c0_i32_0 = arith.constant 0 : i32
    %c0_i32_1 = arith.constant 0 : i32
    %c0_i32_2 = arith.constant 0 : i32
    return %c0_i32, %c0_i32_0, %c0_i32_1 : i32, i32, i32
  }
  func.func @transform_2(%arg0: i32) -> (i32, i32, i32) {
    %c0_i32 = arith.constant 0 : i32
    %c0_i32_0 = arith.constant 0 : i32
    %c0_i32_1 = arith.constant 0 : i32
    %c0_i32_2 = arith.constant 0 : i32
    return %c0_i32, %c0_i32_0, %c0_i32_1 : i32, i32, i32
  }
  func.func @transform_3(%arg0: i32) -> (i32, i32, i32) {
    %c0_i32 = arith.constant 0 : i32
    %c0_i32_0 = arith.constant 0 : i32
    %c0_i32_1 = arith.constant 0 : i32
    %c0_i32_2 = arith.constant 0 : i32
    return %c0_i32, %c0_i32_0, %c0_i32_1 : i32, i32, i32
  }
  func.func @transform_4(%arg0: i32) -> (i32, i32, i32) {
    %c0_i32 = arith.constant 0 : i32
    %c0_i32_0 = arith.constant 0 : i32
    %c0_i32_1 = arith.constant 0 : i32
    %c0_i32_2 = arith.constant 0 : i32
    return %c0_i32, %c0_i32_0, %c0_i32_1 : i32, i32, i32
  }
  func.func @transform_5(%arg0: i32) -> (i32, i32, i32) {
    %c0_i32 = arith.constant 0 : i32
    %c0_i32_0 = arith.constant 0 : i32
    %c0_i32_1 = arith.constant 0 : i32
    %c0_i32_2 = arith.constant 0 : i32
    return %c0_i32, %c0_i32_0, %c0_i32_1 : i32, i32, i32
  }
  func.func @transform_6(%arg0: i32) -> (i32, i32, i32) {
    %c0_i32 = arith.constant 0 : i32
    %c0_i32_0 = arith.constant 0 : i32
    %c0_i32_1 = arith.constant 0 : i32
    %c0_i32_2 = arith.constant 0 : i32
    return %c0_i32, %c0_i32_0, %c0_i32_1 : i32, i32, i32
  }
  func.func @transform_7(%arg0: i32) -> (i32, i32, i32) {
    %c0_i32 = arith.constant 0 : i32
    %c0_i32_0 = arith.constant 0 : i32
    %c0_i32_1 = arith.constant 0 : i32
    %c0_i32_2 = arith.constant 0 : i32
    return %c0_i32, %c0_i32_0, %c0_i32_1 : i32, i32, i32
  }
  func.func @transform_8(%arg0: i32) -> (i32, i32, i32) {
    %c0_i32 = arith.constant 0 : i32
    %c0_i32_0 = arith.constant 0 : i32
    %c0_i32_1 = arith.constant 0 : i32
    %c0_i32_2 = arith.constant 0 : i32
    return %c0_i32, %c0_i32_0, %c0_i32_1 : i32, i32, i32
  }
  func.func @transform_9(%arg0: i32) -> (i32, i32, i32) {
    %c0_i32 = arith.constant 0 : i32
    %c0_i32_0 = arith.constant 0 : i32
    %c0_i32_1 = arith.constant 0 : i32
    %c0_i32_2 = arith.constant 0 : i32
    return %c0_i32, %c0_i32_0, %c0_i32_1 : i32, i32, i32
  }
  func.func @transform_10(%arg0: i32) -> (i32, i32, i32) {
    %c0_i32 = arith.constant 0 : i32
    %c0_i32_0 = arith.constant 0 : i32
    %c0_i32_1 = arith.constant 0 : i32
    %c0_i32_2 = arith.constant 0 : i32
    return %c0_i32, %c0_i32_0, %c0_i32_1 : i32, i32, i32
  }
  func.func @transform_11(%arg0: i32) -> (i32, i32, i32) {
    %c0_i32 = arith.constant 0 : i32
    %c0_i32_0 = arith.constant 0 : i32
    %c0_i32_1 = arith.constant 0 : i32
    %c0_i32_2 = arith.constant 0 : i32
    return %c0_i32, %c0_i32_0, %c0_i32_1 : i32, i32, i32
  }
  func.func @transform_12(%arg0: i32) -> (i32, i32) {
    %c0_i32 = arith.constant 0 : i32
    %c0_i32_0 = arith.constant 0 : i32
    return %arg0, %c0_i32 : i32, i32
  }
}

</mosaic_0001>

<llo_original>
// kernel: tpu_custom_call.1
$region0: #{tpu_custom_call.1}
  #allocation0 [shape = 'u32[]', space=smem, size = 0x4, offset = 0x4, fixed_abs, tag = 'smem constant byte address 0x4 - core index']
  #allocation1 [shape = 'u32[72,128]{1,0:T(1,128)}', space=vmem, size = 0x9000, scoped, tag = 'internal scratch']
  %s0 = inlined_call_operand.hbm [shape: f32[32,32], index: 0, kind: input, shape index: {}]
  %s1 = inlined_call_operand.vmem [shape: f32[2,1,32], index: 1, kind: input, shape index: {}]
  %s2 = inlined_call_operand.hbm [shape: f32[2,1,32], index: 2, kind: input, shape index: {}]
  %s3 = inlined_call_operand.vmem [shape: f32[2,32,192], index: 3, kind: input, shape index: {}]
  %s4 = inlined_call_operand.hbm [shape: f32[2,1,192], index: 4, kind: input, shape index: {}]
  %s5 = inlined_call_operand.hbm [shape: f32[2,1,32], index: 5, kind: input, shape index: {}]
  %s6 = inlined_call_operand.vmem [shape: f32[2,1,32], index: 6, kind: input, shape index: {}]
  %s7 = inlined_call_operand.hbm [shape: f32[2,1,32], index: 7, kind: input, shape index: {}]
  %s8 = inlined_call_operand.vmem [shape: f32[2,32,64], index: 8, kind: input, shape index: {}]
  %s9 = inlined_call_operand.vmem [shape: f32[2,1,64], index: 9, kind: input, shape index: {}]
  %s10 = inlined_call_operand.vmem [shape: f32[2,64,32], index: 10, kind: input, shape index: {}]
  %s11 = inlined_call_operand.vmem [shape: f32[2,1,32], index: 11, kind: input, shape index: {}]
  %s12 = inlined_call_operand.hbm [shape: f32[32,32], index: 12, kind: output, shape index: {}]
  %s13 = sld [smem:[#allocation0]]
  $region78: #{tpu_custom_call.1} parent=0
    _
  %s15 = ssub.s32 1, %s13
  %s16 = scalar_select 0, %s15, %s13
  $region1: #{tpu_custom_call.1} parent=0
    #allocation2 [shape = 'u8[16384]{0}', space=vmem, size = 0x4000, scoped, tag = 'input window, operand 0, single buffered']
    #allocation3 [shape = 's32[1]{0}', space=sflag, size = 0x4, scoped, tag = 'scoped memory for tpu_custom_call.1']
    #allocation4 [shape = 's32[1]{0}', space=sflag, size = 0x4, scoped, tag = 'scoped memory for tpu_custom_call.1']
    #allocation5 [shape = 'u8[1024]{0}', space=vmem, size = 0x400, scoped, tag = 'input window, operand 2, single buffered']
    #allocation6 [shape = 's32[1]{0}', space=sflag, size = 0x4, scoped, tag = 'scoped memory for tpu_custom_call.1']
    #allocation7 [shape = 'u8[2048]{0}', space=vmem, size = 0x800, scoped, tag = 'input window, operand 4, single buffered']
    #allocation8 [shape = 'u8[1024]{0}', space=vmem, size = 0x400, scoped, tag = 'input window, operand 5, single buffered']
    #allocation9 [shape = 's32[1]{0}', space=sflag, size = 0x4, scoped, tag = 'scoped memory for tpu_custom_call.1']
    #allocation10 [shape = 'u8[1024]{0}', space=vmem, size = 0x400, scoped, tag = 'input window, operand 7, single buffered']
    #allocation11 [shape = 'u8[16384]{0}', space=vmem, size = 0x4000, scoped, tag = 'output window, operand 0, single buffered']
    %17 = vsyncpa [#allocation3], 0
    %18 = vsyncpa [#allocation6], 0
    %19 = vsyncpa [#allocation9], 0
    %20 = vsyncpa [#allocation4], 0
    // Predicated region
    $region2: #{tpu_custom_call.1} parent=1 // pred_check
      _
    $region3: #{tpu_custom_call.1} parent=1 // pred_check_branch
      %22 = sbr.rel (0) target = $region5
    $region4: #{tpu_custom_call.1} parent=1 // pred_region
      %24 = vsyncadd [#allocation3], 0
      %s25 = sshll.u32 %s0, 4
      %s26 = int_to_ptr.hbm [resolvable:$true] %s25
      %s27 = sshll.u32 [#allocation2], 4
      %s28 = int_to_ptr.vmem [resolvable:$true] %s27
      %33 = dma.hbm_to_vmem [thread:$0]  %s26, 512, %s28, [#allocation3], 128, 128, 8
    $region5: #{tpu_custom_call.1} parent=1 // pred_fallthru
      _
    // Predicated region
    $region6: #{tpu_custom_call.1} parent=1 // pred_check
      _
    $region7: #{tpu_custom_call.1} parent=1 // pred_check_branch
      %35 = sbr.rel (0) target = $region9
    $region8: #{tpu_custom_call.1} parent=1 // pred_region
      _
    $region9: #{tpu_custom_call.1} parent=1 // pred_fallthru
      _
    // Predicated region
    $region10: #{tpu_custom_call.1} parent=1 // pred_check
      _
    $region11: #{tpu_custom_call.1} parent=1 // pred_check_branch
      %37 = sbr.rel (0) target = $region13
    $region12: #{tpu_custom_call.1} parent=1 // pred_region
      %39 = vsyncadd [#allocation6], 0
      %s40 = sshll.u32 %s2, 4
      %s41 = int_to_ptr.hbm [resolvable:$true] %s40
      %s42 = sshll.u32 [#allocation5], 4
      %s43 = int_to_ptr.vmem [resolvable:$true] %s42
      %48 = dma.hbm_to_vmem [thread:$0]  %s41, 32, %s43, [#allocation6], 16, 16, 1
    $region13: #{tpu_custom_call.1} parent=1 // pred_fallthru
      _
    // Predicated region
    $region14: #{tpu_custom_call.1} parent=1 // pred_check
      _
    $region15: #{tpu_custom_call.1} parent=1 // pred_check_branch
      %50 = sbr.rel (0) target = $region17
    $region16: #{tpu_custom_call.1} parent=1 // pred_region
      _
    $region17: #{tpu_custom_call.1} parent=1 // pred_fallthru
      _
    // Predicated region
    $region18: #{tpu_custom_call.1} parent=1 // pred_check
      _
    $region19: #{tpu_custom_call.1} parent=1 // pred_check_branch
      %52 = sbr.rel (0) target = $region21
    $region20: #{tpu_custom_call.1} parent=1 // pred_region
      %54 = vsyncadd [#allocation6], 0
      %s55 = sshll.u32 %s4, 4
      %s56 = int_to_ptr.hbm [resolvable:$true] %s55
      %s57 = sshll.u32 [#allocation7], 4
      %s58 = int_to_ptr.vmem [resolvable:$true] %s57
      %63 = dma.hbm_to_vmem [thread:$0]  %s56, 64, %s58, [#allocation6], 32, 32, 2
    $region21: #{tpu_custom_call.1} parent=1 // pred_fallthru
      _
    // Predicated region
    $region22: #{tpu_custom_call.1} parent=1 // pred_check
      _
    $region23: #{tpu_custom_call.1} parent=1 // pred_check_branch
      %65 = sbr.rel (0) target = $region25
    $region24: #{tpu_custom_call.1} parent=1 // pred_region
      %67 = vsyncadd [#allocation9], 0
      %s68 = sshll.u32 %s5, 4
      %s69 = int_to_ptr.hbm [resolvable:$true] %s68
      %s70 = sshll.u32 [#allocation8], 4
      %s71 = int_to_ptr.vmem [resolvable:$true] %s70
      %76 = dma.hbm_to_vmem [thread:$0]  %s69, 32, %s71, [#allocation9], 16, 16, 1
    $region25: #{tpu_custom_call.1} parent=1 // pred_fallthru
      _
    // Predicated region
    $region26: #{tpu_custom_call.1} parent=1 // pred_check
      _
    $region27: #{tpu_custom_call.1} parent=1 // pred_check_branch
      %78 = sbr.rel (0) target = $region29
    $region28: #{tpu_custom_call.1} parent=1 // pred_region
      _
    $region29: #{tpu_custom_call.1} parent=1 // pred_fallthru
      _
    // Predicated region
    $region30: #{tpu_custom_call.1} parent=1 // pred_check
      _
    $region31: #{tpu_custom_call.1} parent=1 // pred_check_branch
      %80 = sbr.rel (0) target = $region33
    $region32: #{tpu_custom_call.1} parent=1 // pred_region
      %82 = vsyncadd [#allocation9], 0
      %s83 = sshll.u32 %s7, 4
      %s84 = int_to_ptr.hbm [resolvable:$true] %s83
      %s85 = sshll.u32 [#allocation10], 4
      %s86 = int_to_ptr.vmem [resolvable:$true] %s85
      %91 = dma.hbm_to_vmem [thread:$0]  %s84, 32, %s86, [#allocation9], 16, 16, 1
    $region33: #{tpu_custom_call.1} parent=1 // pred_fallthru
      _
    // Predicated region
    $region34: #{tpu_custom_call.1} parent=1 // pred_check
      _
    $region35: #{tpu_custom_call.1} parent=1 // pred_check_branch
      %93 = sbr.rel (0) target = $region37
    $region36: #{tpu_custom_call.1} parent=1 // pred_region
      _
    $region37: #{tpu_custom_call.1} parent=1 // pred_fallthru
      _
    // Predicated region
    $region38: #{tpu_custom_call.1} parent=1 // pred_check
      _
    $region39: #{tpu_custom_call.1} parent=1 // pred_check_branch
      %95 = sbr.rel (0) target = $region41
    $region40: #{tpu_custom_call.1} parent=1 // pred_region
      _
    $region41: #{tpu_custom_call.1} parent=1 // pred_fallthru
      _
    // Predicated region
    $region42: #{tpu_custom_call.1} parent=1 // pred_check
      _
    $region43: #{tpu_custom_call.1} parent=1 // pred_check_branch
      %97 = sbr.rel (0) target = $region45
    $region44: #{tpu_custom_call.1} parent=1 // pred_region
      _
    $region45: #{tpu_custom_call.1} parent=1 // pred_fallthru
      _
    // Predicated region
    $region46: #{tpu_custom_call.1} parent=1 // pred_check
      _
    $region47: #{tpu_custom_call.1} parent=1 // pred_check_branch
      %99 = sbr.rel (0) target = $region49
    $region48: #{tpu_custom_call.1} parent=1 // pred_region
      _
    $region49: #{tpu_custom_call.1} parent=1 // pred_fallthru
      _
    // Predicated region
    $region50: #{tpu_custom_call.1} parent=1 // pred_check
      _
    $region51: #{tpu_custom_call.1} parent=1 // pred_check_branch
      %101 = sbr.rel (0) target = $region53
    $region52: #{tpu_custom_call.1} parent=1 // pred_region
      %103 = dma.done [#allocation3], 512
    $region53: #{tpu_custom_call.1} parent=1 // pred_fallthru
      _
    // Predicated region
    $region54: #{tpu_custom_call.1} parent=1 // pred_check
      _
    $region55: #{tpu_custom_call.1} parent=1 // pred_check_branch
      %105 = sbr.rel (0) target = $region57
    $region56: #{tpu_custom_call.1} parent=1 // pred_region
      %107 = dma.done [#allocation6], 32
    $region57: #{tpu_custom_call.1} parent=1 // pred_fallthru
      _
    // Predicated region
    $region58: #{tpu_custom_call.1} parent=1 // pred_check
      _
    $region59: #{tpu_custom_call.1} parent=1 // pred_check_branch
      %109 = sbr.rel (0) target = $region61
    $region60: #{tpu_custom_call.1} parent=1 // pred_region
      %111 = dma.done [#allocation6], 64
    $region61: #{tpu_custom_call.1} parent=1 // pred_fallthru
      _
    // Predicated region
    $region62: #{tpu_custom_call.1} parent=1 // pred_check
      _
    $region63: #{tpu_custom_call.1} parent=1 // pred_check_branch
      %113 = sbr.rel (0) target = $region65
    $region64: #{tpu_custom_call.1} parent=1 // pred_region
      %115 = dma.done [#allocation9], 32
    $region65: #{tpu_custom_call.1} parent=1 // pred_fallthru
      _
    // Predicated region
    $region66: #{tpu_custom_call.1} parent=1 // pred_check
      _
    $region67: #{tpu_custom_call.1} parent=1 // pred_check_branch
      %117 = sbr.rel (0) target = $region69
    $region68: #{tpu_custom_call.1} parent=1 // pred_region
      %119 = dma.done [#allocation9], 32
    $region69: #{tpu_custom_call.1} parent=1 // pred_fallthru
      _
    %v120 = vld [vmem:[#allocation2] sm:$0xff]
    %v121 = vld [vmem:[#allocation2 + $0x8] sm:$0xff]
    %v122 = vld [vmem:[#allocation2 + $0x10] sm:$0xff]
    %v123 = vld [vmem:[#allocation2 + $0x18] sm:$0xff]
    %v124 = vld [vmem:[%s1] sm:$0x1]
    %v125 = vld [vmem:[#allocation5] sm:$0x1]
    %vm126 = vcmask 261120
    %v127 = vsel %vm126, %v120, 0.0
    %128 = vadd.xlane.f32.xlu0 %v127
    %v129 = vpop.xlane.xlu0 %128
    %v130 = vsel %vm126, %v121, 0.0
    %131 = vadd.xlane.f32.xlu0 %v130
    %v132 = vpop.xlane.xlu0 %131
    %v133 = vsel %vm126, %v122, 0.0
    %134 = vadd.xlane.f32.xlu0 %v133
    %v135 = vpop.xlane.xlu0 %134
    %v136 = vsel %vm126, %v123, 0.0
    %137 = vadd.xlane.f32.xlu0 %v136
    %v138 = vpop.xlane.xlu0 %137
    %v139 = vrcp.pop 32.0
    %v140 = vmul.f32 32.0, %v139
    %v141 = vsub.f32 1.0, %v140
    %v142 = vmul.f32 %v139, %v141
    %v143 = vadd.f32 %v139, %v142
    %vm144 = vweird.f32 %v139
    %v145 = vsel %vm144, %v139, %v143
    %v146 = vmul.f32 %v129, %v145
    %v147 = vmul.f32 %v132, %v145
    %v148 = vmul.f32 %v135, %v145
    %v149 = vmul.f32 %v138, %v145
    %v150 = vsub.f32 %v120, %v146
    %v151 = vsub.f32 %v121, %v147
    %v152 = vsub.f32 %v122, %v148
    %v153 = vsub.f32 %v123, %v149
    %v154 = vmul.f32 %v150, %v150
    %v155 = vmul.f32 %v151, %v151
    %v156 = vmul.f32 %v152, %v152
    %v157 = vmul.f32 %v153, %v153
    %v158 = vsel %vm126, %v154, 0.0
    %159 = vadd.xlane.f32.xlu0 %v158
    %v160 = vpop.xlane.xlu0 %159
    %v161 = vsel %vm126, %v155, 0.0
    %162 = vadd.xlane.f32.xlu0 %v161
    %v163 = vpop.xlane.xlu0 %162
    %v164 = vsel %vm126, %v156, 0.0
    %165 = vadd.xlane.f32.xlu0 %v164
    %v166 = vpop.xlane.xlu0 %165
    %v167 = vsel %vm126, %v157, 0.0
    %168 = vadd.xlane.f32.xlu0 %v167
    %v169 = vpop.xlane.xlu0 %168
    %v170 = vmul.f32 %v160, %v145
    %v171 = vmul.f32 %v163, %v145
    %v172 = vmul.f32 %v166, %v145
    %v173 = vmul.f32 %v169, %v145
    %v174 = vadd.f32 %v170, 1e-05
    %v175 = vadd.f32 %v171, 1e-05
    %v176 = vadd.f32 %v172, 1e-05
    %v177 = vadd.f32 %v173, 1e-05
    %v178 = vrsqrt.pop %v174
    %v179 = vmul.f32 %v178, %v174
    %v180 = vmul.f32 %v179, %v178
    %v181 = vmul.f32 0.5, %v180
    %v182 = vsub.f32 1.5, %v181
    %v183 = vmul.f32 %v178, %v182
    %vm184 = vweird.f32 %v174
    %vm185 = vweird.f32 %v178
    %vm186 = vmor %vm184, %vm185
    %v187 = vsel %vm186, %v178, %v183
    %v188 = vrsqrt.pop %v175
    %v189 = vmul.f32 %v188, %v175
    %v190 = vmul.f32 %v189, %v188
    %v191 = vmul.f32 0.5, %v190
    %v192 = vsub.f32 1.5, %v191
    %v193 = vmul.f32 %v188, %v192
    %vm194 = vweird.f32 %v175
    %vm195 = vweird.f32 %v188
    %vm196 = vmor %vm194, %vm195
    %v197 = vsel %vm196, %v188, %v193
    %v198 = vrsqrt.pop %v176
    %v199 = vmul.f32 %v198, %v176
    %v200 = vmul.f32 %v199, %v198
    %v201 = vmul.f32 0.5, %v200
    %v202 = vsub.f32 1.5, %v201
    %v203 = vmul.f32 %v198, %v202
    %vm204 = vweird.f32 %v176
    %vm205 = vweird.f32 %v198
    %vm206 = vmor %vm204, %vm205
    %v207 = vsel %vm206, %v198, %v203
    %v208 = vrsqrt.pop %v177
    %v209 = vmul.f32 %v208, %v177
    %v210 = vmul.f32 %v209, %v208
    %v211 = vmul.f32 0.5, %v210
    %v212 = vsub.f32 1.5, %v211
    %v213 = vmul.f32 %v208, %v212
    %vm214 = vweird.f32 %v177
    %vm215 = vweird.f32 %v208
    %vm216 = vmor %vm214, %vm215
    %v217 = vsel %vm216, %v208, %v213
    %v218 = vmul.f32 %v150, %v187
    %v219 = vmul.f32 %v151, %v197
    %v220 = vmul.f32 %v152, %v207
    %v221 = vmul.f32 %v153, %v217
    %v223 = vperm.slane %v124, 0
    %v225 = vmul.f32 %v218, %v223
    %v226 = vmul.f32 %v219, %v223
    %v227 = vmul.f32 %v220, %v223
    %v228 = vmul.f32 %v221, %v223
    %v230 = vperm.slane %v125, 0
    %v232 = vadd.f32 %v225, %v230
    %v233 = vadd.f32 %v226, %v230
    %v234 = vadd.f32 %v227, %v230
    %v235 = vadd.f32 %v228, %v230
    %v236 = vld [vmem:[%s3] sm:$0xff]
    %v237 = vld [vmem:[%s3 + $0x8] sm:$0xff]
    %v238 = vld [vmem:[%s3 + $0x10] sm:$0xff]
    %v239 = vld [vmem:[%s3 + $0x18] sm:$0xff]
    %v240 = vld [vmem:[%s3 + $0x20] sm:$0xff]
    %v241 = vld [vmem:[%s3 + $0x28] sm:$0xff]
    %v242 = vld [vmem:[%s3 + $0x30] sm:$0xff]
    %v243 = vld [vmem:[%s3 + $0x38] sm:$0xff]
    %v244 = vld [vmem:[#allocation7] sm:$0x3]
    %v246 = vperm.slane %v244, 0
    %v247 = vperm.slane %v244, 1
    %v251 = vsel %vm126, %v232, 0
    %v254 = vsel %vm126, %v233, 0
    %v257 = vsel %vm126, %v234, 0
    %v260 = vsel %vm126, %v235, 0
    %262 = vmatpush.msra.mxu0 0.0
    %263 = vmatpush.msra.mxu0 0.0
    %264 = vmatpush.msra.mxu0 0.0
    %265 = vmatpush.msra.mxu0 0.0
    %266 = vmatpush.msra.mxu0 0.0
    %267 = vmatpush.msra.mxu0 0.0
    %268 = vmatpush.msra.mxu0 0.0
    %269 = vmatpush.msra.mxu0 0.0
    %270 = vmatpush.msra.mxu0 0.0
    %271 = vmatpush.msra.mxu0 0.0
    %272 = vmatpush.msra.mxu0 0.0
    %273 = vmatpush.msra.mxu0 0.0
    %274 = vmatpush.msra.mxu0 %v242
    %275 = vmatpush.msra.mxu0 %v240
    %276 = vmatpush.msra.mxu0 %v238
    %277 = vmatpush.msra.mxu0 %v236
    %278 = vmatmul.f32.gmra.mxu0 %v251
    %v279 = vpop.f32.mrf.mxu0
    %v280 = vadd.f32 %v246, %v279
    %281 = vmatmul.f32.gmra.mxu0 %v254
    %v282 = vpop.f32.mrf.mxu0
    %v283 = vadd.f32 %v246, %v282
    %284 = vmatmul.f32.gmra.mxu0 %v257
    %v285 = vpop.f32.mrf.mxu0
    %v286 = vadd.f32 %v246, %v285
    %287 = vmatmul.f32.gmra.mxu0 %v260
    %v288 = vpop.f32.mrf.mxu0
    %v289 = vadd.f32 %v246, %v288
    %290 = vdwg.mxu0
    %291 = vmatpush.msra.mxu0 0.0
    %292 = vmatpush.msra.mxu0 0.0
    %293 = vmatpush.msra.mxu0 0.0
    %294 = vmatpush.msra.mxu0 0.0
    %295 = vmatpush.msra.mxu0 0.0
    %296 = vmatpush.msra.mxu0 0.0
    %297 = vmatpush.msra.mxu0 0.0
    %298 = vmatpush.msra.mxu0 0.0
    %299 = vmatpush.msra.mxu0 0.0
    %300 = vmatpush.msra.mxu0 0.0
    %301 = vmatpush.msra.mxu0 0.0
    %302 = vmatpush.msra.mxu0 0.0
    %303 = vmatpush.msra.mxu0 %v243
    %304 = vmatpush.msra.mxu0 %v241
    %305 = vmatpush.msra.mxu0 %v239
    %306 = vmatpush.msra.mxu0 %v237
    %307 = vmatmul.f32.gmra.mxu0 %v251
    %v308 = vpop.f32.mrf.mxu0
    %v309 = vadd.f32 %v247, %v308
    %310 = vmatmul.f32.gmra.mxu0 %v254
    %v311 = vpop.f32.mrf.mxu0
    %v312 = vadd.f32 %v247, %v311
    %313 = vmatmul.f32.gmra.mxu0 %v257
    %v314 = vpop.f32.mrf.mxu0
    %v315 = vadd.f32 %v247, %v314
    %316 = vmatmul.f32.gmra.mxu0 %v260
    %v317 = vpop.f32.mrf.mxu0
    %v318 = vadd.f32 %v247, %v317
    %319 = vdwg.mxu0
    %322 = vrot.lane.b32.xlu0 %v280, 96
    %v323 = vpop.permute.xlu0 %322
    %324 = vrot.lane.b32.xlu0 %v283, 96
    %v325 = vpop.permute.xlu0 %324
    %vm326 = vcmask 64512
    %v327 = vsel %vm326, %v280, 0
    %v329 = vsel %vm326, %v283, 0
    %v331 = vsel %vm326, %v323, 0
    %v333 = vsel %vm326, %v325, 0
    %335 = vmatpush.xpose.msra.mxu0 0.0
    %336 = vmatpush.xpose.msra.mxu0 0.0
    %337 = vmatpush.xpose.msra.mxu0 0.0
    %338 = vmatpush.xpose.msra.mxu0 0.0
    %339 = vmatpush.xpose.msra.mxu0 0.0
    %340 = vmatpush.xpose.msra.mxu0 0.0
    %341 = vmatpush.xpose.msra.mxu0 0.0
    %342 = vmatpush.xpose.msra.mxu0 0.0
    %343 = vmatpush.xpose.msra.mxu0 0.0
    %344 = vmatpush.xpose.msra.mxu0 0.0
    %345 = vmatpush.xpose.msra.mxu0 0.0
    %346 = vmatpush.xpose.msra.mxu0 0.0
    %347 = vmatpush.xpose.msra.mxu0 0.0
    %348 = vmatpush.xpose.msra.mxu0 0.0
    %349 = vmatpush.xpose.msra.mxu0 %v333
    %350 = vmatpush.xpose.msra.mxu0 %v331
    %351 = vmatmul.f32.gmra.mxu0 %v327
    %v352 = vpop.f32.mrf.mxu0
    %v353 = vadd.f32 0.0, %v352
    %354 = vmatmul.f32.gmra.mxu0 %v329
    %v355 = vpop.f32.mrf.mxu0
    %v356 = vadd.f32 0.0, %v355
    %357 = vdwg.mxu0
    %vm358 = vcmask 130048
    %v359 = vsel %vm358, %v353, -inf
    %360 = vmax.xlane.f32.xlu0 %v359
    %v361 = vpop.xlane.xlu0 %360
    %v362 = vsel %vm358, %v356, -inf
    %363 = vmax.xlane.f32.xlu0 %v362
    %v364 = vpop.xlane.xlu0 %363
    %v365 = vsub.f32 %v353, %v361
    %v366 = vsub.f32 %v356, %v364
    %v367 = vmul.f32 %v365, 1.442695
    %v368 = vpow.pop %v367
    %v369 = vmul.f32 %v366, 1.442695
    %v370 = vpow.pop %v369
    %v371 = vsel %vm358, %v368, 0.0
    %372 = vadd.xlane.f32.xlu0 %v371
    %v373 = vpop.xlane.xlu0 %372
    %v374 = vsel %vm358, %v370, 0.0
    %375 = vadd.xlane.f32.xlu0 %v374
    %v376 = vpop.xlane.xlu0 %375
    %v377 = vrcp.pop %v373
    %v378 = vmul.f32 %v373, %v377
    %v379 = vsub.f32 1.0, %v378
    %v380 = vmul.f32 %v377, %v379
    %v381 = vadd.f32 %v377, %v380
    %vm382 = vweird.f32 %v373
    %vm383 = vweird.f32 %v377
    %vm384 = vmor %vm382, %vm383
    %v385 = vsel %vm384, %v377, %v381
    %v386 = vand.u32 2147483647, %v373
    %vm387 = vcmp.eq.f32.partialorder %v386, 8.507059e+37
    %v388 = vand.u32 %v373, 2147483648
    %v389 = vor.u32 1.1754944e-38, %v388
    %v390 = vsel %vm387, %v389, %v385
    %v391 = vrcp.pop %v376
    %v392 = vmul.f32 %v376, %v391
    %v393 = vsub.f32 1.0, %v392
    %v394 = vmul.f32 %v391, %v393
    %v395 = vadd.f32 %v391, %v394
    %vm396 = vweird.f32 %v376
    %vm397 = vweird.f32 %v391
    %vm398 = vmor %vm396, %vm397
    %v399 = vsel %vm398, %v391, %v395
    %v400 = vand.u32 2147483647, %v376
    %vm401 = vcmp.eq.f32.partialorder %v400, 8.507059e+37
    %v402 = vand.u32 %v376, 2147483648
    %v403 = vor.u32 1.1754944e-38, %v402
    %v404 = vsel %vm401, %v403, %v399
    %v405 = vmul.f32 %v368, %v390
    %v406 = vmul.f32 %v370, %v404
    %407 = vrot.lane.b32.xlu0 %v280, 120
    %v408 = vpop.permute.xlu0 %407
    %409 = vrot.lane.b32.xlu0 %v283, 120
    %v410 = vpop.permute.xlu0 %409
    %411 = vrot.lane.b32.xlu0 %v280, 88
    %v412 = vpop.permute.xlu0 %411
    %413 = vrot.lane.b32.xlu0 %v283, 88
    %v414 = vpop.permute.xlu0 %413
    %v415 = vsel %vm326, %v408, 0
    %v417 = vsel %vm326, %v410, 0
    %v419 = vsel %vm326, %v412, 0
    %v421 = vsel %vm326, %v414, 0
    %423 = vmatpush.xpose.msra.mxu0 0.0
    %424 = vmatpush.xpose.msra.mxu0 0.0
    %425 = vmatpush.xpose.msra.mxu0 0.0
    %426 = vmatpush.xpose.msra.mxu0 0.0
    %427 = vmatpush.xpose.msra.mxu0 0.0
    %428 = vmatpush.xpose.msra.mxu0 0.0
    %429 = vmatpush.xpose.msra.mxu0 0.0
    %430 = vmatpush.xpose.msra.mxu0 0.0
    %431 = vmatpush.xpose.msra.mxu0 0.0
    %432 = vmatpush.xpose.msra.mxu0 0.0
    %433 = vmatpush.xpose.msra.mxu0 0.0
    %434 = vmatpush.xpose.msra.mxu0 0.0
    %435 = vmatpush.xpose.msra.mxu0 0.0
    %436 = vmatpush.xpose.msra.mxu0 0.0
    %437 = vmatpush.xpose.msra.mxu0 %v421
    %438 = vmatpush.xpose.msra.mxu0 %v419
    %439 = vmatmul.f32.gmra.mxu0 %v415
    %v440 = vpop.f32.mrf.mxu0
    %v441 = vadd.f32 0.0, %v440
    %442 = vmatmul.f32.gmra.mxu0 %v417
    %v443 = vpop.f32.mrf.mxu0
    %v444 = vadd.f32 0.0, %v443
    %445 = vdwg.mxu0
    %v446 = vsel %vm358, %v441, -inf
    %447 = vmax.xlane.f32.xlu0 %v446
    %v448 = vpop.xlane.xlu0 %447
    %v449 = vsel %vm358, %v444, -inf
    %450 = vmax.xlane.f32.xlu0 %v449
    %v451 = vpop.xlane.xlu0 %450
    %v452 = vsub.f32 %v441, %v448
    %v453 = vsub.f32 %v444, %v451
    %v454 = vmul.f32 %v452, 1.442695
    %v455 = vpow.pop %v454
    %v456 = vmul.f32 %v453, 1.442695
    %v457 = vpow.pop %v456
    %v458 = vsel %vm358, %v455, 0.0
    %459 = vadd.xlane.f32.xlu0 %v458
    %v460 = vpop.xlane.xlu0 %459
    %v461 = vsel %vm358, %v457, 0.0
    %462 = vadd.xlane.f32.xlu0 %v461
    %v463 = vpop.xlane.xlu0 %462
    %v464 = vrcp.pop %v460
    %v465 = vmul.f32 %v460, %v464
    %v466 = vsub.f32 1.0, %v465
    %v467 = vmul.f32 %v464, %v466
    %v468 = vadd.f32 %v464, %v467
    %vm469 = vweird.f32 %v460
    %vm470 = vweird.f32 %v464
    %vm471 = vmor %vm469, %vm470
    %v472 = vsel %vm471, %v464, %v468
    %v473 = vand.u32 2147483647, %v460
    %vm474 = vcmp.eq.f32.partialorder %v473, 8.507059e+37
    %v475 = vand.u32 %v460, 2147483648
    %v476 = vor.u32 1.1754944e-38, %v475
    %v477 = vsel %vm474, %v476, %v472
    %v478 = vrcp.pop %v463
    %v479 = vmul.f32 %v463, %v478
    %v480 = vsub.f32 1.0, %v479
    %v481 = vmul.f32 %v478, %v480
    %v482 = vadd.f32 %v478, %v481
    %vm483 = vweird.f32 %v463
    %vm484 = vweird.f32 %v478
    %vm485 = vmor %vm483, %vm484
    %v486 = vsel %vm485, %v478, %v482
    %v487 = vand.u32 2147483647, %v463
    %vm488 = vcmp.eq.f32.partialorder %v487, 8.507059e+37
    %v489 = vand.u32 %v463, 2147483648
    %v490 = vor.u32 1.1754944e-38, %v489
    %v491 = vsel %vm488, %v490, %v486
    %v492 = vmul.f32 %v455, %v477
    %v493 = vmul.f32 %v457, %v491
    %494 = vrot.lane.b32.xlu0 %v280, 32
    %v495 = vpop.permute.xlu0 %494
    %496 = vrot.lane.b32.xlu0 %v283, 32
    %v497 = vpop.permute.xlu0 %496
    %v501 = vsel %vm358, %v492, 0
    %v504 = vsel %vm358, %v493, 0
    %506 = vmatpush.msra.mxu0 0.0
    %507 = vmatpush.msra.mxu0 0.0
    %508 = vmatpush.msra.mxu0 0.0
    %509 = vmatpush.msra.mxu0 0.0
    %510 = vmatpush.msra.mxu0 0.0
    %511 = vmatpush.msra.mxu0 0.0
    %512 = vmatpush.msra.mxu0 0.0
    %513 = vmatpush.msra.mxu0 0.0
    %514 = vmatpush.msra.mxu0 0.0
    %515 = vmatpush.msra.mxu0 0.0
    %516 = vmatpush.msra.mxu0 0.0
    %517 = vmatpush.msra.mxu0 0.0
    %518 = vmatpush.msra.mxu0 0.0
    %519 = vmatpush.msra.mxu0 0.0
    %520 = vmatpush.msra.mxu0 %v497
    %521 = vmatpush.msra.mxu0 %v495
    %522 = vmatmul.f32.gmra.mxu0 %v501
    %v523 = vpop.f32.mrf.mxu0
    %v524 = vadd.f32 0.0, %v523
    %525 = vmatmul.f32.gmra.mxu0 %v504
    %v526 = vpop.f32.mrf.mxu0
    %v527 = vadd.f32 0.0, %v526
    %528 = vdwg.mxu0
    %529 = vrot.lane.b32.xlu0 %v280, 64
    %v530 = vpop.permute.xlu0 %529
    %531 = vrot.lane.b32.xlu0 %v283, 64
    %v532 = vpop.permute.xlu0 %531
    %v536 = vsel %vm358, %v405, 0
    %v539 = vsel %vm358, %v406, 0
    %541 = vmatpush.msra.mxu0 0.0
    %542 = vmatpush.msra.mxu0 0.0
    %543 = vmatpush.msra.mxu0 0.0
    %544 = vmatpush.msra.mxu0 0.0
    %545 = vmatpush.msra.mxu0 0.0
    %546 = vmatpush.msra.mxu0 0.0
    %547 = vmatpush.msra.mxu0 0.0
    %548 = vmatpush.msra.mxu0 0.0
    %549 = vmatpush.msra.mxu0 0.0
    %550 = vmatpush.msra.mxu0 0.0
    %551 = vmatpush.msra.mxu0 0.0
    %552 = vmatpush.msra.mxu0 0.0
    %553 = vmatpush.msra.mxu0 0.0
    %554 = vmatpush.msra.mxu0 0.0
    %555 = vmatpush.msra.mxu0 %v532
    %556 = vmatpush.msra.mxu0 %v530
    %557 = vmatmul.f32.gmra.mxu0 %v536
    %v558 = vpop.f32.mrf.mxu0
    %v559 = vadd.f32 %v524, %v558
    %560 = vmatmul.f32.gmra.mxu0 %v539
    %v561 = vpop.f32.mrf.mxu0
    %v562 = vadd.f32 %v527, %v561
    %563 = vdwg.mxu0
    %564 = vrot.lane.b32.xlu0 %v280, 112
    %v565 = vpop.permute.xlu0 %564
    %566 = vrot.lane.b32.xlu0 %v283, 112
    %v567 = vpop.permute.xlu0 %566
    %568 = vrot.lane.b32.xlu0 %v280, 80
    %v569 = vpop.permute.xlu0 %568
    %570 = vrot.lane.b32.xlu0 %v283, 80
    %v571 = vpop.permute.xlu0 %570
    %v572 = vsel %vm326, %v565, 0
    %v574 = vsel %vm326, %v567, 0
    %v576 = vsel %vm326, %v569, 0
    %v578 = vsel %vm326, %v571, 0
    %580 = vmatpush.xpose.msra.mxu0 0.0
    %581 = vmatpush.xpose.msra.mxu0 0.0
    %582 = vmatpush.xpose.msra.mxu0 0.0
    %583 = vmatpush.xpose.msra.mxu0 0.0
    %584 = vmatpush.xpose.msra.mxu0 0.0
    %585 = vmatpush.xpose.msra.mxu0 0.0
    %586 = vmatpush.xpose.msra.mxu0 0.0
    %587 = vmatpush.xpose.msra.mxu0 0.0
    %588 = vmatpush.xpose.msra.mxu0 0.0
    %589 = vmatpush.xpose.msra.mxu0 0.0
    %590 = vmatpush.xpose.msra.mxu0 0.0
    %591 = vmatpush.xpose.msra.mxu0 0.0
    %592 = vmatpush.xpose.msra.mxu0 0.0
    %593 = vmatpush.xpose.msra.mxu0 0.0
    %594 = vmatpush.xpose.msra.mxu0 %v578
    %595 = vmatpush.xpose.msra.mxu0 %v576
    %596 = vmatmul.f32.gmra.mxu0 %v572
    %v597 = vpop.f32.mrf.mxu0
    %v598 = vadd.f32 0.0, %v597
    %599 = vmatmul.f32.gmra.mxu0 %v574
    %v600 = vpop.f32.mrf.mxu0
    %v601 = vadd.f32 0.0, %v600
    %602 = vdwg.mxu0
    %v603 = vsel %vm358, %v598, -inf
    %604 = vmax.xlane.f32.xlu0 %v603
    %v605 = vpop.xlane.xlu0 %604
    %v606 = vsel %vm358, %v601, -inf
    %607 = vmax.xlane.f32.xlu0 %v606
    %v608 = vpop.xlane.xlu0 %607
    %v609 = vsub.f32 %v598, %v605
    %v610 = vsub.f32 %v601, %v608
    %v611 = vmul.f32 %v609, 1.442695
    %v612 = vpow.pop %v611
    %v613 = vmul.f32 %v610, 1.442695
    %v614 = vpow.pop %v613
    %v615 = vsel %vm358, %v612, 0.0
    %616 = vadd.xlane.f32.xlu0 %v615
    %v617 = vpop.xlane.xlu0 %616
    %v618 = vsel %vm358, %v614, 0.0
    %619 = vadd.xlane.f32.xlu0 %v618
    %v620 = vpop.xlane.xlu0 %619
    %v621 = vrcp.pop %v617
    %v622 = vmul.f32 %v617, %v621
    %v623 = vsub.f32 1.0, %v622
    %v624 = vmul.f32 %v621, %v623
    %v625 = vadd.f32 %v621, %v624
    %vm626 = vweird.f32 %v617
    %vm627 = vweird.f32 %v621
    %vm628 = vmor %vm626, %vm627
    %v629 = vsel %vm628, %v621, %v625
    %v630 = vand.u32 2147483647, %v617
    %vm631 = vcmp.eq.f32.partialorder %v630, 8.507059e+37
    %v632 = vand.u32 %v617, 2147483648
    %v633 = vor.u32 1.1754944e-38, %v632
    %v634 = vsel %vm631, %v633, %v629
    %v635 = vrcp.pop %v620
    %v636 = vmul.f32 %v620, %v635
    %v637 = vsub.f32 1.0, %v636
    %v638 = vmul.f32 %v635, %v637
    %v639 = vadd.f32 %v635, %v638
    %vm640 = vweird.f32 %v620
    %vm641 = vweird.f32 %v635
    %vm642 = vmor %vm640, %vm641
    %v643 = vsel %vm642, %v635, %v639
    %v644 = vand.u32 2147483647, %v620
    %vm645 = vcmp.eq.f32.partialorder %v644, 8.507059e+37
    %v646 = vand.u32 %v620, 2147483648
    %v647 = vor.u32 1.1754944e-38, %v646
    %v648 = vsel %vm645, %v647, %v643
    %v649 = vmul.f32 %v612, %v634
    %v650 = vmul.f32 %v614, %v648
    %v652 = vsel %vm358, %v649, 0
    %v655 = vsel %vm358, %v650, 0
    %657 = vmatpush.msra.mxu0 0.0
    %658 = vmatpush.msra.mxu0 0.0
    %659 = vmatpush.msra.mxu0 0.0
    %660 = vmatpush.msra.mxu0 0.0
    %661 = vmatpush.msra.mxu0 0.0
    %662 = vmatpush.msra.mxu0 0.0
    %663 = vmatpush.msra.mxu0 0.0
    %664 = vmatpush.msra.mxu0 0.0
    %665 = vmatpush.msra.mxu0 0.0
    %666 = vmatpush.msra.mxu0 0.0
    %667 = vmatpush.msra.mxu0 0.0
    %668 = vmatpush.msra.mxu0 0.0
    %669 = vmatpush.msra.mxu0 0.0
    %670 = vmatpush.msra.mxu0 0.0
    %671 = vmatpush.msra.mxu0 %v312
    %672 = vmatpush.msra.mxu0 %v309
    %673 = vmatmul.f32.gmra.mxu0 %v652
    %v674 = vpop.f32.mrf.mxu0
    %v675 = vadd.f32 0.0, %v674
    %676 = vmatmul.f32.gmra.mxu0 %v655
    %v677 = vpop.f32.mrf.mxu0
    %v678 = vadd.f32 0.0, %v677
    %679 = vdwg.mxu0
    %v680 = vadd.f32 %v559, %v675
    %v681 = vadd.f32 %v562, %v678
    %682 = vrot.lane.b32.xlu0 %v280, 104
    %v683 = vpop.permute.xlu0 %682
    %684 = vrot.lane.b32.xlu0 %v283, 104
    %v685 = vpop.permute.xlu0 %684
    %686 = vrot.lane.b32.xlu0 %v280, 72
    %v687 = vpop.permute.xlu0 %686
    %688 = vrot.lane.b32.xlu0 %v283, 72
    %v689 = vpop.permute.xlu0 %688
    %v690 = vsel %vm326, %v683, 0
    %v692 = vsel %vm326, %v685, 0
    %v694 = vsel %vm326, %v687, 0
    %v696 = vsel %vm326, %v689, 0
    %698 = vmatpush.xpose.msra.mxu0 0.0
    %699 = vmatpush.xpose.msra.mxu0 0.0
    %700 = vmatpush.xpose.msra.mxu0 0.0
    %701 = vmatpush.xpose.msra.mxu0 0.0
    %702 = vmatpush.xpose.msra.mxu0 0.0
    %703 = vmatpush.xpose.msra.mxu0 0.0
    %704 = vmatpush.xpose.msra.mxu0 0.0
    %705 = vmatpush.xpose.msra.mxu0 0.0
    %706 = vmatpush.xpose.msra.mxu0 0.0
    %707 = vmatpush.xpose.msra.mxu0 0.0
    %708 = vmatpush.xpose.msra.mxu0 0.0
    %709 = vmatpush.xpose.msra.mxu0 0.0
    %710 = vmatpush.xpose.msra.mxu0 0.0
    %711 = vmatpush.xpose.msra.mxu0 0.0
    %712 = vmatpush.xpose.msra.mxu0 %v696
    %713 = vmatpush.xpose.msra.mxu0 %v694
    %714 = vmatmul.f32.gmra.mxu0 %v690
    %v715 = vpop.f32.mrf.mxu0
    %v716 = vadd.f32 0.0, %v715
    %717 = vmatmul.f32.gmra.mxu0 %v692
    %v718 = vpop.f32.mrf.mxu0
    %v719 = vadd.f32 0.0, %v718
    %720 = vdwg.mxu0
    %v721 = vsel %vm358, %v716, -inf
    %722 = vmax.xlane.f32.xlu0 %v721
    %v723 = vpop.xlane.xlu0 %722
    %v724 = vsel %vm358, %v719, -inf
    %725 = vmax.xlane.f32.xlu0 %v724
    %v726 = vpop.xlane.xlu0 %725
    %v727 = vsub.f32 %v716, %v723
    %v728 = vsub.f32 %v719, %v726
    %v729 = vmul.f32 %v727, 1.442695
    %v730 = vpow.pop %v729
    %v731 = vmul.f32 %v728, 1.442695
    %v732 = vpow.pop %v731
    %v733 = vsel %vm358, %v730, 0.0
    %734 = vadd.xlane.f32.xlu0 %v733
    %v735 = vpop.xlane.xlu0 %734
    %v736 = vsel %vm358, %v732, 0.0
    %737 = vadd.xlane.f32.xlu0 %v736
    %v738 = vpop.xlane.xlu0 %737
    %v739 = vrcp.pop %v735
    %v740 = vmul.f32 %v735, %v739
    %v741 = vsub.f32 1.0, %v740
    %v742 = vmul.f32 %v739, %v741
    %v743 = vadd.f32 %v739, %v742
    %vm744 = vweird.f32 %v735
    %vm745 = vweird.f32 %v739
    %vm746 = vmor %vm744, %vm745
    %v747 = vsel %vm746, %v739, %v743
    %v748 = vand.u32 2147483647, %v735
    %vm749 = vcmp.eq.f32.partialorder %v748, 8.507059e+37
    %v750 = vand.u32 %v735, 2147483648
    %v751 = vor.u32 1.1754944e-38, %v750
    %v752 = vsel %vm749, %v751, %v747
    %v753 = vrcp.pop %v738
    %v754 = vmul.f32 %v738, %v753
    %v755 = vsub.f32 1.0, %v754
    %v756 = vmul.f32 %v753, %v755
    %v757 = vadd.f32 %v753, %v756
    %vm758 = vweird.f32 %v738
    %vm759 = vweird.f32 %v753
    %vm760 = vmor %vm758, %vm759
    %v761 = vsel %vm760, %v753, %v757
    %v762 = vand.u32 2147483647, %v738
    %vm763 = vcmp.eq.f32.partialorder %v762, 8.507059e+37
    %v764 = vand.u32 %v738, 2147483648
    %v765 = vor.u32 1.1754944e-38, %v764
    %v766 = vsel %vm763, %v765, %v761
    %v767 = vmul.f32 %v730, %v752
    %v768 = vmul.f32 %v732, %v766
    %771 = vrot.lane.b32.xlu0 %v309, 96
    %v772 = vpop.permute.xlu0 %771
    %773 = vrot.lane.b32.xlu0 %v312, 96
    %v774 = vpop.permute.xlu0 %773
    %v778 = vsel %vm358, %v767, 0
    %v781 = vsel %vm358, %v768, 0
    %783 = vmatpush.msra.mxu0 0.0
    %784 = vmatpush.msra.mxu0 0.0
    %785 = vmatpush.msra.mxu0 0.0
    %786 = vmatpush.msra.mxu0 0.0
    %787 = vmatpush.msra.mxu0 0.0
    %788 = vmatpush.msra.mxu0 0.0
    %789 = vmatpush.msra.mxu0 0.0
    %790 = vmatpush.msra.mxu0 0.0
    %791 = vmatpush.msra.mxu0 0.0
    %792 = vmatpush.msra.mxu0 0.0
    %793 = vmatpush.msra.mxu0 0.0
    %794 = vmatpush.msra.mxu0 0.0
    %795 = vmatpush.msra.mxu0 0.0
    %796 = vmatpush.msra.mxu0 0.0
    %797 = vmatpush.msra.mxu0 %v774
    %798 = vmatpush.msra.mxu0 %v772
    %799 = vmatmul.f32.gmra.mxu0 %v778
    %v800 = vpop.f32.mrf.mxu0
    %v801 = vadd.f32 0.0, %v800
    %802 = vmatmul.f32.gmra.mxu0 %v781
    %v803 = vpop.f32.mrf.mxu0
    %v804 = vadd.f32 0.0, %v803
    %805 = vdwg.mxu0
    %v806 = vadd.f32 %v680, %v801
    %v807 = vadd.f32 %v681, %v804
    %810 = vrot.lane.b32.xlu0 %v286, 96
    %v811 = vpop.permute.xlu0 %810
    %812 = vrot.lane.b32.xlu0 %v289, 96
    %v813 = vpop.permute.xlu0 %812
    %v814 = vsel %vm326, %v286, 0
    %v816 = vsel %vm326, %v289, 0
    %v818 = vsel %vm326, %v811, 0
    %v820 = vsel %vm326, %v813, 0
    %822 = vmatpush.xpose.msra.mxu0 0.0
    %823 = vmatpush.xpose.msra.mxu0 0.0
    %824 = vmatpush.xpose.msra.mxu0 0.0
    %825 = vmatpush.xpose.msra.mxu0 0.0
    %826 = vmatpush.xpose.msra.mxu0 0.0
    %827 = vmatpush.xpose.msra.mxu0 0.0
    %828 = vmatpush.xpose.msra.mxu0 0.0
    %829 = vmatpush.xpose.msra.mxu0 0.0
    %830 = vmatpush.xpose.msra.mxu0 0.0
    %831 = vmatpush.xpose.msra.mxu0 0.0
    %832 = vmatpush.xpose.msra.mxu0 0.0
    %833 = vmatpush.xpose.msra.mxu0 0.0
    %834 = vmatpush.xpose.msra.mxu0 0.0
    %835 = vmatpush.xpose.msra.mxu0 0.0
    %836 = vmatpush.xpose.msra.mxu0 %v820
    %837 = vmatpush.xpose.msra.mxu0 %v818
    %838 = vmatmul.f32.gmra.mxu0 %v814
    %v839 = vpop.f32.mrf.mxu0
    %v840 = vadd.f32 0.0, %v839
    %841 = vmatmul.f32.gmra.mxu0 %v816
    %v842 = vpop.f32.mrf.mxu0
    %v843 = vadd.f32 0.0, %v842
    %844 = vdwg.mxu0
    %v845 = vsel %vm358, %v840, -inf
    %846 = vmax.xlane.f32.xlu0 %v845
    %v847 = vpop.xlane.xlu0 %846
    %v848 = vsel %vm358, %v843, -inf
    %849 = vmax.xlane.f32.xlu0 %v848
    %v850 = vpop.xlane.xlu0 %849
    %v851 = vsub.f32 %v840, %v847
    %v852 = vsub.f32 %v843, %v850
    %v853 = vmul.f32 %v851, 1.442695
    %v854 = vpow.pop %v853
    %v855 = vmul.f32 %v852, 1.442695
    %v856 = vpow.pop %v855
    %v857 = vsel %vm358, %v854, 0.0
    %858 = vadd.xlane.f32.xlu0 %v857
    %v859 = vpop.xlane.xlu0 %858
    %v860 = vsel %vm358, %v856, 0.0
    %861 = vadd.xlane.f32.xlu0 %v860
    %v862 = vpop.xlane.xlu0 %861
    %v863 = vrcp.pop %v859
    %v864 = vmul.f32 %v859, %v863
    %v865 = vsub.f32 1.0, %v864
    %v866 = vmul.f32 %v863, %v865
    %v867 = vadd.f32 %v863, %v866
    %vm868 = vweird.f32 %v859
    %vm869 = vweird.f32 %v863
    %vm870 = vmor %vm868, %vm869
    %v871 = vsel %vm870, %v863, %v867
    %v872 = vand.u32 2147483647, %v859
    %vm873 = vcmp.eq.f32.partialorder %v872, 8.507059e+37
    %v874 = vand.u32 %v859, 2147483648
    %v875 = vor.u32 1.1754944e-38, %v874
    %v876 = vsel %vm873, %v875, %v871
    %v877 = vrcp.pop %v862
    %v878 = vmul.f32 %v862, %v877
    %v879 = vsub.f32 1.0, %v878
    %v880 = vmul.f32 %v877, %v879
    %v881 = vadd.f32 %v877, %v880
    %vm882 = vweird.f32 %v862
    %vm883 = vweird.f32 %v877
    %vm884 = vmor %vm882, %vm883
    %v885 = vsel %vm884, %v877, %v881
    %v886 = vand.u32 2147483647, %v862
    %vm887 = vcmp.eq.f32.partialorder %v886, 8.507059e+37
    %v888 = vand.u32 %v862, 2147483648
    %v889 = vor.u32 1.1754944e-38, %v888
    %v890 = vsel %vm887, %v889, %v885
    %v891 = vmul.f32 %v854, %v876
    %v892 = vmul.f32 %v856, %v890
    %893 = vrot.lane.b32.xlu0 %v286, 120
    %v894 = vpop.permute.xlu0 %893
    %895 = vrot.lane.b32.xlu0 %v289, 120
    %v896 = vpop.permute.xlu0 %895
    %897 = vrot.lane.b32.xlu0 %v286, 88
    %v898 = vpop.permute.xlu0 %897
    %899 = vrot.lane.b32.xlu0 %v289, 88
    %v900 = vpop.permute.xlu0 %899
    %v901 = vsel %vm326, %v894, 0
    %v903 = vsel %vm326, %v896, 0
    %v905 = vsel %vm326, %v898, 0
    %v907 = vsel %vm326, %v900, 0
    %909 = vmatpush.xpose.msra.mxu0 0.0
    %910 = vmatpush.xpose.msra.mxu0 0.0
    %911 = vmatpush.xpose.msra.mxu0 0.0
    %912 = vmatpush.xpose.msra.mxu0 0.0
    %913 = vmatpush.xpose.msra.mxu0 0.0
    %914 = vmatpush.xpose.msra.mxu0 0.0
    %915 = vmatpush.xpose.msra.mxu0 0.0
    %916 = vmatpush.xpose.msra.mxu0 0.0
    %917 = vmatpush.xpose.msra.mxu0 0.0
    %918 = vmatpush.xpose.msra.mxu0 0.0
    %919 = vmatpush.xpose.msra.mxu0 0.0
    %920 = vmatpush.xpose.msra.mxu0 0.0
    %921 = vmatpush.xpose.msra.mxu0 0.0
    %922 = vmatpush.xpose.msra.mxu0 0.0
    %923 = vmatpush.xpose.msra.mxu0 %v907
    %924 = vmatpush.xpose.msra.mxu0 %v905
    %925 = vmatmul.f32.gmra.mxu0 %v901
    %v926 = vpop.f32.mrf.mxu0
    %v927 = vadd.f32 0.0, %v926
    %928 = vmatmul.f32.gmra.mxu0 %v903
    %v929 = vpop.f32.mrf.mxu0
    %v930 = vadd.f32 0.0, %v929
    %931 = vdwg.mxu0
    %v932 = vsel %vm358, %v927, -inf
    %933 = vmax.xlane.f32.xlu0 %v932
    %v934 = vpop.xlane.xlu0 %933
    %v935 = vsel %vm358, %v930, -inf
    %936 = vmax.xlane.f32.xlu0 %v935
    %v937 = vpop.xlane.xlu0 %936
    %v938 = vsub.f32 %v927, %v934
    %v939 = vsub.f32 %v930, %v937
    %v940 = vmul.f32 %v938, 1.442695
    %v941 = vpow.pop %v940
    %v942 = vmul.f32 %v939, 1.442695
    %v943 = vpow.pop %v942
    %v944 = vsel %vm358, %v941, 0.0
    %945 = vadd.xlane.f32.xlu0 %v944
    %v946 = vpop.xlane.xlu0 %945
    %v947 = vsel %vm358, %v943, 0.0
    %948 = vadd.xlane.f32.xlu0 %v947
    %v949 = vpop.xlane.xlu0 %948
    %v950 = vrcp.pop %v946
    %v951 = vmul.f32 %v946, %v950
    %v952 = vsub.f32 1.0, %v951
    %v953 = vmul.f32 %v950, %v952
    %v954 = vadd.f32 %v950, %v953
    %vm955 = vweird.f32 %v946
    %vm956 = vweird.f32 %v950
    %vm957 = vmor %vm955, %vm956
    %v958 = vsel %vm957, %v950, %v954
    %v959 = vand.u32 2147483647, %v946
    %vm960 = vcmp.eq.f32.partialorder %v959, 8.507059e+37
    %v961 = vand.u32 %v946, 2147483648
    %v962 = vor.u32 1.1754944e-38, %v961
    %v963 = vsel %vm960, %v962, %v958
    %v964 = vrcp.pop %v949
    %v965 = vmul.f32 %v949, %v964
    %v966 = vsub.f32 1.0, %v965
    %v967 = vmul.f32 %v964, %v966
    %v968 = vadd.f32 %v964, %v967
    %vm969 = vweird.f32 %v949
    %vm970 = vweird.f32 %v964
    %vm971 = vmor %vm969, %vm970
    %v972 = vsel %vm971, %v964, %v968
    %v973 = vand.u32 2147483647, %v949
    %vm974 = vcmp.eq.f32.partialorder %v973, 8.507059e+37
    %v975 = vand.u32 %v949, 2147483648
    %v976 = vor.u32 1.1754944e-38, %v975
    %v977 = vsel %vm974, %v976, %v972
    %v978 = vmul.f32 %v941, %v963
    %v979 = vmul.f32 %v943, %v977
    %980 = vrot.lane.b32.xlu0 %v286, 32
    %v981 = vpop.permute.xlu0 %980
    %982 = vrot.lane.b32.xlu0 %v289, 32
    %v983 = vpop.permute.xlu0 %982
    %v987 = vsel %vm358, %v978, 0
    %v990 = vsel %vm358, %v979, 0
    %992 = vmatpush.msra.mxu0 0.0
    %993 = vmatpush.msra.mxu0 0.0
    %994 = vmatpush.msra.mxu0 0.0
    %995 = vmatpush.msra.mxu0 0.0
    %996 = vmatpush.msra.mxu0 0.0
    %997 = vmatpush.msra.mxu0 0.0
    %998 = vmatpush.msra.mxu0 0.0
    %999 = vmatpush.msra.mxu0 0.0
    %1000 = vmatpush.msra.mxu0 0.0
    %1001 = vmatpush.msra.mxu0 0.0
    %1002 = vmatpush.msra.mxu0 0.0
    %1003 = vmatpush.msra.mxu0 0.0
    %1004 = vmatpush.msra.mxu0 0.0
    %1005 = vmatpush.msra.mxu0 0.0
    %1006 = vmatpush.msra.mxu0 %v983
    %1007 = vmatpush.msra.mxu0 %v981
    %1008 = vmatmul.f32.gmra.mxu0 %v987
    %v1009 = vpop.f32.mrf.mxu0
    %v1010 = vadd.f32 0.0, %v1009
    %1011 = vmatmul.f32.gmra.mxu0 %v990
    %v1012 = vpop.f32.mrf.mxu0
    %v1013 = vadd.f32 0.0, %v1012
    %1014 = vdwg.mxu0
    %1015 = vrot.lane.b32.xlu0 %v286, 64
    %v1016 = vpop.permute.xlu0 %1015
    %1017 = vrot.lane.b32.xlu0 %v289, 64
    %v1018 = vpop.permute.xlu0 %1017
    %v1022 = vsel %vm358, %v891, 0
    %v1025 = vsel %vm358, %v892, 0
    %1027 = vmatpush.msra.mxu0 0.0
    %1028 = vmatpush.msra.mxu0 0.0
    %1029 = vmatpush.msra.mxu0 0.0
    %1030 = vmatpush.msra.mxu0 0.0
    %1031 = vmatpush.msra.mxu0 0.0
    %1032 = vmatpush.msra.mxu0 0.0
    %1033 = vmatpush.msra.mxu0 0.0
    %1034 = vmatpush.msra.mxu0 0.0
    %1035 = vmatpush.msra.mxu0 0.0
    %1036 = vmatpush.msra.mxu0 0.0
    %1037 = vmatpush.msra.mxu0 0.0
    %1038 = vmatpush.msra.mxu0 0.0
    %1039 = vmatpush.msra.mxu0 0.0
    %1040 = vmatpush.msra.mxu0 0.0
    %1041 = vmatpush.msra.mxu0 %v1018
    %1042 = vmatpush.msra.mxu0 %v1016
    %1043 = vmatmul.f32.gmra.mxu0 %v1022
    %v1044 = vpop.f32.mrf.mxu0
    %v1045 = vadd.f32 %v1010, %v1044
    %1046 = vmatmul.f32.gmra.mxu0 %v1025
    %v1047 = vpop.f32.mrf.mxu0
    %v1048 = vadd.f32 %v1013, %v1047
    %1049 = vdwg.mxu0
    %1050 = vrot.lane.b32.xlu0 %v286, 112
    %v1051 = vpop.permute.xlu0 %1050
    %1052 = vrot.lane.b32.xlu0 %v289, 112
    %v1053 = vpop.permute.xlu0 %1052
    %1054 = vrot.lane.b32.xlu0 %v286, 80
    %v1055 = vpop.permute.xlu0 %1054
    %1056 = vrot.lane.b32.xlu0 %v289, 80
    %v1057 = vpop.permute.xlu0 %1056
    %v1058 = vsel %vm326, %v1051, 0
    %v1060 = vsel %vm326, %v1053, 0
    %v1062 = vsel %vm326, %v1055, 0
    %v1064 = vsel %vm326, %v1057, 0
    %1066 = vmatpush.xpose.msra.mxu0 0.0
    %1067 = vmatpush.xpose.msra.mxu0 0.0
    %1068 = vmatpush.xpose.msra.mxu0 0.0
    %1069 = vmatpush.xpose.msra.mxu0 0.0
    %1070 = vmatpush.xpose.msra.mxu0 0.0
    %1071 = vmatpush.xpose.msra.mxu0 0.0
    %1072 = vmatpush.xpose.msra.mxu0 0.0
    %1073 = vmatpush.xpose.msra.mxu0 0.0
    %1074 = vmatpush.xpose.msra.mxu0 0.0
    %1075 = vmatpush.xpose.msra.mxu0 0.0
    %1076 = vmatpush.xpose.msra.mxu0 0.0
    %1077 = vmatpush.xpose.msra.mxu0 0.0
    %1078 = vmatpush.xpose.msra.mxu0 0.0
    %1079 = vmatpush.xpose.msra.mxu0 0.0
    %1080 = vmatpush.xpose.msra.mxu0 %v1064
    %1081 = vmatpush.xpose.msra.mxu0 %v1062
    %1082 = vmatmul.f32.gmra.mxu0 %v1058
    %v1083 = vpop.f32.mrf.mxu0
    %v1084 = vadd.f32 0.0, %v1083
    %1085 = vmatmul.f32.gmra.mxu0 %v1060
    %v1086 = vpop.f32.mrf.mxu0
    %v1087 = vadd.f32 0.0, %v1086
    %1088 = vdwg.mxu0
    %v1089 = vsel %vm358, %v1084, -inf
    %1090 = vmax.xlane.f32.xlu0 %v1089
    %v1091 = vpop.xlane.xlu0 %1090
    %v1092 = vsel %vm358, %v1087, -inf
    %1093 = vmax.xlane.f32.xlu0 %v1092
    %v1094 = vpop.xlane.xlu0 %1093
    %v1095 = vsub.f32 %v1084, %v1091
    %v1096 = vsub.f32 %v1087, %v1094
    %v1097 = vmul.f32 %v1095, 1.442695
    %v1098 = vpow.pop %v1097
    %v1099 = vmul.f32 %v1096, 1.442695
    %v1100 = vpow.pop %v1099
    %v1101 = vsel %vm358, %v1098, 0.0
    %1102 = vadd.xlane.f32.xlu0 %v1101
    %v1103 = vpop.xlane.xlu0 %1102
    %v1104 = vsel %vm358, %v1100, 0.0
    %1105 = vadd.xlane.f32.xlu0 %v1104
    %v1106 = vpop.xlane.xlu0 %1105
    %v1107 = vrcp.pop %v1103
    %v1108 = vmul.f32 %v1103, %v1107
    %v1109 = vsub.f32 1.0, %v1108
    %v1110 = vmul.f32 %v1107, %v1109
    %v1111 = vadd.f32 %v1107, %v1110
    %vm1112 = vweird.f32 %v1103
    %vm1113 = vweird.f32 %v1107
    %vm1114 = vmor %vm1112, %vm1113
    %v1115 = vsel %vm1114, %v1107, %v1111
    %v1116 = vand.u32 2147483647, %v1103
    %vm1117 = vcmp.eq.f32.partialorder %v1116, 8.507059e+37
    %v1118 = vand.u32 %v1103, 2147483648
    %v1119 = vor.u32 1.1754944e-38, %v1118
    %v1120 = vsel %vm1117, %v1119, %v1115
    %v1121 = vrcp.pop %v1106
    %v1122 = vmul.f32 %v1106, %v1121
    %v1123 = vsub.f32 1.0, %v1122
    %v1124 = vmul.f32 %v1121, %v1123
    %v1125 = vadd.f32 %v1121, %v1124
    %vm1126 = vweird.f32 %v1106
    %vm1127 = vweird.f32 %v1121
    %vm1128 = vmor %vm1126, %vm1127
    %v1129 = vsel %vm1128, %v1121, %v1125
    %v1130 = vand.u32 2147483647, %v1106
    %vm1131 = vcmp.eq.f32.partialorder %v1130, 8.507059e+37
    %v1132 = vand.u32 %v1106, 2147483648
    %v1133 = vor.u32 1.1754944e-38, %v1132
    %v1134 = vsel %vm1131, %v1133, %v1129
    %v1135 = vmul.f32 %v1098, %v1120
    %v1136 = vmul.f32 %v1100, %v1134
    %v1138 = vsel %vm358, %v1135, 0
    %v1141 = vsel %vm358, %v1136, 0
    %1143 = vmatpush.msra.mxu0 0.0
    %1144 = vmatpush.msra.mxu0 0.0
    %1145 = vmatpush.msra.mxu0 0.0
    %1146 = vmatpush.msra.mxu0 0.0
    %1147 = vmatpush.msra.mxu0 0.0
    %1148 = vmatpush.msra.mxu0 0.0
    %1149 = vmatpush.msra.mxu0 0.0
    %1150 = vmatpush.msra.mxu0 0.0
    %1151 = vmatpush.msra.mxu0 0.0
    %1152 = vmatpush.msra.mxu0 0.0
    %1153 = vmatpush.msra.mxu0 0.0
    %1154 = vmatpush.msra.mxu0 0.0
    %1155 = vmatpush.msra.mxu0 0.0
    %1156 = vmatpush.msra.mxu0 0.0
    %1157 = vmatpush.msra.mxu0 %v318
    %1158 = vmatpush.msra.mxu0 %v315
    %1159 = vmatmul.f32.gmra.mxu0 %v1138
    %v1160 = vpop.f32.mrf.mxu0
    %v1161 = vadd.f32 0.0, %v1160
    %1162 = vmatmul.f32.gmra.mxu0 %v1141
    %v1163 = vpop.f32.mrf.mxu0
    %v1164 = vadd.f32 0.0, %v1163
    %1165 = vdwg.mxu0
    %v1166 = vadd.f32 %v1045, %v1161
    %v1167 = vadd.f32 %v1048, %v1164
    %1168 = vrot.lane.b32.xlu0 %v286, 104
    %v1169 = vpop.permute.xlu0 %1168
    %1170 = vrot.lane.b32.xlu0 %v289, 104
    %v1171 = vpop.permute.xlu0 %1170
    %1172 = vrot.lane.b32.xlu0 %v286, 72
    %v1173 = vpop.permute.xlu0 %1172
    %1174 = vrot.lane.b32.xlu0 %v289, 72
    %v1175 = vpop.permute.xlu0 %1174
    %v1176 = vsel %vm326, %v1169, 0
    %v1178 = vsel %vm326, %v1171, 0
    %v1180 = vsel %vm326, %v1173, 0
    %v1182 = vsel %vm326, %v1175, 0
    %1184 = vmatpush.xpose.msra.mxu0 0.0
    %1185 = vmatpush.xpose.msra.mxu0 0.0
    %1186 = vmatpush.xpose.msra.mxu0 0.0
    %1187 = vmatpush.xpose.msra.mxu0 0.0
    %1188 = vmatpush.xpose.msra.mxu0 0.0
    %1189 = vmatpush.xpose.msra.mxu0 0.0
    %1190 = vmatpush.xpose.msra.mxu0 0.0
    %1191 = vmatpush.xpose.msra.mxu0 0.0
    %1192 = vmatpush.xpose.msra.mxu0 0.0
    %1193 = vmatpush.xpose.msra.mxu0 0.0
    %1194 = vmatpush.xpose.msra.mxu0 0.0
    %1195 = vmatpush.xpose.msra.mxu0 0.0
    %1196 = vmatpush.xpose.msra.mxu0 0.0
    %1197 = vmatpush.xpose.msra.mxu0 0.0
    %1198 = vmatpush.xpose.msra.mxu0 %v1182
    %1199 = vmatpush.xpose.msra.mxu0 %v1180
    %1200 = vmatmul.f32.gmra.mxu0 %v1176
    %v1201 = vpop.f32.mrf.mxu0
    %v1202 = vadd.f32 0.0, %v1201
    %1203 = vmatmul.f32.gmra.mxu0 %v1178
    %v1204 = vpop.f32.mrf.mxu0
    %v1205 = vadd.f32 0.0, %v1204
    %1206 = vdwg.mxu0
    %v1207 = vsel %vm358, %v1202, -inf
    %1208 = vmax.xlane.f32.xlu0 %v1207
    %v1209 = vpop.xlane.xlu0 %1208
    %v1210 = vsel %vm358, %v1205, -inf
    %1211 = vmax.xlane.f32.xlu0 %v1210
    %v1212 = vpop.xlane.xlu0 %1211
    %v1213 = vsub.f32 %v1202, %v1209
    %v1214 = vsub.f32 %v1205, %v1212
    %v1215 = vmul.f32 %v1213, 1.442695
    %v1216 = vpow.pop %v1215
    %v1217 = vmul.f32 %v1214, 1.442695
    %v1218 = vpow.pop %v1217
    %v1219 = vsel %vm358, %v1216, 0.0
    %1220 = vadd.xlane.f32.xlu0 %v1219
    %v1221 = vpop.xlane.xlu0 %1220
    %v1222 = vsel %vm358, %v1218, 0.0
    %1223 = vadd.xlane.f32.xlu0 %v1222
    %v1224 = vpop.xlane.xlu0 %1223
    %v1225 = vrcp.pop %v1221
    %v1226 = vmul.f32 %v1221, %v1225
    %v1227 = vsub.f32 1.0, %v1226
    %v1228 = vmul.f32 %v1225, %v1227
    %v1229 = vadd.f32 %v1225, %v1228
    %vm1230 = vweird.f32 %v1221
    %vm1231 = vweird.f32 %v1225
    %vm1232 = vmor %vm1230, %vm1231
    %v1233 = vsel %vm1232, %v1225, %v1229
    %v1234 = vand.u32 2147483647, %v1221
    %vm1235 = vcmp.eq.f32.partialorder %v1234, 8.507059e+37
    %v1236 = vand.u32 %v1221, 2147483648
    %v1237 = vor.u32 1.1754944e-38, %v1236
    %v1238 = vsel %vm1235, %v1237, %v1233
    %v1239 = vrcp.pop %v1224
    %v1240 = vmul.f32 %v1224, %v1239
    %v1241 = vsub.f32 1.0, %v1240
    %v1242 = vmul.f32 %v1239, %v1241
    %v1243 = vadd.f32 %v1239, %v1242
    %vm1244 = vweird.f32 %v1224
    %vm1245 = vweird.f32 %v1239
    %vm1246 = vmor %vm1244, %vm1245
    %v1247 = vsel %vm1246, %v1239, %v1243
    %v1248 = vand.u32 2147483647, %v1224
    %vm1249 = vcmp.eq.f32.partialorder %v1248, 8.507059e+37
    %v1250 = vand.u32 %v1224, 2147483648
    %v1251 = vor.u32 1.1754944e-38, %v1250
    %v1252 = vsel %vm1249, %v1251, %v1247
    %v1253 = vmul.f32 %v1216, %v1238
    %v1254 = vmul.f32 %v1218, %v1252
    %1257 = vrot.lane.b32.xlu0 %v315, 96
    %v1258 = vpop.permute.xlu0 %1257
    %1259 = vrot.lane.b32.xlu0 %v318, 96
    %v1260 = vpop.permute.xlu0 %1259
    %v1264 = vsel %vm358, %v1253, 0
    %v1267 = vsel %vm358, %v1254, 0
    %1269 = vmatpush.msra.mxu0 0.0
    %1270 = vmatpush.msra.mxu0 0.0
    %1271 = vmatpush.msra.mxu0 0.0
    %1272 = vmatpush.msra.mxu0 0.0
    %1273 = vmatpush.msra.mxu0 0.0
    %1274 = vmatpush.msra.mxu0 0.0
    %1275 = vmatpush.msra.mxu0 0.0
    %1276 = vmatpush.msra.mxu0 0.0
    %1277 = vmatpush.msra.mxu0 0.0
    %1278 = vmatpush.msra.mxu0 0.0
    %1279 = vmatpush.msra.mxu0 0.0
    %1280 = vmatpush.msra.mxu0 0.0
    %1281 = vmatpush.msra.mxu0 0.0
    %1282 = vmatpush.msra.mxu0 0.0
    %1283 = vmatpush.msra.mxu0 %v1260
    %1284 = vmatpush.msra.mxu0 %v1258
    %1285 = vmatmul.f32.gmra.mxu0 %v1264
    %v1286 = vpop.f32.mrf.mxu0
    %v1287 = vadd.f32 0.0, %v1286
    %1288 = vmatmul.f32.gmra.mxu0 %v1267
    %v1289 = vpop.f32.mrf.mxu0
    %v1290 = vadd.f32 0.0, %v1289
    %1291 = vdwg.mxu0
    %v1292 = vadd.f32 %v1166, %v1287
    %v1293 = vadd.f32 %v1167, %v1290
    %v1294 = vadd.f32 %v120, %v806
    %v1295 = vadd.f32 %v121, %v807
    %v1296 = vadd.f32 %v122, %v1292
    %v1297 = vadd.f32 %v123, %v1293
    %v1298 = vld [vmem:[#allocation8] sm:$0x1]
    %v1300 = vperm.slane %v1298, 0
    %v1302 = vadd.f32 %v1294, %v1300
    %v1303 = vadd.f32 %v1295, %v1300
    %v1304 = vadd.f32 %v1296, %v1300
    %v1305 = vadd.f32 %v1297, %v1300
    %v1306 = vld [vmem:[%s6] sm:$0x1]
    %v1307 = vld [vmem:[#allocation10] sm:$0x1]
    %v1308 = vsel %vm126, %v1302, 0.0
    %1309 = vadd.xlane.f32.xlu0 %v1308
    %v1310 = vpop.xlane.xlu0 %1309
    %v1311 = vsel %vm126, %v1303, 0.0
    %1312 = vadd.xlane.f32.xlu0 %v1311
    %v1313 = vpop.xlane.xlu0 %1312
    %v1314 = vsel %vm126, %v1304, 0.0
    %1315 = vadd.xlane.f32.xlu0 %v1314
    %v1316 = vpop.xlane.xlu0 %1315
    %v1317 = vsel %vm126, %v1305, 0.0
    %1318 = vadd.xlane.f32.xlu0 %v1317
    %v1319 = vpop.xlane.xlu0 %1318
    %v1320 = vmul.f32 %v1310, %v145
    %v1321 = vmul.f32 %v1313, %v145
    %v1322 = vmul.f32 %v1316, %v145
    %v1323 = vmul.f32 %v1319, %v145
    %v1324 = vsub.f32 %v1302, %v1320
    %v1325 = vsub.f32 %v1303, %v1321
    %v1326 = vsub.f32 %v1304, %v1322
    %v1327 = vsub.f32 %v1305, %v1323
    %v1328 = vmul.f32 %v1324, %v1324
    %v1329 = vmul.f32 %v1325, %v1325
    %v1330 = vmul.f32 %v1326, %v1326
    %v1331 = vmul.f32 %v1327, %v1327
    %v1332 = vsel %vm126, %v1328, 0.0
    %1333 = vadd.xlane.f32.xlu0 %v1332
    %v1334 = vpop.xlane.xlu0 %1333
    %v1335 = vsel %vm126, %v1329, 0.0
    %1336 = vadd.xlane.f32.xlu0 %v1335
    %v1337 = vpop.xlane.xlu0 %1336
    %v1338 = vsel %vm126, %v1330, 0.0
    %1339 = vadd.xlane.f32.xlu0 %v1338
    %v1340 = vpop.xlane.xlu0 %1339
    %v1341 = vsel %vm126, %v1331, 0.0
    %1342 = vadd.xlane.f32.xlu0 %v1341
    %v1343 = vpop.xlane.xlu0 %1342
    %v1344 = vmul.f32 %v1334, %v145
    %v1345 = vmul.f32 %v1337, %v145
    %v1346 = vmul.f32 %v1340, %v145
    %v1347 = vmul.f32 %v1343, %v145
    %v1348 = vadd.f32 %v1344, 1e-05
    %v1349 = vadd.f32 %v1345, 1e-05
    %v1350 = vadd.f32 %v1346, 1e-05
    %v1351 = vadd.f32 %v1347, 1e-05
    %v1352 = vrsqrt.pop %v1348
    %v1353 = vmul.f32 %v1352, %v1348
    %v1354 = vmul.f32 %v1353, %v1352
    %v1355 = vmul.f32 0.5, %v1354
    %v1356 = vsub.f32 1.5, %v1355
    %v1357 = vmul.f32 %v1352, %v1356
    %vm1358 = vweird.f32 %v1348
    %vm1359 = vweird.f32 %v1352
    %vm1360 = vmor %vm1358, %vm1359
    %v1361 = vsel %vm1360, %v1352, %v1357
    %v1362 = vrsqrt.pop %v1349
    %v1363 = vmul.f32 %v1362, %v1349
    %v1364 = vmul.f32 %v1363, %v1362
    %v1365 = vmul.f32 0.5, %v1364
    %v1366 = vsub.f32 1.5, %v1365
    %v1367 = vmul.f32 %v1362, %v1366
    %vm1368 = vweird.f32 %v1349
    %vm1369 = vweird.f32 %v1362
    %vm1370 = vmor %vm1368, %vm1369
    %v1371 = vsel %vm1370, %v1362, %v1367
    %v1372 = vrsqrt.pop %v1350
    %v1373 = vmul.f32 %v1372, %v1350
    %v1374 = vmul.f32 %v1373, %v1372
    %v1375 = vmul.f32 0.5, %v1374
    %v1376 = vsub.f32 1.5, %v1375
    %v1377 = vmul.f32 %v1372, %v1376
    %vm1378 = vweird.f32 %v1350
    %vm1379 = vweird.f32 %v1372
    %vm1380 = vmor %vm1378, %vm1379
    %v1381 = vsel %vm1380, %v1372, %v1377
    %v1382 = vrsqrt.pop %v1351
    %v1383 = vmul.f32 %v1382, %v1351
    %v1384 = vmul.f32 %v1383, %v1382
    %v1385 = vmul.f32 0.5, %v1384
    %v1386 = vsub.f32 1.5, %v1385
    %v1387 = vmul.f32 %v1382, %v1386
    %vm1388 = vweird.f32 %v1351
    %vm1389 = vweird.f32 %v1382
    %vm1390 = vmor %vm1388, %vm1389
    %v1391 = vsel %vm1390, %v1382, %v1387
    %v1392 = vmul.f32 %v1324, %v1361
    %v1393 = vmul.f32 %v1325, %v1371
    %v1394 = vmul.f32 %v1326, %v1381
    %v1395 = vmul.f32 %v1327, %v1391
    %v1397 = vperm.slane %v1306, 0
    %v1399 = vmul.f32 %v1392, %v1397
    %v1400 = vmul.f32 %v1393, %v1397
    %v1401 = vmul.f32 %v1394, %v1397
    %v1402 = vmul.f32 %v1395, %v1397
    %v1404 = vperm.slane %v1307, 0
    %v1406 = vadd.f32 %v1399, %v1404
    %v1407 = vadd.f32 %v1400, %v1404
    %v1408 = vadd.f32 %v1401, %v1404
    %v1409 = vadd.f32 %v1402, %v1404
    %v1410 = vld [vmem:[%s8] sm:$0xff]
    %v1411 = vld [vmem:[%s8 + $0x8] sm:$0xff]
    %v1412 = vld [vmem:[%s8 + $0x10] sm:$0xff]
    %v1413 = vld [vmem:[%s8 + $0x18] sm:$0xff]
    %v1414 = vld [vmem:[%s9] sm:$0x1]
    %v1416 = vperm.slane %v1414, 0
    %v1419 = vsel %vm126, %v1406, 0
    %v1422 = vsel %vm126, %v1407, 0
    %v1425 = vsel %vm126, %v1408, 0
    %v1428 = vsel %vm126, %v1409, 0
    %1430 = vmatpush.msra.mxu0 0.0
    %1431 = vmatpush.msra.mxu0 0.0
    %1432 = vmatpush.msra.mxu0 0.0
    %1433 = vmatpush.msra.mxu0 0.0
    %1434 = vmatpush.msra.mxu0 0.0
    %1435 = vmatpush.msra.mxu0 0.0
    %1436 = vmatpush.msra.mxu0 0.0
    %1437 = vmatpush.msra.mxu0 0.0
    %1438 = vmatpush.msra.mxu0 0.0
    %1439 = vmatpush.msra.mxu0 0.0
    %1440 = vmatpush.msra.mxu0 0.0
    %1441 = vmatpush.msra.mxu0 0.0
    %1442 = vmatpush.msra.mxu0 %v1413
    %1443 = vmatpush.msra.mxu0 %v1412
    %1444 = vmatpush.msra.mxu0 %v1411
    %1445 = vmatpush.msra.mxu0 %v1410
    %1446 = vmatmul.f32.gmra.mxu0 %v1419
    %v1447 = vpop.f32.mrf.mxu0
    %v1448 = vadd.f32 %v1416, %v1447
    %1449 = vmatmul.f32.gmra.mxu0 %v1422
    %v1450 = vpop.f32.mrf.mxu0
    %v1451 = vadd.f32 %v1416, %v1450
    %1452 = vmatmul.f32.gmra.mxu0 %v1425
    %v1453 = vpop.f32.mrf.mxu0
    %v1454 = vadd.f32 %v1416, %v1453
    %1455 = vmatmul.f32.gmra.mxu0 %v1428
    %v1456 = vpop.f32.mrf.mxu0
    %v1457 = vadd.f32 %v1416, %v1456
    %1458 = vdwg.mxu0
    %v1459 = vmul.f32 %v1448, 0.5
    %v1460 = vmul.f32 %v1451, 0.5
    %v1461 = vmul.f32 %v1454, 0.5
    %v1462 = vmul.f32 %v1457, 0.5
    %v1463 = vmul.f32 %v1448, 0.044715
    %v1464 = vmul.f32 %v1451, 0.044715
    %v1465 = vmul.f32 %v1454, 0.044715
    %v1466 = vmul.f32 %v1457, 0.044715
    %v1467 = vmul.f32 %v1463, %v1448
    %v1468 = vmul.f32 %v1464, %v1451
    %v1469 = vmul.f32 %v1465, %v1454
    %v1470 = vmul.f32 %v1466, %v1457
    %v1471 = vmul.f32 %v1467, %v1448
    %v1472 = vmul.f32 %v1468, %v1451
    %v1473 = vmul.f32 %v1469, %v1454
    %v1474 = vmul.f32 %v1470, %v1457
    %v1475 = vadd.f32 %v1448, %v1471
    %v1476 = vadd.f32 %v1451, %v1472
    %v1477 = vadd.f32 %v1454, %v1473
    %v1478 = vadd.f32 %v1457, %v1474
    %v1479 = vmul.f32 %v1475, 0.7978846
    %v1480 = vmul.f32 %v1476, 0.7978846
    %v1481 = vmul.f32 %v1477, 0.7978846
    %v1482 = vmul.f32 %v1478, 0.7978846
    %v1483 = vtanh.pop %v1479
    %v1484 = vtanh.pop %v1480
    %v1485 = vtanh.pop %v1481
    %v1486 = vtanh.pop %v1482
    %v1487 = vadd.f32 %v1483, 1.0
    %v1488 = vadd.f32 %v1484, 1.0
    %v1489 = vadd.f32 %v1485, 1.0
    %v1490 = vadd.f32 %v1486, 1.0
    %v1491 = vmul.f32 %v1459, %v1487
    %v1492 = vmul.f32 %v1460, %v1488
    %v1493 = vmul.f32 %v1461, %v1489
    %v1494 = vmul.f32 %v1462, %v1490
    %v1495 = vld [vmem:[%s10] sm:$0xff]
    %v1496 = vld [vmem:[%s10 + $0x8] sm:$0xff]
    %v1497 = vld [vmem:[%s10 + $0x10] sm:$0xff]
    %v1498 = vld [vmem:[%s10 + $0x18] sm:$0xff]
    %v1499 = vld [vmem:[%s10 + $0x20] sm:$0xff]
    %v1500 = vld [vmem:[%s10 + $0x28] sm:$0xff]
    %v1501 = vld [vmem:[%s10 + $0x30] sm:$0xff]
    %v1502 = vld [vmem:[%s10 + $0x38] sm:$0xff]
    %vm1503 = vcmask 523264
    %v1505 = vsel %vm1503, %v1491, 0
    %v1508 = vsel %vm1503, %v1492, 0
    %v1511 = vsel %vm1503, %v1493, 0
    %v1514 = vsel %vm1503, %v1494, 0
    %1516 = vmatpush.msra.mxu0 0.0
    %1517 = vmatpush.msra.mxu0 0.0
    %1518 = vmatpush.msra.mxu0 0.0
    %1519 = vmatpush.msra.mxu0 0.0
    %1520 = vmatpush.msra.mxu0 0.0
    %1521 = vmatpush.msra.mxu0 0.0
    %1522 = vmatpush.msra.mxu0 0.0
    %1523 = vmatpush.msra.mxu0 0.0
    %1524 = vmatpush.msra.mxu0 %v1502
    %1525 = vmatpush.msra.mxu0 %v1501
    %1526 = vmatpush.msra.mxu0 %v1500
    %1527 = vmatpush.msra.mxu0 %v1499
    %1528 = vmatpush.msra.mxu0 %v1498
    %1529 = vmatpush.msra.mxu0 %v1497
    %1530 = vmatpush.msra.mxu0 %v1496
    %1531 = vmatpush.msra.mxu0 %v1495
    %1532 = vmatmul.f32.gmra.mxu0 %v1505
    %v1533 = vpop.f32.mrf.mxu0
    %v1534 = vadd.f32 0.0, %v1533
    %1535 = vmatmul.f32.gmra.mxu0 %v1508
    %v1536 = vpop.f32.mrf.mxu0
    %v1537 = vadd.f32 0.0, %v1536
    %1538 = vmatmul.f32.gmra.mxu0 %v1511
    %v1539 = vpop.f32.mrf.mxu0
    %v1540 = vadd.f32 0.0, %v1539
    %1541 = vmatmul.f32.gmra.mxu0 %v1514
    %v1542 = vpop.f32.mrf.mxu0
    %v1543 = vadd.f32 0.0, %v1542
    %1544 = vdwg.mxu0
    %v1545 = vadd.f32 %v1302, %v1534
    %v1546 = vadd.f32 %v1303, %v1537
    %v1547 = vadd.f32 %v1304, %v1540
    %v1548 = vadd.f32 %v1305, %v1543
    %v1549 = vld [vmem:[%s11] sm:$0x1]
    %v1551 = vperm.slane %v1549, 0
    %v1553 = vadd.f32 %v1545, %v1551
    %v1554 = vadd.f32 %v1546, %v1551
    %v1555 = vadd.f32 %v1547, %v1551
    %v1556 = vadd.f32 %v1548, %v1551
    %s1557 = scalar_lea.vmem %s1, 1
    %v1558 = vld [vmem:[%s1557] sm:$0x1]
    %s1559 = scalar_lea.vmem [#allocation5], 1
    %v1560 = vld [vmem:[%s1559] sm:$0x1]
    %v1561 = vsel %vm126, %v1553, 0.0
    %1562 = vadd.xlane.f32.xlu0 %v1561
    %v1563 = vpop.xlane.xlu0 %1562
    %v1564 = vsel %vm126, %v1554, 0.0
    %1565 = vadd.xlane.f32.xlu0 %v1564
    %v1566 = vpop.xlane.xlu0 %1565
    %v1567 = vsel %vm126, %v1555, 0.0
    %1568 = vadd.xlane.f32.xlu0 %v1567
    %v1569 = vpop.xlane.xlu0 %1568
    %v1570 = vsel %vm126, %v1556, 0.0
    %1571 = vadd.xlane.f32.xlu0 %v1570
    %v1572 = vpop.xlane.xlu0 %1571
    %v1573 = vmul.f32 %v1563, %v145
    %v1574 = vmul.f32 %v1566, %v145
    %v1575 = vmul.f32 %v1569, %v145
    %v1576 = vmul.f32 %v1572, %v145
    %v1577 = vsub.f32 %v1553, %v1573
    %v1578 = vsub.f32 %v1554, %v1574
    %v1579 = vsub.f32 %v1555, %v1575
    %v1580 = vsub.f32 %v1556, %v1576
    %v1581 = vmul.f32 %v1577, %v1577
    %v1582 = vmul.f32 %v1578, %v1578
    %v1583 = vmul.f32 %v1579, %v1579
    %v1584 = vmul.f32 %v1580, %v1580
    %v1585 = vsel %vm126, %v1581, 0.0
    %1586 = vadd.xlane.f32.xlu0 %v1585
    %v1587 = vpop.xlane.xlu0 %1586
    %v1588 = vsel %vm126, %v1582, 0.0
    %1589 = vadd.xlane.f32.xlu0 %v1588
    %v1590 = vpop.xlane.xlu0 %1589
    %v1591 = vsel %vm126, %v1583, 0.0
    %1592 = vadd.xlane.f32.xlu0 %v1591
    %v1593 = vpop.xlane.xlu0 %1592
    %v1594 = vsel %vm126, %v1584, 0.0
    %1595 = vadd.xlane.f32.xlu0 %v1594
    %v1596 = vpop.xlane.xlu0 %1595
    %v1597 = vmul.f32 %v1587, %v145
    %v1598 = vmul.f32 %v1590, %v145
    %v1599 = vmul.f32 %v1593, %v145
    %v1600 = vmul.f32 %v1596, %v145
    %v1601 = vadd.f32 %v1597, 1e-05
    %v1602 = vadd.f32 %v1598, 1e-05
    %v1603 = vadd.f32 %v1599, 1e-05
    %v1604 = vadd.f32 %v1600, 1e-05
    %v1605 = vrsqrt.pop %v1601
    %v1606 = vmul.f32 %v1605, %v1601
    %v1607 = vmul.f32 %v1606, %v1605
    %v1608 = vmul.f32 0.5, %v1607
    %v1609 = vsub.f32 1.5, %v1608
    %v1610 = vmul.f32 %v1605, %v1609
    %vm1611 = vweird.f32 %v1601
    %vm1612 = vweird.f32 %v1605
    %vm1613 = vmor %vm1611, %vm1612
    %v1614 = vsel %vm1613, %v1605, %v1610
    %v1615 = vrsqrt.pop %v1602
    %v1616 = vmul.f32 %v1615, %v1602
    %v1617 = vmul.f32 %v1616, %v1615
    %v1618 = vmul.f32 0.5, %v1617
    %v1619 = vsub.f32 1.5, %v1618
    %v1620 = vmul.f32 %v1615, %v1619
    %vm1621 = vweird.f32 %v1602
    %vm1622 = vweird.f32 %v1615
    %vm1623 = vmor %vm1621, %vm1622
    %v1624 = vsel %vm1623, %v1615, %v1620
    %v1625 = vrsqrt.pop %v1603
    %v1626 = vmul.f32 %v1625, %v1603
    %v1627 = vmul.f32 %v1626, %v1625
    %v1628 = vmul.f32 0.5, %v1627
    %v1629 = vsub.f32 1.5, %v1628
    %v1630 = vmul.f32 %v1625, %v1629
    %vm1631 = vweird.f32 %v1603
    %vm1632 = vweird.f32 %v1625
    %vm1633 = vmor %vm1631, %vm1632
    %v1634 = vsel %vm1633, %v1625, %v1630
    %v1635 = vrsqrt.pop %v1604
    %v1636 = vmul.f32 %v1635, %v1604
    %v1637 = vmul.f32 %v1636, %v1635
    %v1638 = vmul.f32 0.5, %v1637
    %v1639 = vsub.f32 1.5, %v1638
    %v1640 = vmul.f32 %v1635, %v1639
    %vm1641 = vweird.f32 %v1604
    %vm1642 = vweird.f32 %v1635
    %vm1643 = vmor %vm1641, %vm1642
    %v1644 = vsel %vm1643, %v1635, %v1640
    %v1645 = vmul.f32 %v1577, %v1614
    %v1646 = vmul.f32 %v1578, %v1624
    %v1647 = vmul.f32 %v1579, %v1634
    %v1648 = vmul.f32 %v1580, %v1644
    %v1650 = vperm.slane %v1558, 0
    %v1652 = vmul.f32 %v1645, %v1650
    %v1653 = vmul.f32 %v1646, %v1650
    %v1654 = vmul.f32 %v1647, %v1650
    %v1655 = vmul.f32 %v1648, %v1650
    %v1657 = vperm.slane %v1560, 0
    %v1659 = vadd.f32 %v1652, %v1657
    %v1660 = vadd.f32 %v1653, %v1657
    %v1661 = vadd.f32 %v1654, %v1657
    %v1662 = vadd.f32 %v1655, %v1657
    %s1663 = scalar_lea.vmem %s3, 64
    %v1664 = vld [vmem:[%s1663] sm:$0xff]
    %v1665 = vld [vmem:[%s1663 + $0x8] sm:$0xff]
    %v1666 = vld [vmem:[%s1663 + $0x10] sm:$0xff]
    %v1667 = vld [vmem:[%s1663 + $0x18] sm:$0xff]
    %v1668 = vld [vmem:[%s1663 + $0x20] sm:$0xff]
    %v1669 = vld [vmem:[%s1663 + $0x28] sm:$0xff]
    %v1670 = vld [vmem:[%s1663 + $0x30] sm:$0xff]
    %v1671 = vld [vmem:[%s1663 + $0x38] sm:$0xff]
    %s1672 = scalar_lea.vmem [#allocation7], 2
    %v1673 = vld [vmem:[%s1672] sm:$0x3]
    %v1675 = vperm.slane %v1673, 0
    %v1676 = vperm.slane %v1673, 1
    %v1680 = vsel %vm126, %v1659, 0
    %v1683 = vsel %vm126, %v1660, 0
    %v1686 = vsel %vm126, %v1661, 0
    %v1689 = vsel %vm126, %v1662, 0
    %1691 = vmatpush.msra.mxu0 0.0
    %1692 = vmatpush.msra.mxu0 0.0
    %1693 = vmatpush.msra.mxu0 0.0
    %1694 = vmatpush.msra.mxu0 0.0
    %1695 = vmatpush.msra.mxu0 0.0
    %1696 = vmatpush.msra.mxu0 0.0
    %1697 = vmatpush.msra.mxu0 0.0
    %1698 = vmatpush.msra.mxu0 0.0
    %1699 = vmatpush.msra.mxu0 0.0
    %1700 = vmatpush.msra.mxu0 0.0
    %1701 = vmatpush.msra.mxu0 0.0
    %1702 = vmatpush.msra.mxu0 0.0
    %1703 = vmatpush.msra.mxu0 %v1670
    %1704 = vmatpush.msra.mxu0 %v1668
    %1705 = vmatpush.msra.mxu0 %v1666
    %1706 = vmatpush.msra.mxu0 %v1664
    %1707 = vmatmul.f32.gmra.mxu0 %v1680
    %v1708 = vpop.f32.mrf.mxu0
    %v1709 = vadd.f32 %v1675, %v1708
    %1710 = vmatmul.f32.gmra.mxu0 %v1683
    %v1711 = vpop.f32.mrf.mxu0
    %v1712 = vadd.f32 %v1675, %v1711
    %1713 = vmatmul.f32.gmra.mxu0 %v1686
    %v1714 = vpop.f32.mrf.mxu0
    %v1715 = vadd.f32 %v1675, %v1714
    %1716 = vmatmul.f32.gmra.mxu0 %v1689
    %v1717 = vpop.f32.mrf.mxu0
    %v1718 = vadd.f32 %v1675, %v1717
    %1719 = vdwg.mxu0
    %1720 = vmatpush.msra.mxu0 0.0
    %1721 = vmatpush.msra.mxu0 0.0
    %1722 = vmatpush.msra.mxu0 0.0
    %1723 = vmatpush.msra.mxu0 0.0
    %1724 = vmatpush.msra.mxu0 0.0
    %1725 = vmatpush.msra.mxu0 0.0
    %1726 = vmatpush.msra.mxu0 0.0
    %1727 = vmatpush.msra.mxu0 0.0
    %1728 = vmatpush.msra.mxu0 0.0
    %1729 = vmatpush.msra.mxu0 0.0
    %1730 = vmatpush.msra.mxu0 0.0
    %1731 = vmatpush.msra.mxu0 0.0
    %1732 = vmatpush.msra.mxu0 %v1671
    %1733 = vmatpush.msra.mxu0 %v1669
    %1734 = vmatpush.msra.mxu0 %v1667
    %1735 = vmatpush.msra.mxu0 %v1665
    %1736 = vmatmul.f32.gmra.mxu0 %v1680
    %v1737 = vpop.f32.mrf.mxu0
    %v1738 = vadd.f32 %v1676, %v1737
    %1739 = vmatmul.f32.gmra.mxu0 %v1683
    %v1740 = vpop.f32.mrf.mxu0
    %v1741 = vadd.f32 %v1676, %v1740
    %1742 = vmatmul.f32.gmra.mxu0 %v1686
    %v1743 = vpop.f32.mrf.mxu0
    %v1744 = vadd.f32 %v1676, %v1743
    %1745 = vmatmul.f32.gmra.mxu0 %v1689
    %v1746 = vpop.f32.mrf.mxu0
    %v1747 = vadd.f32 %v1676, %v1746
    %1748 = vdwg.mxu0
    %1751 = vrot.lane.b32.xlu0 %v1709, 96
    %v1752 = vpop.permute.xlu0 %1751
    %1753 = vrot.lane.b32.xlu0 %v1712, 96
    %v1754 = vpop.permute.xlu0 %1753
    %v1755 = vsel %vm326, %v1709, 0
    %v1757 = vsel %vm326, %v1712, 0
    %v1759 = vsel %vm326, %v1752, 0
    %v1761 = vsel %vm326, %v1754, 0
    %1763 = vmatpush.xpose.msra.mxu0 0.0
    %1764 = vmatpush.xpose.msra.mxu0 0.0
    %1765 = vmatpush.xpose.msra.mxu0 0.0
    %1766 = vmatpush.xpose.msra.mxu0 0.0
    %1767 = vmatpush.xpose.msra.mxu0 0.0
    %1768 = vmatpush.xpose.msra.mxu0 0.0
    %1769 = vmatpush.xpose.msra.mxu0 0.0
    %1770 = vmatpush.xpose.msra.mxu0 0.0
    %1771 = vmatpush.xpose.msra.mxu0 0.0
    %1772 = vmatpush.xpose.msra.mxu0 0.0
    %1773 = vmatpush.xpose.msra.mxu0 0.0
    %1774 = vmatpush.xpose.msra.mxu0 0.0
    %1775 = vmatpush.xpose.msra.mxu0 0.0
    %1776 = vmatpush.xpose.msra.mxu0 0.0
    %1777 = vmatpush.xpose.msra.mxu0 %v1761
    %1778 = vmatpush.xpose.msra.mxu0 %v1759
    %1779 = vmatmul.f32.gmra.mxu0 %v1755
    %v1780 = vpop.f32.mrf.mxu0
    %v1781 = vadd.f32 0.0, %v1780
    %1782 = vmatmul.f32.gmra.mxu0 %v1757
    %v1783 = vpop.f32.mrf.mxu0
    %v1784 = vadd.f32 0.0, %v1783
    %1785 = vdwg.mxu0
    %v1786 = vsel %vm358, %v1781, -inf
    %1787 = vmax.xlane.f32.xlu0 %v1786
    %v1788 = vpop.xlane.xlu0 %1787
    %v1789 = vsel %vm358, %v1784, -inf
    %1790 = vmax.xlane.f32.xlu0 %v1789
    %v1791 = vpop.xlane.xlu0 %1790
    %v1792 = vsub.f32 %v1781, %v1788
    %v1793 = vsub.f32 %v1784, %v1791
    %v1794 = vmul.f32 %v1792, 1.442695
    %v1795 = vpow.pop %v1794
    %v1796 = vmul.f32 %v1793, 1.442695
    %v1797 = vpow.pop %v1796
    %v1798 = vsel %vm358, %v1795, 0.0
    %1799 = vadd.xlane.f32.xlu0 %v1798
    %v1800 = vpop.xlane.xlu0 %1799
    %v1801 = vsel %vm358, %v1797, 0.0
    %1802 = vadd.xlane.f32.xlu0 %v1801
    %v1803 = vpop.xlane.xlu0 %1802
    %v1804 = vrcp.pop %v1800
    %v1805 = vmul.f32 %v1800, %v1804
    %v1806 = vsub.f32 1.0, %v1805
    %v1807 = vmul.f32 %v1804, %v1806
    %v1808 = vadd.f32 %v1804, %v1807
    %vm1809 = vweird.f32 %v1800
    %vm1810 = vweird.f32 %v1804
    %vm1811 = vmor %vm1809, %vm1810
    %v1812 = vsel %vm1811, %v1804, %v1808
    %v1813 = vand.u32 2147483647, %v1800
    %vm1814 = vcmp.eq.f32.partialorder %v1813, 8.507059e+37
    %v1815 = vand.u32 %v1800, 2147483648
    %v1816 = vor.u32 1.1754944e-38, %v1815
    %v1817 = vsel %vm1814, %v1816, %v1812
    %v1818 = vrcp.pop %v1803
    %v1819 = vmul.f32 %v1803, %v1818
    %v1820 = vsub.f32 1.0, %v1819
    %v1821 = vmul.f32 %v1818, %v1820
    %v1822 = vadd.f32 %v1818, %v1821
    %vm1823 = vweird.f32 %v1803
    %vm1824 = vweird.f32 %v1818
    %vm1825 = vmor %vm1823, %vm1824
    %v1826 = vsel %vm1825, %v1818, %v1822
    %v1827 = vand.u32 2147483647, %v1803
    %vm1828 = vcmp.eq.f32.partialorder %v1827, 8.507059e+37
    %v1829 = vand.u32 %v1803, 2147483648
    %v1830 = vor.u32 1.1754944e-38, %v1829
    %v1831 = vsel %vm1828, %v1830, %v1826
    %v1832 = vmul.f32 %v1795, %v1817
    %v1833 = vmul.f32 %v1797, %v1831
    %1834 = vrot.lane.b32.xlu0 %v1709, 120
    %v1835 = vpop.permute.xlu0 %1834
    %1836 = vrot.lane.b32.xlu0 %v1712, 120
    %v1837 = vpop.permute.xlu0 %1836
    %1838 = vrot.lane.b32.xlu0 %v1709, 88
    %v1839 = vpop.permute.xlu0 %1838
    %1840 = vrot.lane.b32.xlu0 %v1712, 88
    %v1841 = vpop.permute.xlu0 %1840
    %v1842 = vsel %vm326, %v1835, 0
    %v1844 = vsel %vm326, %v1837, 0
    %v1846 = vsel %vm326, %v1839, 0
    %v1848 = vsel %vm326, %v1841, 0
    %1850 = vmatpush.xpose.msra.mxu0 0.0
    %1851 = vmatpush.xpose.msra.mxu0 0.0
    %1852 = vmatpush.xpose.msra.mxu0 0.0
    %1853 = vmatpush.xpose.msra.mxu0 0.0
    %1854 = vmatpush.xpose.msra.mxu0 0.0
    %1855 = vmatpush.xpose.msra.mxu0 0.0
    %1856 = vmatpush.xpose.msra.mxu0 0.0
    %1857 = vmatpush.xpose.msra.mxu0 0.0
    %1858 = vmatpush.xpose.msra.mxu0 0.0
    %1859 = vmatpush.xpose.msra.mxu0 0.0
    %1860 = vmatpush.xpose.msra.mxu0 0.0
    %1861 = vmatpush.xpose.msra.mxu0 0.0
    %1862 = vmatpush.xpose.msra.mxu0 0.0
    %1863 = vmatpush.xpose.msra.mxu0 0.0
    %1864 = vmatpush.xpose.msra.mxu0 %v1848
    %1865 = vmatpush.xpose.msra.mxu0 %v1846
    %1866 = vmatmul.f32.gmra.mxu0 %v1842
    %v1867 = vpop.f32.mrf.mxu0
    %v1868 = vadd.f32 0.0, %v1867
    %1869 = vmatmul.f32.gmra.mxu0 %v1844
    %v1870 = vpop.f32.mrf.mxu0
    %v1871 = vadd.f32 0.0, %v1870
    %1872 = vdwg.mxu0
    %v1873 = vsel %vm358, %v1868, -inf
    %1874 = vmax.xlane.f32.xlu0 %v1873
    %v1875 = vpop.xlane.xlu0 %1874
    %v1876 = vsel %vm358, %v1871, -inf
    %1877 = vmax.xlane.f32.xlu0 %v1876
    %v1878 = vpop.xlane.xlu0 %1877
    %v1879 = vsub.f32 %v1868, %v1875
    %v1880 = vsub.f32 %v1871, %v1878
    %v1881 = vmul.f32 %v1879, 1.442695
    %v1882 = vpow.pop %v1881
    %v1883 = vmul.f32 %v1880, 1.442695
    %v1884 = vpow.pop %v1883
    %v1885 = vsel %vm358, %v1882, 0.0
    %1886 = vadd.xlane.f32.xlu0 %v1885
    %v1887 = vpop.xlane.xlu0 %1886
    %v1888 = vsel %vm358, %v1884, 0.0
    %1889 = vadd.xlane.f32.xlu0 %v1888
    %v1890 = vpop.xlane.xlu0 %1889
    %v1891 = vrcp.pop %v1887
    %v1892 = vmul.f32 %v1887, %v1891
    %v1893 = vsub.f32 1.0, %v1892
    %v1894 = vmul.f32 %v1891, %v1893
    %v1895 = vadd.f32 %v1891, %v1894
    %vm1896 = vweird.f32 %v1887
    %vm1897 = vweird.f32 %v1891
    %vm1898 = vmor %vm1896, %vm1897
    %v1899 = vsel %vm1898, %v1891, %v1895
    %v1900 = vand.u32 2147483647, %v1887
    %vm1901 = vcmp.eq.f32.partialorder %v1900, 8.507059e+37
    %v1902 = vand.u32 %v1887, 2147483648
    %v1903 = vor.u32 1.1754944e-38, %v1902
    %v1904 = vsel %vm1901, %v1903, %v1899
    %v1905 = vrcp.pop %v1890
    %v1906 = vmul.f32 %v1890, %v1905
    %v1907 = vsub.f32 1.0, %v1906
    %v1908 = vmul.f32 %v1905, %v1907
    %v1909 = vadd.f32 %v1905, %v1908
    %vm1910 = vweird.f32 %v1890
    %vm1911 = vweird.f32 %v1905
    %vm1912 = vmor %vm1910, %vm1911
    %v1913 = vsel %vm1912, %v1905, %v1909
    %v1914 = vand.u32 2147483647, %v1890
    %vm1915 = vcmp.eq.f32.partialorder %v1914, 8.507059e+37
    %v1916 = vand.u32 %v1890, 2147483648
    %v1917 = vor.u32 1.1754944e-38, %v1916
    %v1918 = vsel %vm1915, %v1917, %v1913
    %v1919 = vmul.f32 %v1882, %v1904
    %v1920 = vmul.f32 %v1884, %v1918
    %1921 = vrot.lane.b32.xlu0 %v1709, 32
    %v1922 = vpop.permute.xlu0 %1921
    %1923 = vrot.lane.b32.xlu0 %v1712, 32
    %v1924 = vpop.permute.xlu0 %1923
    %v1928 = vsel %vm358, %v1919, 0
    %v1931 = vsel %vm358, %v1920, 0
    %1933 = vmatpush.msra.mxu0 0.0
    %1934 = vmatpush.msra.mxu0 0.0
    %1935 = vmatpush.msra.mxu0 0.0
    %1936 = vmatpush.msra.mxu0 0.0
    %1937 = vmatpush.msra.mxu0 0.0
    %1938 = vmatpush.msra.mxu0 0.0
    %1939 = vmatpush.msra.mxu0 0.0
    %1940 = vmatpush.msra.mxu0 0.0
    %1941 = vmatpush.msra.mxu0 0.0
    %1942 = vmatpush.msra.mxu0 0.0
    %1943 = vmatpush.msra.mxu0 0.0
    %1944 = vmatpush.msra.mxu0 0.0
    %1945 = vmatpush.msra.mxu0 0.0
    %1946 = vmatpush.msra.mxu0 0.0
    %1947 = vmatpush.msra.mxu0 %v1924
    %1948 = vmatpush.msra.mxu0 %v1922
    %1949 = vmatmul.f32.gmra.mxu0 %v1928
    %v1950 = vpop.f32.mrf.mxu0
    %v1951 = vadd.f32 0.0, %v1950
    %1952 = vmatmul.f32.gmra.mxu0 %v1931
    %v1953 = vpop.f32.mrf.mxu0
    %v1954 = vadd.f32 0.0, %v1953
    %1955 = vdwg.mxu0
    %1956 = vrot.lane.b32.xlu0 %v1709, 64
    %v1957 = vpop.permute.xlu0 %1956
    %1958 = vrot.lane.b32.xlu0 %v1712, 64
    %v1959 = vpop.permute.xlu0 %1958
    %v1963 = vsel %vm358, %v1832, 0
    %v1966 = vsel %vm358, %v1833, 0
    %1968 = vmatpush.msra.mxu0 0.0
    %1969 = vmatpush.msra.mxu0 0.0
    %1970 = vmatpush.msra.mxu0 0.0
    %1971 = vmatpush.msra.mxu0 0.0
    %1972 = vmatpush.msra.mxu0 0.0
    %1973 = vmatpush.msra.mxu0 0.0
    %1974 = vmatpush.msra.mxu0 0.0
    %1975 = vmatpush.msra.mxu0 0.0
    %1976 = vmatpush.msra.mxu0 0.0
    %1977 = vmatpush.msra.mxu0 0.0
    %1978 = vmatpush.msra.mxu0 0.0
    %1979 = vmatpush.msra.mxu0 0.0
    %1980 = vmatpush.msra.mxu0 0.0
    %1981 = vmatpush.msra.mxu0 0.0
    %1982 = vmatpush.msra.mxu0 %v1959
    %1983 = vmatpush.msra.mxu0 %v1957
    %1984 = vmatmul.f32.gmra.mxu0 %v1963
    %v1985 = vpop.f32.mrf.mxu0
    %v1986 = vadd.f32 %v1951, %v1985
    %1987 = vmatmul.f32.gmra.mxu0 %v1966
    %v1988 = vpop.f32.mrf.mxu0
    %v1989 = vadd.f32 %v1954, %v1988
    %1990 = vdwg.mxu0
    %1991 = vrot.lane.b32.xlu0 %v1709, 112
    %v1992 = vpop.permute.xlu0 %1991
    %1993 = vrot.lane.b32.xlu0 %v1712, 112
    %v1994 = vpop.permute.xlu0 %1993
    %1995 = vrot.lane.b32.xlu0 %v1709, 80
    %v1996 = vpop.permute.xlu0 %1995
    %1997 = vrot.lane.b32.xlu0 %v1712, 80
    %v1998 = vpop.permute.xlu0 %1997
    %v1999 = vsel %vm326, %v1992, 0
    %v2001 = vsel %vm326, %v1994, 0
    %v2003 = vsel %vm326, %v1996, 0
    %v2005 = vsel %vm326, %v1998, 0
    %2007 = vmatpush.xpose.msra.mxu0 0.0
    %2008 = vmatpush.xpose.msra.mxu0 0.0
    %2009 = vmatpush.xpose.msra.mxu0 0.0
    %2010 = vmatpush.xpose.msra.mxu0 0.0
    %2011 = vmatpush.xpose.msra.mxu0 0.0
    %2012 = vmatpush.xpose.msra.mxu0 0.0
    %2013 = vmatpush.xpose.msra.mxu0 0.0
    %2014 = vmatpush.xpose.msra.mxu0 0.0
    %2015 = vmatpush.xpose.msra.mxu0 0.0
    %2016 = vmatpush.xpose.msra.mxu0 0.0
    %2017 = vmatpush.xpose.msra.mxu0 0.0
    %2018 = vmatpush.xpose.msra.mxu0 0.0
    %2019 = vmatpush.xpose.msra.mxu0 0.0
    %2020 = vmatpush.xpose.msra.mxu0 0.0
    %2021 = vmatpush.xpose.msra.mxu0 %v2005
    %2022 = vmatpush.xpose.msra.mxu0 %v2003
    %2023 = vmatmul.f32.gmra.mxu0 %v1999
    %v2024 = vpop.f32.mrf.mxu0
    %v2025 = vadd.f32 0.0, %v2024
    %2026 = vmatmul.f32.gmra.mxu0 %v2001
    %v2027 = vpop.f32.mrf.mxu0
    %v2028 = vadd.f32 0.0, %v2027
    %2029 = vdwg.mxu0
    %v2030 = vsel %vm358, %v2025, -inf
    %2031 = vmax.xlane.f32.xlu0 %v2030
    %v2032 = vpop.xlane.xlu0 %2031
    %v2033 = vsel %vm358, %v2028, -inf
    %2034 = vmax.xlane.f32.xlu0 %v2033
    %v2035 = vpop.xlane.xlu0 %2034
    %v2036 = vsub.f32 %v2025, %v2032
    %v2037 = vsub.f32 %v2028, %v2035
    %v2038 = vmul.f32 %v2036, 1.442695
    %v2039 = vpow.pop %v2038
    %v2040 = vmul.f32 %v2037, 1.442695
    %v2041 = vpow.pop %v2040
    %v2042 = vsel %vm358, %v2039, 0.0
    %2043 = vadd.xlane.f32.xlu0 %v2042
    %v2044 = vpop.xlane.xlu0 %2043
    %v2045 = vsel %vm358, %v2041, 0.0
    %2046 = vadd.xlane.f32.xlu0 %v2045
    %v2047 = vpop.xlane.xlu0 %2046
    %v2048 = vrcp.pop %v2044
    %v2049 = vmul.f32 %v2044, %v2048
    %v2050 = vsub.f32 1.0, %v2049
    %v2051 = vmul.f32 %v2048, %v2050
    %v2052 = vadd.f32 %v2048, %v2051
    %vm2053 = vweird.f32 %v2044
    %vm2054 = vweird.f32 %v2048
    %vm2055 = vmor %vm2053, %vm2054
    %v2056 = vsel %vm2055, %v2048, %v2052
    %v2057 = vand.u32 2147483647, %v2044
    %vm2058 = vcmp.eq.f32.partialorder %v2057, 8.507059e+37
    %v2059 = vand.u32 %v2044, 2147483648
    %v2060 = vor.u32 1.1754944e-38, %v2059
    %v2061 = vsel %vm2058, %v2060, %v2056
    %v2062 = vrcp.pop %v2047
    %v2063 = vmul.f32 %v2047, %v2062
    %v2064 = vsub.f32 1.0, %v2063
    %v2065 = vmul.f32 %v2062, %v2064
    %v2066 = vadd.f32 %v2062, %v2065
    %vm2067 = vweird.f32 %v2047
    %vm2068 = vweird.f32 %v2062
    %vm2069 = vmor %vm2067, %vm2068
    %v2070 = vsel %vm2069, %v2062, %v2066
    %v2071 = vand.u32 2147483647, %v2047
    %vm2072 = vcmp.eq.f32.partialorder %v2071, 8.507059e+37
    %v2073 = vand.u32 %v2047, 2147483648
    %v2074 = vor.u32 1.1754944e-38, %v2073
    %v2075 = vsel %vm2072, %v2074, %v2070
    %v2076 = vmul.f32 %v2039, %v2061
    %v2077 = vmul.f32 %v2041, %v2075
    %v2079 = vsel %vm358, %v2076, 0
    %v2082 = vsel %vm358, %v2077, 0
    %2084 = vmatpush.msra.mxu0 0.0
    %2085 = vmatpush.msra.mxu0 0.0
    %2086 = vmatpush.msra.mxu0 0.0
    %2087 = vmatpush.msra.mxu0 0.0
    %2088 = vmatpush.msra.mxu0 0.0
    %2089 = vmatpush.msra.mxu0 0.0
    %2090 = vmatpush.msra.mxu0 0.0
    %2091 = vmatpush.msra.mxu0 0.0
    %2092 = vmatpush.msra.mxu0 0.0
    %2093 = vmatpush.msra.mxu0 0.0
    %2094 = vmatpush.msra.mxu0 0.0
    %2095 = vmatpush.msra.mxu0 0.0
    %2096 = vmatpush.msra.mxu0 0.0
    %2097 = vmatpush.msra.mxu0 0.0
    %2098 = vmatpush.msra.mxu0 %v1741
    %2099 = vmatpush.msra.mxu0 %v1738
    %2100 = vmatmul.f32.gmra.mxu0 %v2079
    %v2101 = vpop.f32.mrf.mxu0
    %v2102 = vadd.f32 0.0, %v2101
    %2103 = vmatmul.f32.gmra.mxu0 %v2082
    %v2104 = vpop.f32.mrf.mxu0
    %v2105 = vadd.f32 0.0, %v2104
    %2106 = vdwg.mxu0
    %v2107 = vadd.f32 %v1986, %v2102
    %v2108 = vadd.f32 %v1989, %v2105
    %2109 = vrot.lane.b32.xlu0 %v1709, 104
    %v2110 = vpop.permute.xlu0 %2109
    %2111 = vrot.lane.b32.xlu0 %v1712, 104
    %v2112 = vpop.permute.xlu0 %2111
    %2113 = vrot.lane.b32.xlu0 %v1709, 72
    %v2114 = vpop.permute.xlu0 %2113
    %2115 = vrot.lane.b32.xlu0 %v1712, 72
    %v2116 = vpop.permute.xlu0 %2115
    %v2117 = vsel %vm326, %v2110, 0
    %v2119 = vsel %vm326, %v2112, 0
    %v2121 = vsel %vm326, %v2114, 0
    %v2123 = vsel %vm326, %v2116, 0
    %2125 = vmatpush.xpose.msra.mxu0 0.0
    %2126 = vmatpush.xpose.msra.mxu0 0.0
    %2127 = vmatpush.xpose.msra.mxu0 0.0
    %2128 = vmatpush.xpose.msra.mxu0 0.0
    %2129 = vmatpush.xpose.msra.mxu0 0.0
    %2130 = vmatpush.xpose.msra.mxu0 0.0
    %2131 = vmatpush.xpose.msra.mxu0 0.0
    %2132 = vmatpush.xpose.msra.mxu0 0.0
    %2133 = vmatpush.xpose.msra.mxu0 0.0
    %2134 = vmatpush.xpose.msra.mxu0 0.0
    %2135 = vmatpush.xpose.msra.mxu0 0.0
    %2136 = vmatpush.xpose.msra.mxu0 0.0
    %2137 = vmatpush.xpose.msra.mxu0 0.0
    %2138 = vmatpush.xpose.msra.mxu0 0.0
    %2139 = vmatpush.xpose.msra.mxu0 %v2123
    %2140 = vmatpush.xpose.msra.mxu0 %v2121
    %2141 = vmatmul.f32.gmra.mxu0 %v2117
    %v2142 = vpop.f32.mrf.mxu0
    %v2143 = vadd.f32 0.0, %v2142
    %2144 = vmatmul.f32.gmra.mxu0 %v2119
    %v2145 = vpop.f32.mrf.mxu0
    %v2146 = vadd.f32 0.0, %v2145
    %2147 = vdwg.mxu0
    %v2148 = vsel %vm358, %v2143, -inf
    %2149 = vmax.xlane.f32.xlu0 %v2148
    %v2150 = vpop.xlane.xlu0 %2149
    %v2151 = vsel %vm358, %v2146, -inf
    %2152 = vmax.xlane.f32.xlu0 %v2151
    %v2153 = vpop.xlane.xlu0 %2152
    %v2154 = vsub.f32 %v2143, %v2150
    %v2155 = vsub.f32 %v2146, %v2153
    %v2156 = vmul.f32 %v2154, 1.442695
    %v2157 = vpow.pop %v2156
    %v2158 = vmul.f32 %v2155, 1.442695
    %v2159 = vpow.pop %v2158
    %v2160 = vsel %vm358, %v2157, 0.0
    %2161 = vadd.xlane.f32.xlu0 %v2160
    %v2162 = vpop.xlane.xlu0 %2161
    %v2163 = vsel %vm358, %v2159, 0.0
    %2164 = vadd.xlane.f32.xlu0 %v2163
    %v2165 = vpop.xlane.xlu0 %2164
    %v2166 = vrcp.pop %v2162
    %v2167 = vmul.f32 %v2162, %v2166
    %v2168 = vsub.f32 1.0, %v2167
    %v2169 = vmul.f32 %v2166, %v2168
    %v2170 = vadd.f32 %v2166, %v2169
    %vm2171 = vweird.f32 %v2162
    %vm2172 = vweird.f32 %v2166
    %vm2173 = vmor %vm2171, %vm2172
    %v2174 = vsel %vm2173, %v2166, %v2170
    %v2175 = vand.u32 2147483647, %v2162
    %vm2176 = vcmp.eq.f32.partialorder %v2175, 8.507059e+37
    %v2177 = vand.u32 %v2162, 2147483648
    %v2178 = vor.u32 1.1754944e-38, %v2177
    %v2179 = vsel %vm2176, %v2178, %v2174
    %v2180 = vrcp.pop %v2165
    %v2181 = vmul.f32 %v2165, %v2180
    %v2182 = vsub.f32 1.0, %v2181
    %v2183 = vmul.f32 %v2180, %v2182
    %v2184 = vadd.f32 %v2180, %v2183
    %vm2185 = vweird.f32 %v2165
    %vm2186 = vweird.f32 %v2180
    %vm2187 = vmor %vm2185, %vm2186
    %v2188 = vsel %vm2187, %v2180, %v2184
    %v2189 = vand.u32 2147483647, %v2165
    %vm2190 = vcmp.eq.f32.partialorder %v2189, 8.507059e+37
    %v2191 = vand.u32 %v2165, 2147483648
    %v2192 = vor.u32 1.1754944e-38, %v2191
    %v2193 = vsel %vm2190, %v2192, %v2188
    %v2194 = vmul.f32 %v2157, %v2179
    %v2195 = vmul.f32 %v2159, %v2193
    %2198 = vrot.lane.b32.xlu0 %v1738, 96
    %v2199 = vpop.permute.xlu0 %2198
    %2200 = vrot.lane.b32.xlu0 %v1741, 96
    %v2201 = vpop.permute.xlu0 %2200
    %v2205 = vsel %vm358, %v2194, 0
    %v2208 = vsel %vm358, %v2195, 0
    %2210 = vmatpush.msra.mxu0 0.0
    %2211 = vmatpush.msra.mxu0 0.0
    %2212 = vmatpush.msra.mxu0 0.0
    %2213 = vmatpush.msra.mxu0 0.0
    %2214 = vmatpush.msra.mxu0 0.0
    %2215 = vmatpush.msra.mxu0 0.0
    %2216 = vmatpush.msra.mxu0 0.0
    %2217 = vmatpush.msra.mxu0 0.0
    %2218 = vmatpush.msra.mxu0 0.0
    %2219 = vmatpush.msra.mxu0 0.0
    %2220 = vmatpush.msra.mxu0 0.0
    %2221 = vmatpush.msra.mxu0 0.0
    %2222 = vmatpush.msra.mxu0 0.0
    %2223 = vmatpush.msra.mxu0 0.0
    %2224 = vmatpush.msra.mxu0 %v2201
    %2225 = vmatpush.msra.mxu0 %v2199
    %2226 = vmatmul.f32.gmra.mxu0 %v2205
    %v2227 = vpop.f32.mrf.mxu0
    %v2228 = vadd.f32 0.0, %v2227
    %2229 = vmatmul.f32.gmra.mxu0 %v2208
    %v2230 = vpop.f32.mrf.mxu0
    %v2231 = vadd.f32 0.0, %v2230
    %2232 = vdwg.mxu0
    %v2233 = vadd.f32 %v2107, %v2228
    %v2234 = vadd.f32 %v2108, %v2231
    %2237 = vrot.lane.b32.xlu0 %v1715, 96
    %v2238 = vpop.permute.xlu0 %2237
    %2239 = vrot.lane.b32.xlu0 %v1718, 96
    %v2240 = vpop.permute.xlu0 %2239
    %v2241 = vsel %vm326, %v1715, 0
    %v2243 = vsel %vm326, %v1718, 0
    %v2245 = vsel %vm326, %v2238, 0
    %v2247 = vsel %vm326, %v2240, 0
    %2249 = vmatpush.xpose.msra.mxu0 0.0
    %2250 = vmatpush.xpose.msra.mxu0 0.0
    %2251 = vmatpush.xpose.msra.mxu0 0.0
    %2252 = vmatpush.xpose.msra.mxu0 0.0
    %2253 = vmatpush.xpose.msra.mxu0 0.0
    %2254 = vmatpush.xpose.msra.mxu0 0.0
    %2255 = vmatpush.xpose.msra.mxu0 0.0
    %2256 = vmatpush.xpose.msra.mxu0 0.0
    %2257 = vmatpush.xpose.msra.mxu0 0.0
    %2258 = vmatpush.xpose.msra.mxu0 0.0
    %2259 = vmatpush.xpose.msra.mxu0 0.0
    %2260 = vmatpush.xpose.msra.mxu0 0.0
    %2261 = vmatpush.xpose.msra.mxu0 0.0
    %2262 = vmatpush.xpose.msra.mxu0 0.0
    %2263 = vmatpush.xpose.msra.mxu0 %v2247
    %2264 = vmatpush.xpose.msra.mxu0 %v2245
    %2265 = vmatmul.f32.gmra.mxu0 %v2241
    %v2266 = vpop.f32.mrf.mxu0
    %v2267 = vadd.f32 0.0, %v2266
    %2268 = vmatmul.f32.gmra.mxu0 %v2243
    %v2269 = vpop.f32.mrf.mxu0
    %v2270 = vadd.f32 0.0, %v2269
    %2271 = vdwg.mxu0
    %v2272 = vsel %vm358, %v2267, -inf
    %2273 = vmax.xlane.f32.xlu0 %v2272
    %v2274 = vpop.xlane.xlu0 %2273
    %v2275 = vsel %vm358, %v2270, -inf
    %2276 = vmax.xlane.f32.xlu0 %v2275
    %v2277 = vpop.xlane.xlu0 %2276
    %v2278 = vsub.f32 %v2267, %v2274
    %v2279 = vsub.f32 %v2270, %v2277
    %v2280 = vmul.f32 %v2278, 1.442695
    %v2281 = vpow.pop %v2280
    %v2282 = vmul.f32 %v2279, 1.442695
    %v2283 = vpow.pop %v2282
    %v2284 = vsel %vm358, %v2281, 0.0
    %2285 = vadd.xlane.f32.xlu0 %v2284
    %v2286 = vpop.xlane.xlu0 %2285
    %v2287 = vsel %vm358, %v2283, 0.0
    %2288 = vadd.xlane.f32.xlu0 %v2287
    %v2289 = vpop.xlane.xlu0 %2288
    %v2290 = vrcp.pop %v2286
    %v2291 = vmul.f32 %v2286, %v2290
    %v2292 = vsub.f32 1.0, %v2291
    %v2293 = vmul.f32 %v2290, %v2292
    %v2294 = vadd.f32 %v2290, %v2293
    %vm2295 = vweird.f32 %v2286
    %vm2296 = vweird.f32 %v2290
    %vm2297 = vmor %vm2295, %vm2296
    %v2298 = vsel %vm2297, %v2290, %v2294
    %v2299 = vand.u32 2147483647, %v2286
    %vm2300 = vcmp.eq.f32.partialorder %v2299, 8.507059e+37
    %v2301 = vand.u32 %v2286, 2147483648
    %v2302 = vor.u32 1.1754944e-38, %v2301
    %v2303 = vsel %vm2300, %v2302, %v2298
    %v2304 = vrcp.pop %v2289
    %v2305 = vmul.f32 %v2289, %v2304
    %v2306 = vsub.f32 1.0, %v2305
    %v2307 = vmul.f32 %v2304, %v2306
    %v2308 = vadd.f32 %v2304, %v2307
    %vm2309 = vweird.f32 %v2289
    %vm2310 = vweird.f32 %v2304
    %vm2311 = vmor %vm2309, %vm2310
    %v2312 = vsel %vm2311, %v2304, %v2308
    %v2313 = vand.u32 2147483647, %v2289
    %vm2314 = vcmp.eq.f32.partialorder %v2313, 8.507059e+37
    %v2315 = vand.u32 %v2289, 2147483648
    %v2316 = vor.u32 1.1754944e-38, %v2315
    %v2317 = vsel %vm2314, %v2316, %v2312
    %v2318 = vmul.f32 %v2281, %v2303
    %v2319 = vmul.f32 %v2283, %v2317
    %2320 = vrot.lane.b32.xlu0 %v1715, 120
    %v2321 = vpop.permute.xlu0 %2320
    %2322 = vrot.lane.b32.xlu0 %v1718, 120
    %v2323 = vpop.permute.xlu0 %2322
    %2324 = vrot.lane.b32.xlu0 %v1715, 88
    %v2325 = vpop.permute.xlu0 %2324
    %2326 = vrot.lane.b32.xlu0 %v1718, 88
    %v2327 = vpop.permute.xlu0 %2326
    %v2328 = vsel %vm326, %v2321, 0
    %v2330 = vsel %vm326, %v2323, 0
    %v2332 = vsel %vm326, %v2325, 0
    %v2334 = vsel %vm326, %v2327, 0
    %2336 = vmatpush.xpose.msra.mxu0 0.0
    %2337 = vmatpush.xpose.msra.mxu0 0.0
    %2338 = vmatpush.xpose.msra.mxu0 0.0
    %2339 = vmatpush.xpose.msra.mxu0 0.0
    %2340 = vmatpush.xpose.msra.mxu0 0.0
    %2341 = vmatpush.xpose.msra.mxu0 0.0
    %2342 = vmatpush.xpose.msra.mxu0 0.0
    %2343 = vmatpush.xpose.msra.mxu0 0.0
    %2344 = vmatpush.xpose.msra.mxu0 0.0
    %2345 = vmatpush.xpose.msra.mxu0 0.0
    %2346 = vmatpush.xpose.msra.mxu0 0.0
    %2347 = vmatpush.xpose.msra.mxu0 0.0
    %2348 = vmatpush.xpose.msra.mxu0 0.0
    %2349 = vmatpush.xpose.msra.mxu0 0.0
    %2350 = vmatpush.xpose.msra.mxu0 %v2334
    %2351 = vmatpush.xpose.msra.mxu0 %v2332
    %2352 = vmatmul.f32.gmra.mxu0 %v2328
    %v2353 = vpop.f32.mrf.mxu0
    %v2354 = vadd.f32 0.0, %v2353
    %2355 = vmatmul.f32.gmra.mxu0 %v2330
    %v2356 = vpop.f32.mrf.mxu0
    %v2357 = vadd.f32 0.0, %v2356
    %2358 = vdwg.mxu0
    %v2359 = vsel %vm358, %v2354, -inf
    %2360 = vmax.xlane.f32.xlu0 %v2359
    %v2361 = vpop.xlane.xlu0 %2360
    %v2362 = vsel %vm358, %v2357, -inf
    %2363 = vmax.xlane.f32.xlu0 %v2362
    %v2364 = vpop.xlane.xlu0 %2363
    %v2365 = vsub.f32 %v2354, %v2361
    %v2366 = vsub.f32 %v2357, %v2364
    %v2367 = vmul.f32 %v2365, 1.442695
    %v2368 = vpow.pop %v2367
    %v2369 = vmul.f32 %v2366, 1.442695
    %v2370 = vpow.pop %v2369
    %v2371 = vsel %vm358, %v2368, 0.0
    %2372 = vadd.xlane.f32.xlu0 %v2371
    %v2373 = vpop.xlane.xlu0 %2372
    %v2374 = vsel %vm358, %v2370, 0.0
    %2375 = vadd.xlane.f32.xlu0 %v2374
    %v2376 = vpop.xlane.xlu0 %2375
    %v2377 = vrcp.pop %v2373
    %v2378 = vmul.f32 %v2373, %v2377
    %v2379 = vsub.f32 1.0, %v2378
    %v2380 = vmul.f32 %v2377, %v2379
    %v2381 = vadd.f32 %v2377, %v2380
    %vm2382 = vweird.f32 %v2373
    %vm2383 = vweird.f32 %v2377
    %vm2384 = vmor %vm2382, %vm2383
    %v2385 = vsel %vm2384, %v2377, %v2381
    %v2386 = vand.u32 2147483647, %v2373
    %vm2387 = vcmp.eq.f32.partialorder %v2386, 8.507059e+37
    %v2388 = vand.u32 %v2373, 2147483648
    %v2389 = vor.u32 1.1754944e-38, %v2388
    %v2390 = vsel %vm2387, %v2389, %v2385
    %v2391 = vrcp.pop %v2376
    %v2392 = vmul.f32 %v2376, %v2391
    %v2393 = vsub.f32 1.0, %v2392
    %v2394 = vmul.f32 %v2391, %v2393
    %v2395 = vadd.f32 %v2391, %v2394
    %vm2396 = vweird.f32 %v2376
    %vm2397 = vweird.f32 %v2391
    %vm2398 = vmor %vm2396, %vm2397
    %v2399 = vsel %vm2398, %v2391, %v2395
    %v2400 = vand.u32 2147483647, %v2376
    %vm2401 = vcmp.eq.f32.partialorder %v2400, 8.507059e+37
    %v2402 = vand.u32 %v2376, 2147483648
    %v2403 = vor.u32 1.1754944e-38, %v2402
    %v2404 = vsel %vm2401, %v2403, %v2399
    %v2405 = vmul.f32 %v2368, %v2390
    %v2406 = vmul.f32 %v2370, %v2404
    %2407 = vrot.lane.b32.xlu0 %v1715, 32
    %v2408 = vpop.permute.xlu0 %2407
    %2409 = vrot.lane.b32.xlu0 %v1718, 32
    %v2410 = vpop.permute.xlu0 %2409
    %v2414 = vsel %vm358, %v2405, 0
    %v2417 = vsel %vm358, %v2406, 0
    %2419 = vmatpush.msra.mxu0 0.0
    %2420 = vmatpush.msra.mxu0 0.0
    %2421 = vmatpush.msra.mxu0 0.0
    %2422 = vmatpush.msra.mxu0 0.0
    %2423 = vmatpush.msra.mxu0 0.0
    %2424 = vmatpush.msra.mxu0 0.0
    %2425 = vmatpush.msra.mxu0 0.0
    %2426 = vmatpush.msra.mxu0 0.0
    %2427 = vmatpush.msra.mxu0 0.0
    %2428 = vmatpush.msra.mxu0 0.0
    %2429 = vmatpush.msra.mxu0 0.0
    %2430 = vmatpush.msra.mxu0 0.0
    %2431 = vmatpush.msra.mxu0 0.0
    %2432 = vmatpush.msra.mxu0 0.0
    %2433 = vmatpush.msra.mxu0 %v2410
    %2434 = vmatpush.msra.mxu0 %v2408
    %2435 = vmatmul.f32.gmra.mxu0 %v2414
    %v2436 = vpop.f32.mrf.mxu0
    %v2437 = vadd.f32 0.0, %v2436
    %2438 = vmatmul.f32.gmra.mxu0 %v2417
    %v2439 = vpop.f32.mrf.mxu0
    %v2440 = vadd.f32 0.0, %v2439
    %2441 = vdwg.mxu0
    %2442 = vrot.lane.b32.xlu0 %v1715, 64
    %v2443 = vpop.permute.xlu0 %2442
    %2444 = vrot.lane.b32.xlu0 %v1718, 64
    %v2445 = vpop.permute.xlu0 %2444
    %v2449 = vsel %vm358, %v2318, 0
    %v2452 = vsel %vm358, %v2319, 0
    %2454 = vmatpush.msra.mxu0 0.0
    %2455 = vmatpush.msra.mxu0 0.0
    %2456 = vmatpush.msra.mxu0 0.0
    %2457 = vmatpush.msra.mxu0 0.0
    %2458 = vmatpush.msra.mxu0 0.0
    %2459 = vmatpush.msra.mxu0 0.0
    %2460 = vmatpush.msra.mxu0 0.0
    %2461 = vmatpush.msra.mxu0 0.0
    %2462 = vmatpush.msra.mxu0 0.0
    %2463 = vmatpush.msra.mxu0 0.0
    %2464 = vmatpush.msra.mxu0 0.0
    %2465 = vmatpush.msra.mxu0 0.0
    %2466 = vmatpush.msra.mxu0 0.0
    %2467 = vmatpush.msra.mxu0 0.0
    %2468 = vmatpush.msra.mxu0 %v2445
    %2469 = vmatpush.msra.mxu0 %v2443
    %2470 = vmatmul.f32.gmra.mxu0 %v2449
    %v2471 = vpop.f32.mrf.mxu0
    %v2472 = vadd.f32 %v2437, %v2471
    %2473 = vmatmul.f32.gmra.mxu0 %v2452
    %v2474 = vpop.f32.mrf.mxu0
    %v2475 = vadd.f32 %v2440, %v2474
    %2476 = vdwg.mxu0
    %2477 = vrot.lane.b32.xlu0 %v1715, 112
    %v2478 = vpop.permute.xlu0 %2477
    %2479 = vrot.lane.b32.xlu0 %v1718, 112
    %v2480 = vpop.permute.xlu0 %2479
    %2481 = vrot.lane.b32.xlu0 %v1715, 80
    %v2482 = vpop.permute.xlu0 %2481
    %2483 = vrot.lane.b32.xlu0 %v1718, 80
    %v2484 = vpop.permute.xlu0 %2483
    %v2485 = vsel %vm326, %v2478, 0
    %v2487 = vsel %vm326, %v2480, 0
    %v2489 = vsel %vm326, %v2482, 0
    %v2491 = vsel %vm326, %v2484, 0
    %2493 = vmatpush.xpose.msra.mxu0 0.0
    %2494 = vmatpush.xpose.msra.mxu0 0.0
    %2495 = vmatpush.xpose.msra.mxu0 0.0
    %2496 = vmatpush.xpose.msra.mxu0 0.0
    %2497 = vmatpush.xpose.msra.mxu0 0.0
    %2498 = vmatpush.xpose.msra.mxu0 0.0
    %2499 = vmatpush.xpose.msra.mxu0 0.0
    %2500 = vmatpush.xpose.msra.mxu0 0.0
    %2501 = vmatpush.xpose.msra.mxu0 0.0
    %2502 = vmatpush.xpose.msra.mxu0 0.0
    %2503 = vmatpush.xpose.msra.mxu0 0.0
    %2504 = vmatpush.xpose.msra.mxu0 0.0
    %2505 = vmatpush.xpose.msra.mxu0 0.0
    %2506 = vmatpush.xpose.msra.mxu0 0.0
    %2507 = vmatpush.xpose.msra.mxu0 %v2491
    %2508 = vmatpush.xpose.msra.mxu0 %v2489
    %2509 = vmatmul.f32.gmra.mxu0 %v2485
    %v2510 = vpop.f32.mrf.mxu0
    %v2511 = vadd.f32 0.0, %v2510
    %2512 = vmatmul.f32.gmra.mxu0 %v2487
    %v2513 = vpop.f32.mrf.mxu0
    %v2514 = vadd.f32 0.0, %v2513
    %2515 = vdwg.mxu0
    %v2516 = vsel %vm358, %v2511, -inf
    %2517 = vmax.xlane.f32.xlu0 %v2516
    %v2518 = vpop.xlane.xlu0 %2517
    %v2519 = vsel %vm358, %v2514, -inf
    %2520 = vmax.xlane.f32.xlu0 %v2519
    %v2521 = vpop.xlane.xlu0 %2520
    %v2522 = vsub.f32 %v2511, %v2518
    %v2523 = vsub.f32 %v2514, %v2521
    %v2524 = vmul.f32 %v2522, 1.442695
    %v2525 = vpow.pop %v2524
    %v2526 = vmul.f32 %v2523, 1.442695
    %v2527 = vpow.pop %v2526
    %v2528 = vsel %vm358, %v2525, 0.0
    %2529 = vadd.xlane.f32.xlu0 %v2528
    %v2530 = vpop.xlane.xlu0 %2529
    %v2531 = vsel %vm358, %v2527, 0.0
    %2532 = vadd.xlane.f32.xlu0 %v2531
    %v2533 = vpop.xlane.xlu0 %2532
    %v2534 = vrcp.pop %v2530
    %v2535 = vmul.f32 %v2530, %v2534
    %v2536 = vsub.f32 1.0, %v2535
    %v2537 = vmul.f32 %v2534, %v2536
    %v2538 = vadd.f32 %v2534, %v2537
    %vm2539 = vweird.f32 %v2530
    %vm2540 = vweird.f32 %v2534
    %vm2541 = vmor %vm2539, %vm2540
    %v2542 = vsel %vm2541, %v2534, %v2538
    %v2543 = vand.u32 2147483647, %v2530
    %vm2544 = vcmp.eq.f32.partialorder %v2543, 8.507059e+37
    %v2545 = vand.u32 %v2530, 2147483648
    %v2546 = vor.u32 1.1754944e-38, %v2545
    %v2547 = vsel %vm2544, %v2546, %v2542
    %v2548 = vrcp.pop %v2533
    %v2549 = vmul.f32 %v2533, %v2548
    %v2550 = vsub.f32 1.0, %v2549
    %v2551 = vmul.f32 %v2548, %v2550
    %v2552 = vadd.f32 %v2548, %v2551
    %vm2553 = vweird.f32 %v2533
    %vm2554 = vweird.f32 %v2548
    %vm2555 = vmor %vm2553, %vm2554
    %v2556 = vsel %vm2555, %v2548, %v2552
    %v2557 = vand.u32 2147483647, %v2533
    %vm2558 = vcmp.eq.f32.partialorder %v2557, 8.507059e+37
    %v2559 = vand.u32 %v2533, 2147483648
    %v2560 = vor.u32 1.1754944e-38, %v2559
    %v2561 = vsel %vm2558, %v2560, %v2556
    %v2562 = vmul.f32 %v2525, %v2547
    %v2563 = vmul.f32 %v2527, %v2561
    %v2565 = vsel %vm358, %v2562, 0
    %v2568 = vsel %vm358, %v2563, 0
    %2570 = vmatpush.msra.mxu0 0.0
    %2571 = vmatpush.msra.mxu0 0.0
    %2572 = vmatpush.msra.mxu0 0.0
    %2573 = vmatpush.msra.mxu0 0.0
    %2574 = vmatpush.msra.mxu0 0.0
    %2575 = vmatpush.msra.mxu0 0.0
    %2576 = vmatpush.msra.mxu0 0.0
    %2577 = vmatpush.msra.mxu0 0.0
    %2578 = vmatpush.msra.mxu0 0.0
    %2579 = vmatpush.msra.mxu0 0.0
    %2580 = vmatpush.msra.mxu0 0.0
    %2581 = vmatpush.msra.mxu0 0.0
    %2582 = vmatpush.msra.mxu0 0.0
    %2583 = vmatpush.msra.mxu0 0.0
    %2584 = vmatpush.msra.mxu0 %v1747
    %2585 = vmatpush.msra.mxu0 %v1744
    %2586 = vmatmul.f32.gmra.mxu0 %v2565
    %v2587 = vpop.f32.mrf.mxu0
    %v2588 = vadd.f32 0.0, %v2587
    %2589 = vmatmul.f32.gmra.mxu0 %v2568
    %v2590 = vpop.f32.mrf.mxu0
    %v2591 = vadd.f32 0.0, %v2590
    %2592 = vdwg.mxu0
    %v2593 = vadd.f32 %v2472, %v2588
    %v2594 = vadd.f32 %v2475, %v2591
    %2595 = vrot.lane.b32.xlu0 %v1715, 104
    %v2596 = vpop.permute.xlu0 %2595
    %2597 = vrot.lane.b32.xlu0 %v1718, 104
    %v2598 = vpop.permute.xlu0 %2597
    %2599 = vrot.lane.b32.xlu0 %v1715, 72
    %v2600 = vpop.permute.xlu0 %2599
    %2601 = vrot.lane.b32.xlu0 %v1718, 72
    %v2602 = vpop.permute.xlu0 %2601
    %v2603 = vsel %vm326, %v2596, 0
    %v2605 = vsel %vm326, %v2598, 0
    %v2607 = vsel %vm326, %v2600, 0
    %v2609 = vsel %vm326, %v2602, 0
    %2611 = vmatpush.xpose.msra.mxu0 0.0
    %2612 = vmatpush.xpose.msra.mxu0 0.0
    %2613 = vmatpush.xpose.msra.mxu0 0.0
    %2614 = vmatpush.xpose.msra.mxu0 0.0
    %2615 = vmatpush.xpose.msra.mxu0 0.0
    %2616 = vmatpush.xpose.msra.mxu0 0.0
    %2617 = vmatpush.xpose.msra.mxu0 0.0
    %2618 = vmatpush.xpose.msra.mxu0 0.0
    %2619 = vmatpush.xpose.msra.mxu0 0.0
    %2620 = vmatpush.xpose.msra.mxu0 0.0
    %2621 = vmatpush.xpose.msra.mxu0 0.0
    %2622 = vmatpush.xpose.msra.mxu0 0.0
    %2623 = vmatpush.xpose.msra.mxu0 0.0
    %2624 = vmatpush.xpose.msra.mxu0 0.0
    %2625 = vmatpush.xpose.msra.mxu0 %v2609
    %2626 = vmatpush.xpose.msra.mxu0 %v2607
    %2627 = vmatmul.f32.gmra.mxu0 %v2603
    %v2628 = vpop.f32.mrf.mxu0
    %v2629 = vadd.f32 0.0, %v2628
    %2630 = vmatmul.f32.gmra.mxu0 %v2605
    %v2631 = vpop.f32.mrf.mxu0
    %v2632 = vadd.f32 0.0, %v2631
    %2633 = vdwg.mxu0
    %v2634 = vsel %vm358, %v2629, -inf
    %2635 = vmax.xlane.f32.xlu0 %v2634
    %v2636 = vpop.xlane.xlu0 %2635
    %v2637 = vsel %vm358, %v2632, -inf
    %2638 = vmax.xlane.f32.xlu0 %v2637
    %v2639 = vpop.xlane.xlu0 %2638
    %v2640 = vsub.f32 %v2629, %v2636
    %v2641 = vsub.f32 %v2632, %v2639
    %v2642 = vmul.f32 %v2640, 1.442695
    %v2643 = vpow.pop %v2642
    %v2644 = vmul.f32 %v2641, 1.442695
    %v2645 = vpow.pop %v2644
    %v2646 = vsel %vm358, %v2643, 0.0
    %2647 = vadd.xlane.f32.xlu0 %v2646
    %v2648 = vpop.xlane.xlu0 %2647
    %v2649 = vsel %vm358, %v2645, 0.0
    %2650 = vadd.xlane.f32.xlu0 %v2649
    %v2651 = vpop.xlane.xlu0 %2650
    %v2652 = vrcp.pop %v2648
    %v2653 = vmul.f32 %v2648, %v2652
    %v2654 = vsub.f32 1.0, %v2653
    %v2655 = vmul.f32 %v2652, %v2654
    %v2656 = vadd.f32 %v2652, %v2655
    %vm2657 = vweird.f32 %v2648
    %vm2658 = vweird.f32 %v2652
    %vm2659 = vmor %vm2657, %vm2658
    %v2660 = vsel %vm2659, %v2652, %v2656
    %v2661 = vand.u32 2147483647, %v2648
    %vm2662 = vcmp.eq.f32.partialorder %v2661, 8.507059e+37
    %v2663 = vand.u32 %v2648, 2147483648
    %v2664 = vor.u32 1.1754944e-38, %v2663
    %v2665 = vsel %vm2662, %v2664, %v2660
    %v2666 = vrcp.pop %v2651
    %v2667 = vmul.f32 %v2651, %v2666
    %v2668 = vsub.f32 1.0, %v2667
    %v2669 = vmul.f32 %v2666, %v2668
    %v2670 = vadd.f32 %v2666, %v2669
    %vm2671 = vweird.f32 %v2651
    %vm2672 = vweird.f32 %v2666
    %vm2673 = vmor %vm2671, %vm2672
    %v2674 = vsel %vm2673, %v2666, %v2670
    %v2675 = vand.u32 2147483647, %v2651
    %vm2676 = vcmp.eq.f32.partialorder %v2675, 8.507059e+37
    %v2677 = vand.u32 %v2651, 2147483648
    %v2678 = vor.u32 1.1754944e-38, %v2677
    %v2679 = vsel %vm2676, %v2678, %v2674
    %v2680 = vmul.f32 %v2643, %v2665
    %v2681 = vmul.f32 %v2645, %v2679
    %2684 = vrot.lane.b32.xlu0 %v1744, 96
    %v2685 = vpop.permute.xlu0 %2684
    %2686 = vrot.lane.b32.xlu0 %v1747, 96
    %v2687 = vpop.permute.xlu0 %2686
    %v2691 = vsel %vm358, %v2680, 0
    %v2694 = vsel %vm358, %v2681, 0
    %2696 = vmatpush.msra.mxu0 0.0
    %2697 = vmatpush.msra.mxu0 0.0
    %2698 = vmatpush.msra.mxu0 0.0
    %2699 = vmatpush.msra.mxu0 0.0
    %2700 = vmatpush.msra.mxu0 0.0
    %2701 = vmatpush.msra.mxu0 0.0
    %2702 = vmatpush.msra.mxu0 0.0
    %2703 = vmatpush.msra.mxu0 0.0
    %2704 = vmatpush.msra.mxu0 0.0
    %2705 = vmatpush.msra.mxu0 0.0
    %2706 = vmatpush.msra.mxu0 0.0
    %2707 = vmatpush.msra.mxu0 0.0
    %2708 = vmatpush.msra.mxu0 0.0
    %2709 = vmatpush.msra.mxu0 0.0
    %2710 = vmatpush.msra.mxu0 %v2687
    %2711 = vmatpush.msra.mxu0 %v2685
    %2712 = vmatmul.f32.gmra.mxu0 %v2691
    %v2713 = vpop.f32.mrf.mxu0
    %v2714 = vadd.f32 0.0, %v2713
    %2715 = vmatmul.f32.gmra.mxu0 %v2694
    %v2716 = vpop.f32.mrf.mxu0
    %v2717 = vadd.f32 0.0, %v2716
    %2718 = vdwg.mxu0
    %v2719 = vadd.f32 %v2593, %v2714
    %v2720 = vadd.f32 %v2594, %v2717
    %v2721 = vadd.f32 %v1553, %v2233
    %v2722 = vadd.f32 %v1554, %v2234
    %v2723 = vadd.f32 %v1555, %v2719
    %v2724 = vadd.f32 %v1556, %v2720
    %s2725 = scalar_lea.vmem [#allocation8], 1
    %v2726 = vld [vmem:[%s2725] sm:$0x1]
    %v2728 = vperm.slane %v2726, 0
    %v2730 = vadd.f32 %v2721, %v2728
    %v2731 = vadd.f32 %v2722, %v2728
    %v2732 = vadd.f32 %v2723, %v2728
    %v2733 = vadd.f32 %v2724, %v2728
    %s2734 = scalar_lea.vmem %s6, 1
    %v2735 = vld [vmem:[%s2734] sm:$0x1]
    %s2736 = scalar_lea.vmem [#allocation10], 1
    %v2737 = vld [vmem:[%s2736] sm:$0x1]
    %v2738 = vsel %vm126, %v2730, 0.0
    %2739 = vadd.xlane.f32.xlu0 %v2738
    %v2740 = vpop.xlane.xlu0 %2739
    %v2741 = vsel %vm126, %v2731, 0.0
    %2742 = vadd.xlane.f32.xlu0 %v2741
    %v2743 = vpop.xlane.xlu0 %2742
    %v2744 = vsel %vm126, %v2732, 0.0
    %2745 = vadd.xlane.f32.xlu0 %v2744
    %v2746 = vpop.xlane.xlu0 %2745
    %v2747 = vsel %vm126, %v2733, 0.0
    %2748 = vadd.xlane.f32.xlu0 %v2747
    %v2749 = vpop.xlane.xlu0 %2748
    %v2750 = vmul.f32 %v2740, %v145
    %v2751 = vmul.f32 %v2743, %v145
    %v2752 = vmul.f32 %v2746, %v145
    %v2753 = vmul.f32 %v2749, %v145
    %v2754 = vsub.f32 %v2730, %v2750
    %v2755 = vsub.f32 %v2731, %v2751
    %v2756 = vsub.f32 %v2732, %v2752
    %v2757 = vsub.f32 %v2733, %v2753
    %v2758 = vmul.f32 %v2754, %v2754
    %v2759 = vmul.f32 %v2755, %v2755
    %v2760 = vmul.f32 %v2756, %v2756
    %v2761 = vmul.f32 %v2757, %v2757
    %v2762 = vsel %vm126, %v2758, 0.0
    %2763 = vadd.xlane.f32.xlu0 %v2762
    %v2764 = vpop.xlane.xlu0 %2763
    %v2765 = vsel %vm126, %v2759, 0.0
    %2766 = vadd.xlane.f32.xlu0 %v2765
    %v2767 = vpop.xlane.xlu0 %2766
    %v2768 = vsel %vm126, %v2760, 0.0
    %2769 = vadd.xlane.f32.xlu0 %v2768
    %v2770 = vpop.xlane.xlu0 %2769
    %v2771 = vsel %vm126, %v2761, 0.0
    %2772 = vadd.xlane.f32.xlu0 %v2771
    %v2773 = vpop.xlane.xlu0 %2772
    %v2774 = vmul.f32 %v2764, %v145
    %v2775 = vmul.f32 %v2767, %v145
    %v2776 = vmul.f32 %v2770, %v145
    %v2777 = vmul.f32 %v2773, %v145
    %v2778 = vadd.f32 %v2774, 1e-05
    %v2779 = vadd.f32 %v2775, 1e-05
    %v2780 = vadd.f32 %v2776, 1e-05
    %v2781 = vadd.f32 %v2777, 1e-05
    %v2782 = vrsqrt.pop %v2778
    %v2783 = vmul.f32 %v2782, %v2778
    %v2784 = vmul.f32 %v2783, %v2782
    %v2785 = vmul.f32 0.5, %v2784
    %v2786 = vsub.f32 1.5, %v2785
    %v2787 = vmul.f32 %v2782, %v2786
    %vm2788 = vweird.f32 %v2778
    %vm2789 = vweird.f32 %v2782
    %vm2790 = vmor %vm2788, %vm2789
    %v2791 = vsel %vm2790, %v2782, %v2787
    %v2792 = vrsqrt.pop %v2779
    %v2793 = vmul.f32 %v2792, %v2779
    %v2794 = vmul.f32 %v2793, %v2792
    %v2795 = vmul.f32 0.5, %v2794
    %v2796 = vsub.f32 1.5, %v2795
    %v2797 = vmul.f32 %v2792, %v2796
    %vm2798 = vweird.f32 %v2779
    %vm2799 = vweird.f32 %v2792
    %vm2800 = vmor %vm2798, %vm2799
    %v2801 = vsel %vm2800, %v2792, %v2797
    %v2802 = vrsqrt.pop %v2780
    %v2803 = vmul.f32 %v2802, %v2780
    %v2804 = vmul.f32 %v2803, %v2802
    %v2805 = vmul.f32 0.5, %v2804
    %v2806 = vsub.f32 1.5, %v2805
    %v2807 = vmul.f32 %v2802, %v2806
    %vm2808 = vweird.f32 %v2780
    %vm2809 = vweird.f32 %v2802
    %vm2810 = vmor %vm2808, %vm2809
    %v2811 = vsel %vm2810, %v2802, %v2807
    %v2812 = vrsqrt.pop %v2781
    %v2813 = vmul.f32 %v2812, %v2781
    %v2814 = vmul.f32 %v2813, %v2812
    %v2815 = vmul.f32 0.5, %v2814
    %v2816 = vsub.f32 1.5, %v2815
    %v2817 = vmul.f32 %v2812, %v2816
    %vm2818 = vweird.f32 %v2781
    %vm2819 = vweird.f32 %v2812
    %vm2820 = vmor %vm2818, %vm2819
    %v2821 = vsel %vm2820, %v2812, %v2817
    %v2822 = vmul.f32 %v2754, %v2791
    %v2823 = vmul.f32 %v2755, %v2801
    %v2824 = vmul.f32 %v2756, %v2811
    %v2825 = vmul.f32 %v2757, %v2821
    %v2827 = vperm.slane %v2735, 0
    %v2829 = vmul.f32 %v2822, %v2827
    %v2830 = vmul.f32 %v2823, %v2827
    %v2831 = vmul.f32 %v2824, %v2827
    %v2832 = vmul.f32 %v2825, %v2827
    %v2834 = vperm.slane %v2737, 0
    %v2836 = vadd.f32 %v2829, %v2834
    %v2837 = vadd.f32 %v2830, %v2834
    %v2838 = vadd.f32 %v2831, %v2834
    %v2839 = vadd.f32 %v2832, %v2834
    %s2840 = scalar_lea.vmem %s8, 32
    %v2841 = vld [vmem:[%s2840] sm:$0xff]
    %v2842 = vld [vmem:[%s2840 + $0x8] sm:$0xff]
    %v2843 = vld [vmem:[%s2840 + $0x10] sm:$0xff]
    %v2844 = vld [vmem:[%s2840 + $0x18] sm:$0xff]
    %s2845 = scalar_lea.vmem %s9, 1
    %v2846 = vld [vmem:[%s2845] sm:$0x1]
    %v2848 = vperm.slane %v2846, 0
    %v2851 = vsel %vm126, %v2836, 0
    %v2854 = vsel %vm126, %v2837, 0
    %v2857 = vsel %vm126, %v2838, 0
    %v2860 = vsel %vm126, %v2839, 0
    %2862 = vmatpush.msra.mxu0 0.0
    %2863 = vmatpush.msra.mxu0 0.0
    %2864 = vmatpush.msra.mxu0 0.0
    %2865 = vmatpush.msra.mxu0 0.0
    %2866 = vmatpush.msra.mxu0 0.0
    %2867 = vmatpush.msra.mxu0 0.0
    %2868 = vmatpush.msra.mxu0 0.0
    %2869 = vmatpush.msra.mxu0 0.0
    %2870 = vmatpush.msra.mxu0 0.0
    %2871 = vmatpush.msra.mxu0 0.0
    %2872 = vmatpush.msra.mxu0 0.0
    %2873 = vmatpush.msra.mxu0 0.0
    %2874 = vmatpush.msra.mxu0 %v2844
    %2875 = vmatpush.msra.mxu0 %v2843
    %2876 = vmatpush.msra.mxu0 %v2842
    %2877 = vmatpush.msra.mxu0 %v2841
    %2878 = vmatmul.f32.gmra.mxu0 %v2851
    %v2879 = vpop.f32.mrf.mxu0
    %v2880 = vadd.f32 %v2848, %v2879
    %2881 = vmatmul.f32.gmra.mxu0 %v2854
    %v2882 = vpop.f32.mrf.mxu0
    %v2883 = vadd.f32 %v2848, %v2882
    %2884 = vmatmul.f32.gmra.mxu0 %v2857
    %v2885 = vpop.f32.mrf.mxu0
    %v2886 = vadd.f32 %v2848, %v2885
    %2887 = vmatmul.f32.gmra.mxu0 %v2860
    %v2888 = vpop.f32.mrf.mxu0
    %v2889 = vadd.f32 %v2848, %v2888
    %2890 = vdwg.mxu0
    %v2891 = vmul.f32 %v2880, 0.5
    %v2892 = vmul.f32 %v2883, 0.5
    %v2893 = vmul.f32 %v2886, 0.5
    %v2894 = vmul.f32 %v2889, 0.5
    %v2895 = vmul.f32 %v2880, 0.044715
    %v2896 = vmul.f32 %v2883, 0.044715
    %v2897 = vmul.f32 %v2886, 0.044715
    %v2898 = vmul.f32 %v2889, 0.044715
    %v2899 = vmul.f32 %v2895, %v2880
    %v2900 = vmul.f32 %v2896, %v2883
    %v2901 = vmul.f32 %v2897, %v2886
    %v2902 = vmul.f32 %v2898, %v2889
    %v2903 = vmul.f32 %v2899, %v2880
    %v2904 = vmul.f32 %v2900, %v2883
    %v2905 = vmul.f32 %v2901, %v2886
    %v2906 = vmul.f32 %v2902, %v2889
    %v2907 = vadd.f32 %v2880, %v2903
    %v2908 = vadd.f32 %v2883, %v2904
    %v2909 = vadd.f32 %v2886, %v2905
    %v2910 = vadd.f32 %v2889, %v2906
    %v2911 = vmul.f32 %v2907, 0.7978846
    %v2912 = vmul.f32 %v2908, 0.7978846
    %v2913 = vmul.f32 %v2909, 0.7978846
    %v2914 = vmul.f32 %v2910, 0.7978846
    %v2915 = vtanh.pop %v2911
    %v2916 = vtanh.pop %v2912
    %v2917 = vtanh.pop %v2913
    %v2918 = vtanh.pop %v2914
    %v2919 = vadd.f32 %v2915, 1.0
    %v2920 = vadd.f32 %v2916, 1.0
    %v2921 = vadd.f32 %v2917, 1.0
    %v2922 = vadd.f32 %v2918, 1.0
    %v2923 = vmul.f32 %v2891, %v2919
    %v2924 = vmul.f32 %v2892, %v2920
    %v2925 = vmul.f32 %v2893, %v2921
    %v2926 = vmul.f32 %v2894, %v2922
    %s2927 = scalar_lea.vmem %s10, 64
    %v2928 = vld [vmem:[%s2927] sm:$0xff]
    %v2929 = vld [vmem:[%s2927 + $0x8] sm:$0xff]
    %v2930 = vld [vmem:[%s2927 + $0x10] sm:$0xff]
    %v2931 = vld [vmem:[%s2927 + $0x18] sm:$0xff]
    %v2932 = vld [vmem:[%s2927 + $0x20] sm:$0xff]
    %v2933 = vld [vmem:[%s2927 + $0x28] sm:$0xff]
    %v2934 = vld [vmem:[%s2927 + $0x30] sm:$0xff]
    %v2935 = vld [vmem:[%s2927 + $0x38] sm:$0xff]
    %v2937 = vsel %vm1503, %v2923, 0
    %v2940 = vsel %vm1503, %v2924, 0
    %v2943 = vsel %vm1503, %v2925, 0
    %v2946 = vsel %vm1503, %v2926, 0
    %2948 = vmatpush.msra.mxu0 0.0
    %2949 = vmatpush.msra.mxu0 0.0
    %2950 = vmatpush.msra.mxu0 0.0
    %2951 = vmatpush.msra.mxu0 0.0
    %2952 = vmatpush.msra.mxu0 0.0
    %2953 = vmatpush.msra.mxu0 0.0
    %2954 = vmatpush.msra.mxu0 0.0
    %2955 = vmatpush.msra.mxu0 0.0
    %2956 = vmatpush.msra.mxu0 %v2935
    %2957 = vmatpush.msra.mxu0 %v2934
    %2958 = vmatpush.msra.mxu0 %v2933
    %2959 = vmatpush.msra.mxu0 %v2932
    %2960 = vmatpush.msra.mxu0 %v2931
    %2961 = vmatpush.msra.mxu0 %v2930
    %2962 = vmatpush.msra.mxu0 %v2929
    %2963 = vmatpush.msra.mxu0 %v2928
    %2964 = vmatmul.f32.gmra.mxu0 %v2937
    %v2965 = vpop.f32.mrf.mxu0
    %v2966 = vadd.f32 0.0, %v2965
    %2967 = vmatmul.f32.gmra.mxu0 %v2940
    %v2968 = vpop.f32.mrf.mxu0
    %v2969 = vadd.f32 0.0, %v2968
    %2970 = vmatmul.f32.gmra.mxu0 %v2943
    %v2971 = vpop.f32.mrf.mxu0
    %v2972 = vadd.f32 0.0, %v2971
    %2973 = vmatmul.f32.gmra.mxu0 %v2946
    %v2974 = vpop.f32.mrf.mxu0
    %v2975 = vadd.f32 0.0, %v2974
    %2976 = vdwg.mxu0
    %v2977 = vadd.f32 %v2730, %v2966
    %v2978 = vadd.f32 %v2731, %v2969
    %v2979 = vadd.f32 %v2732, %v2972
    %v2980 = vadd.f32 %v2733, %v2975
    %s2981 = scalar_lea.vmem %s11, 1
    %v2982 = vld [vmem:[%s2981] sm:$0x1]
    %v2984 = vperm.slane %v2982, 0
    %v2986 = vadd.f32 %v2977, %v2984
    %v2987 = vadd.f32 %v2978, %v2984
    %v2988 = vadd.f32 %v2979, %v2984
    %v2989 = vadd.f32 %v2980, %v2984
    %2990 = vst.msk [vmem:[#allocation11] sm:$0xff] %vm126, %v2986
    %2991 = vst.msk [vmem:[#allocation11 + $0x8] sm:$0xff] %vm126, %v2987
    %2992 = vst.msk [vmem:[#allocation11 + $0x10] sm:$0xff] %vm126, %v2988
    %2993 = vst.msk [vmem:[#allocation11 + $0x18] sm:$0xff] %vm126, %v2989
    // Predicated region
    $region70: #{tpu_custom_call.1} parent=1 // pred_check
      _
    $region71: #{tpu_custom_call.1} parent=1 // pred_check_branch
      %2995 = sbr.rel (0) target = $region73
    $region72: #{tpu_custom_call.1} parent=1 // pred_region
      %2997 = vsyncadd [#allocation4], 0
      %s2998 = sshll.u32 [#allocation11], 4
      %s2999 = int_to_ptr.vmem [resolvable:$true] %s2998
      %s3000 = sshll.u32 %s12, 4
      %s3001 = int_to_ptr.hbm [resolvable:$true] %s3000
      %3006 = dma.vmem_to_hbm [thread:$0]  %s2999, 512, %s3001, [#allocation4], 128, 128, 8
    $region73: #{tpu_custom_call.1} parent=1 // pred_fallthru
      _
    // Predicated region
    $region74: #{tpu_custom_call.1} parent=1 // pred_check
      _
    $region75: #{tpu_custom_call.1} parent=1 // pred_check_branch
      %3008 = sbr.rel (0) target = $region77
    $region76: #{tpu_custom_call.1} parent=1 // pred_region
      %3010 = dma.done [#allocation4], 512
    $region77: #{tpu_custom_call.1} parent=1 // pred_fallthru
      _
    %3011 = vsyncpa [#allocation3], 1
    %3012 = vsyncpa [#allocation6], 1
    %3013 = vsyncpa [#allocation9], 1
    %3014 = vsyncpa [#allocation4], 1

</llo_original>
